<compile_context>
chip_gen: v7x
topology: tpu7x:2x2x1
jax: 0.10.0
libtpu: 0.0.40
codegen_flags: <defaults>
</compile_context>

<pallas_src>
import math

import jax
import jax.numpy as jnp
from jax import lax
from jax.experimental import pallas as pl
from jax.experimental.pallas import tpu as pltpu

# ---- small, GPT2-consistent hyperparameters ----
HIDDEN = 128          # n_embd
N_HEADS = 4           # n_head
HEAD_DIM = HIDDEN // N_HEADS
N_LAYERS = 2          # n_layer
SEQ = 16              # sequence length (<= n_positions)
VOCAB = 256           # vocab_size
BATCH = 2
BS = BATCH * SEQ      # 32 flattened tokens
# NOTE: N_HEADS * BS == 128 == one lane tile -> the packed score layout is
# exactly lane-dense.
LN_EPS = 1e-5
NEG_INF = -1e9        # finite mask value (avoids -inf overflow -> NaN softmax rows)
GELU_CONST = math.sqrt(2.0 / math.pi)
ATTN_SCALE = 1.0 / math.sqrt(HEAD_DIM)


# ---------------- in-kernel helpers ----------------
def _layer_norm(x, g, b):
    # x: (BS, H) f32; g, b: (1, H) f32
    mean = jnp.mean(x, axis=-1, keepdims=True)
    var = jnp.mean(jnp.square(x - mean), axis=-1, keepdims=True)
    return (x - mean) * lax.rsqrt(var + LN_EPS) * g + b


def _gelu_new(x):
    # HF GPT-2 "gelu_new" (kept in f32; tanh runs on the EUP)
    return 0.5 * x * (1.0 + jnp.tanh(GELU_CONST * (x + 0.044715 * x * x * x)))


def _group_broadcast(s, reducer):
    # s: (BS, NH*BS).  Per-head (group of BS lanes) reduction, broadcast back
    # to every lane of its group so the following elementwise op stays dense.
    parts = []
    for n in range(N_HEADS):
        g = s[:, n * BS:(n + 1) * BS]
        r = reducer(g, axis=-1, keepdims=True)          # (BS, 1)
        parts.append(jnp.broadcast_to(r, (BS, BS)))
    return jnp.concatenate(parts, axis=-1)              # (BS, NH*BS)


# ---------------- fully fused forward kernel ----------------
def gpt2_forward_kernel(x_ref, bias_ref,
                        ln1_g_ref, ln1_b_ref, wqkv_ref, bqkv_ref,
                        wattn_ref, battn_ref,
                        ln2_g_ref, ln2_b_ref, wfc_ref, bfc_ref,
                        wmlp_ref, bmlp_ref,
                        lnf_g_ref, lnf_b_ref, wte_t_ref,
                        out_ref):
    x = x_ref[...]                                       # (BS, H) f32
    bias = bias_ref[...]                                 # (BS, NH*BS) f32, loop-invariant

    for l in range(N_LAYERS):                            # unrolled (N_LAYERS=2)
        # --- self attention ---
        h = _layer_norm(x, ln1_g_ref[l], ln1_b_ref[l])
        qkv = jnp.dot(h.astype(jnp.bfloat16), wqkv_ref[l],
                      preferred_element_type=jnp.float32) + bqkv_ref[l]    # (BS, 3H) f32
        q = qkv[:, :HIDDEN]                               # lanes = (NH, HD) head-major
        k = qkv[:, HIDDEN:2 * HIDDEN]
        v = qkv[:, 2 * HIDDEN:]

        # per-head scores, packed lane-dense: cols = (head, batch*key_token)
        score_parts = []
        for n in range(N_HEADS):
            sl = slice(n * HEAD_DIM, (n + 1) * HEAD_DIM)
            score_parts.append(
                jnp.einsum('qd,kd->qk',
                           q[:, sl].astype(jnp.bfloat16),
                           k[:, sl].astype(jnp.bfloat16),
                           preferred_element_type=jnp.float32))            # (BS, BS)
        scores = jnp.concatenate(score_parts, axis=-1) * ATTN_SCALE + bias  # (BS, 128)

        # per-head softmax; exp / normalize run on full 128-lane vregs
        gmax = _group_broadcast(scores, jnp.max)
        e = jnp.exp(scores - gmax)
        gsum = _group_broadcast(e, jnp.sum)
        p = e * pl.reciprocal(gsum, approx=True)

        # per-head context; lane-concat is already in merge_heads (NH, HD) order
        ctx_parts = []
        for n in range(N_HEADS):
            ctx_parts.append(
                jnp.dot(p[:, n * BS:(n + 1) * BS].astype(jnp.bfloat16),
                        v[:, n * HEAD_DIM:(n + 1) * HEAD_DIM].astype(jnp.bfloat16),
                        preferred_element_type=jnp.float32))               # (BS, HD)
        ctx = jnp.concatenate(ctx_parts, axis=-1)                          # (BS, H)

        attn_out = jnp.dot(ctx.astype(jnp.bfloat16), wattn_ref[l],
                           preferred_element_type=jnp.float32) + battn_ref[l]
        x = x + attn_out

        # --- MLP ---
        h2 = _layer_norm(x, ln2_g_ref[l], ln2_b_ref[l])
        f = _gelu_new(jnp.dot(h2.astype(jnp.bfloat16), wfc_ref[l],
                              preferred_element_type=jnp.float32) + bfc_ref[l])
        x = x + jnp.dot(f.astype(jnp.bfloat16), wmlp_ref[l],
                        preferred_element_type=jnp.float32) + bmlp_ref[l]

    # --- final LayerNorm + tied-weight LM head (pre-transposed bf16 wte) ---
    hf = _layer_norm(x, lnf_g_ref[...], lnf_b_ref[...])
    out_ref[...] = jnp.dot(hf.astype(jnp.bfloat16), wte_t_ref[...],
                           preferred_element_type=jnp.float32)             # (BS, V)


# ---------------- parameter init (deterministic, GPT-2 style, stacked layers) ----------------
def init_params(key):
    def normal(k, shape, std=0.02, dtype=jnp.bfloat16):
        return (std * jax.random.normal(k, shape, dtype=jnp.float32)).astype(dtype)

    keys = list(jax.random.split(key, 2 + 4 * N_LAYERS))
    wte = normal(keys[0], (VOCAB, HIDDEN), dtype=jnp.float32)
    wpe = normal(keys[1], (SEQ, HIDDEN), dtype=jnp.float32)

    def stack(base, shape):
        return jnp.stack([normal(keys[base + 4 * l], shape) for l in range(N_LAYERS)])

    return {
        "wte": wte,                                       # f32 for embedding gather
        "wte_t": wte.T.astype(jnp.bfloat16),              # pre-transposed bf16 LM head (tied)
        "wpe": wpe,
        "ln_f_g": jnp.ones((1, HIDDEN), jnp.float32),
        "ln_f_b": jnp.zeros((1, HIDDEN), jnp.float32),
        # stacked per-layer weights: leading axis = layer; matmul weights in bf16
        "ln1_g": jnp.ones((N_LAYERS, 1, HIDDEN), jnp.float32),
        "ln1_b": jnp.zeros((N_LAYERS, 1, HIDDEN), jnp.float32),
        "w_qkv": stack(2, (HIDDEN, 3 * HIDDEN)),
        "b_qkv": jnp.zeros((N_LAYERS, 1, 3 * HIDDEN), jnp.float32),
        "w_attn_proj": stack(3, (HIDDEN, HIDDEN)),
        "b_attn_proj": jnp.zeros((N_LAYERS, 1, HIDDEN), jnp.float32),
        "ln2_g": jnp.ones((N_LAYERS, 1, HIDDEN), jnp.float32),
        "ln2_b": jnp.zeros((N_LAYERS, 1, HIDDEN), jnp.float32),
        "w_fc": stack(4, (HIDDEN, 4 * HIDDEN)),
        "b_fc": jnp.zeros((N_LAYERS, 1, 4 * HIDDEN), jnp.float32),
        "w_mlp_proj": stack(5, (4 * HIDDEN, HIDDEN)),
        "b_mlp_proj": jnp.zeros((N_LAYERS, 1, HIDDEN), jnp.float32),
    }


# ---------------- full forward (GPTLMModel.forward -> logits) ----------------
def gpt_lm_forward(params, input_ids, attention_mask):
    # glue: embedding gather + position embeddings (plain JAX), batch-flattened
    wte, wpe = params["wte"], params["wpe"]
    x = (wte[input_ids] + wpe[None, :, :]).reshape(BS, HIDDEN)    # (BS, H) f32

    # combined additive mask bias: causal + padding + batch-block-diagonal,
    # pre-tiled across heads -> in-kernel masking is a single dense add.
    valid = attention_mask > 0                                    # (B, S)
    pos = jnp.arange(SEQ)
    causal = pos[:, None] >= pos[None, :]                         # (S, S)
    same_batch = jnp.eye(BATCH, dtype=bool)                       # (B, B)
    keep = (same_batch[:, None, :, None]
            & causal[None, :, None, :]
            & valid[None, None, :, :])                            # (B, Sq, B, Sk)
    bias = jnp.where(keep, 0.0, NEG_INF).astype(jnp.float32).reshape(BS, BS)
    bias = jnp.tile(bias, (1, N_HEADS))                           # (BS, NH*BS) = (32, 128)

    vmem = pl.BlockSpec(memory_space=pltpu.MemorySpace.VMEM)
    logits_flat = pl.pallas_call(
        gpt2_forward_kernel,
        out_shape=jax.ShapeDtypeStruct((BS, VOCAB), jnp.float32),
        in_specs=[vmem] * 17,
        out_specs=vmem,
    )(x, bias,
      params["ln1_g"], params["ln1_b"], params["w_qkv"], params["b_qkv"],
      params["w_attn_proj"], params["b_attn_proj"],
      params["ln2_g"], params["ln2_b"], params["w_fc"], params["b_fc"],
      params["w_mlp_proj"], params["b_mlp_proj"],
      params["ln_f_g"], params["ln_f_b"], params["wte_t"])

    return logits_flat.reshape(BATCH, SEQ, VOCAB)


if __name__ == "__main__":
    root = jax.random.PRNGKey(0)
    k_params, k_ids = jax.random.split(root, 2)

    params = init_params(k_params)
    input_ids = jax.random.randint(k_ids, (BATCH, SEQ), 0, VOCAB, dtype=jnp.int32)
    attention_mask = jnp.ones((BATCH, SEQ), dtype=jnp.int32)

    logits = jax.jit(gpt_lm_forward)(params, input_ids, attention_mask)
    logits = jax.block_until_ready(logits)

    assert logits.shape == (BATCH, SEQ, VOCAB)
    assert logits.dtype == jnp.float32
    assert bool(jnp.all(jnp.isfinite(logits)))
    print("KERNEL_OK")
</pallas_src>

<mosaic_0001>
module attributes {stable_mosaic.version = 11 : i64} {
  func.func @gpt2_forward_kernel(%arg0: memref<32x128xf32, #tpu.memory_space<vmem>>, %arg1: memref<32x128xf32, #tpu.memory_space<vmem>>, %arg2: memref<2x1x128xf32, #tpu.memory_space<vmem>>, %arg3: memref<2x1x128xf32, #tpu.memory_space<vmem>>, %arg4: memref<2x128x384xbf16, #tpu.memory_space<vmem>>, %arg5: memref<2x1x384xf32, #tpu.memory_space<vmem>>, %arg6: memref<2x128x128xbf16, #tpu.memory_space<vmem>>, %arg7: memref<2x1x128xf32, #tpu.memory_space<vmem>>, %arg8: memref<2x1x128xf32, #tpu.memory_space<vmem>>, %arg9: memref<2x1x128xf32, #tpu.memory_space<vmem>>, %arg10: memref<2x128x512xbf16, #tpu.memory_space<vmem>>, %arg11: memref<2x1x512xf32, #tpu.memory_space<vmem>>, %arg12: memref<2x512x128xbf16, #tpu.memory_space<vmem>>, %arg13: memref<2x1x128xf32, #tpu.memory_space<vmem>>, %arg14: memref<1x128xf32, #tpu.memory_space<vmem>>, %arg15: memref<1x128xf32, #tpu.memory_space<vmem>>, %arg16: memref<128x256xbf16, #tpu.memory_space<vmem>>, %arg17: memref<32x256xf32, #tpu.memory_space<vmem>>) attributes {dimension_semantics = [], scalar_prefetch = 0 : i64, scratch_operands = 0 : i64, tpu.core_type = #tpu.core_type<tc>} {
    %c0 = arith.constant 0 : index
    %c0_0 = arith.constant 0 : index
    %0 = vector.load %arg0[%c0, %c0_0] : memref<32x128xf32, #tpu.memory_space<vmem>>, vector<32x128xf32>
    %c0_1 = arith.constant 0 : index
    %c0_2 = arith.constant 0 : index
    %1 = vector.load %arg1[%c0_1, %c0_2] : memref<32x128xf32, #tpu.memory_space<vmem>>, vector<32x128xf32>
    %c0_3 = arith.constant 0 : index
    %c0_4 = arith.constant 0 : index
    %c0_5 = arith.constant 0 : index
    %2 = vector.load %arg2[%c0_3, %c0_4, %c0_5] : memref<2x1x128xf32, #tpu.memory_space<vmem>>, vector<1x1x128xf32>
    %3 = vector.shape_cast %2 : vector<1x1x128xf32> to vector<1x128xf32>
    %c0_6 = arith.constant 0 : index
    %c0_7 = arith.constant 0 : index
    %c0_8 = arith.constant 0 : index
    %4 = vector.load %arg3[%c0_6, %c0_7, %c0_8] : memref<2x1x128xf32, #tpu.memory_space<vmem>>, vector<1x1x128xf32>
    %5 = vector.shape_cast %4 : vector<1x1x128xf32> to vector<1x128xf32>
    %cst = arith.constant dense<0.000000e+00> : vector<32xf32>
    %6 = vector.multi_reduction <add>, %0, %cst [1] : vector<32x128xf32> to vector<32xf32>
    %7 = vector.shape_cast %6 : vector<32xf32> to vector<32x1xf32>
    %cst_9 = arith.constant 1.280000e+02 : f32
    %8 = vector.broadcast %cst_9 : f32 to vector<32x1xf32>
    %9 = arith.divf %7, %8 : vector<32x1xf32>
    %10 = vector.broadcast %9 : vector<32x1xf32> to vector<32x128xf32>
    %11 = arith.subf %0, %10 : vector<32x128xf32>
    %12 = arith.mulf %11, %11 : vector<32x128xf32>
    %cst_10 = arith.constant dense<0.000000e+00> : vector<32xf32>
    %13 = vector.multi_reduction <add>, %12, %cst_10 [1] : vector<32x128xf32> to vector<32xf32>
    %14 = vector.shape_cast %13 : vector<32xf32> to vector<32x1xf32>
    %cst_11 = arith.constant 1.280000e+02 : f32
    %15 = vector.broadcast %cst_11 : f32 to vector<32x1xf32>
    %16 = arith.divf %14, %15 : vector<32x1xf32>
    %17 = vector.broadcast %9 : vector<32x1xf32> to vector<32x128xf32>
    %18 = arith.subf %0, %17 : vector<32x128xf32>
    %cst_12 = arith.constant 9.99999974E-6 : f32
    %19 = vector.broadcast %cst_12 : f32 to vector<32x1xf32>
    %20 = arith.addf %16, %19 : vector<32x1xf32>
    %21 = math.rsqrt %20 : vector<32x1xf32>
    %22 = vector.broadcast %21 : vector<32x1xf32> to vector<32x128xf32>
    %23 = arith.mulf %18, %22 : vector<32x128xf32>
    %24 = vector.broadcast %3 : vector<1x128xf32> to vector<32x128xf32>
    %25 = arith.mulf %23, %24 : vector<32x128xf32>
    %26 = vector.broadcast %5 : vector<1x128xf32> to vector<32x128xf32>
    %27 = arith.addf %25, %26 : vector<32x128xf32>
    %28 = arith.truncf %27 : vector<32x128xf32> to vector<32x128xbf16>
    %c0_13 = arith.constant 0 : index
    %c0_14 = arith.constant 0 : index
    %c0_15 = arith.constant 0 : index
    %29 = vector.load %arg4[%c0_13, %c0_14, %c0_15] : memref<2x128x384xbf16, #tpu.memory_space<vmem>>, vector<1x128x384xbf16>
    %30 = vector.shape_cast %29 : vector<1x128x384xbf16> to vector<128x384xbf16>
    %cst_16 = arith.constant dense<0.000000e+00> : vector<32x384xf32>
    %31 = tpu.matmul %28, %30, %cst_16 {dimension_numbers = #tpu.dot_dimension_numbers<[1], [0], [0], [1], [0, 0, 1, 1], [], []>} : vector<32x128xbf16>, vector<128x384xbf16>, vector<32x384xf32> -> vector<32x384xf32>
    %c0_17 = arith.constant 0 : index
    %c0_18 = arith.constant 0 : index
    %c0_19 = arith.constant 0 : index
    %32 = vector.load %arg5[%c0_17, %c0_18, %c0_19] : memref<2x1x384xf32, #tpu.memory_space<vmem>>, vector<1x1x384xf32>
    %33 = vector.shape_cast %32 : vector<1x1x384xf32> to vector<1x384xf32>
    %34 = vector.broadcast %33 : vector<1x384xf32> to vector<32x384xf32>
    %35 = arith.addf %31, %34 : vector<32x384xf32>
    %36 = vector.extract_strided_slice %35 {offsets = [0, 0], sizes = [32, 128], strides = [1, 1]} : vector<32x384xf32> to vector<32x128xf32>
    %37 = vector.extract_strided_slice %35 {offsets = [0, 128], sizes = [32, 128], strides = [1, 1]} : vector<32x384xf32> to vector<32x128xf32>
    %38 = vector.extract_strided_slice %35 {offsets = [0, 256], sizes = [32, 128], strides = [1, 1]} : vector<32x384xf32> to vector<32x128xf32>
    %39 = vector.extract_strided_slice %36 {offsets = [0, 0], sizes = [32, 32], strides = [1, 1]} : vector<32x128xf32> to vector<32x32xf32>
    %40 = arith.truncf %39 : vector<32x32xf32> to vector<32x32xbf16>
    %41 = vector.extract_strided_slice %37 {offsets = [0, 0], sizes = [32, 32], strides = [1, 1]} : vector<32x128xf32> to vector<32x32xf32>
    %42 = arith.truncf %41 : vector<32x32xf32> to vector<32x32xbf16>
    "tpu.trace_start"() <{level = 10 : i32, message = "qd,kd->qk"}> : () -> ()
    %cst_20 = arith.constant dense<0.000000e+00> : vector<32x32xf32>
    %43 = tpu.matmul %40, %42, %cst_20 {dimension_numbers = #tpu.dot_dimension_numbers<[1], [1], [0], [0], [0, 0, 1, 0], [], []>} : vector<32x32xbf16>, vector<32x32xbf16>, vector<32x32xf32> -> vector<32x32xf32>
    "tpu.trace_stop"() : () -> ()
    %44 = vector.extract_strided_slice %36 {offsets = [0, 32], sizes = [32, 32], strides = [1, 1]} : vector<32x128xf32> to vector<32x32xf32>
    %45 = arith.truncf %44 : vector<32x32xf32> to vector<32x32xbf16>
    %46 = vector.extract_strided_slice %37 {offsets = [0, 32], sizes = [32, 32], strides = [1, 1]} : vector<32x128xf32> to vector<32x32xf32>
    %47 = arith.truncf %46 : vector<32x32xf32> to vector<32x32xbf16>
    "tpu.trace_start"() <{level = 10 : i32, message = "qd,kd->qk"}> : () -> ()
    %cst_21 = arith.constant dense<0.000000e+00> : vector<32x32xf32>
    %48 = tpu.matmul %45, %47, %cst_21 {dimension_numbers = #tpu.dot_dimension_numbers<[1], [1], [0], [0], [0, 0, 1, 0], [], []>} : vector<32x32xbf16>, vector<32x32xbf16>, vector<32x32xf32> -> vector<32x32xf32>
    "tpu.trace_stop"() : () -> ()
    %49 = vector.extract_strided_slice %36 {offsets = [0, 64], sizes = [32, 32], strides = [1, 1]} : vector<32x128xf32> to vector<32x32xf32>
    %50 = arith.truncf %49 : vector<32x32xf32> to vector<32x32xbf16>
    %51 = vector.extract_strided_slice %37 {offsets = [0, 64], sizes = [32, 32], strides = [1, 1]} : vector<32x128xf32> to vector<32x32xf32>
    %52 = arith.truncf %51 : vector<32x32xf32> to vector<32x32xbf16>
    "tpu.trace_start"() <{level = 10 : i32, message = "qd,kd->qk"}> : () -> ()
    %cst_22 = arith.constant dense<0.000000e+00> : vector<32x32xf32>
    %53 = tpu.matmul %50, %52, %cst_22 {dimension_numbers = #tpu.dot_dimension_numbers<[1], [1], [0], [0], [0, 0, 1, 0], [], []>} : vector<32x32xbf16>, vector<32x32xbf16>, vector<32x32xf32> -> vector<32x32xf32>
    "tpu.trace_stop"() : () -> ()
    %54 = vector.extract_strided_slice %36 {offsets = [0, 96], sizes = [32, 32], strides = [1, 1]} : vector<32x128xf32> to vector<32x32xf32>
    %55 = arith.truncf %54 : vector<32x32xf32> to vector<32x32xbf16>
    %56 = vector.extract_strided_slice %37 {offsets = [0, 96], sizes = [32, 32], strides = [1, 1]} : vector<32x128xf32> to vector<32x32xf32>
    %57 = arith.truncf %56 : vector<32x32xf32> to vector<32x32xbf16>
    "tpu.trace_start"() <{level = 10 : i32, message = "qd,kd->qk"}> : () -> ()
    %cst_23 = arith.constant dense<0.000000e+00> : vector<32x32xf32>
    %58 = tpu.matmul %55, %57, %cst_23 {dimension_numbers = #tpu.dot_dimension_numbers<[1], [1], [0], [0], [0, 0, 1, 0], [], []>} : vector<32x32xbf16>, vector<32x32xbf16>, vector<32x32xf32> -> vector<32x32xf32>
    "tpu.trace_stop"() : () -> ()
    %59 = tpu.concatenate %43, %48, %53, %58 in 1 : vector<32x32xf32>, vector<32x32xf32>, vector<32x32xf32>, vector<32x32xf32> -> vector<32x128xf32>
    %cst_24 = arith.constant 0.176776692 : f32
    %60 = vector.broadcast %cst_24 : f32 to vector<32x128xf32>
    %61 = arith.mulf %59, %60 : vector<32x128xf32>
    %62 = arith.addf %61, %1 : vector<32x128xf32>
    %63 = vector.extract_strided_slice %62 {offsets = [0, 0], sizes = [32, 32], strides = [1, 1]} : vector<32x128xf32> to vector<32x32xf32>
    %cst_25 = arith.constant dense<0xFF800000> : vector<32xf32>
    %64 = vector.multi_reduction <maximumf>, %63, %cst_25 [1] : vector<32x32xf32> to vector<32xf32>
    %65 = vector.shape_cast %64 : vector<32xf32> to vector<32x1xf32>
    %66 = vector.shape_cast %65 : vector<32x1xf32> to vector<32x1xf32>
    %67 = vector.broadcast %66 : vector<32x1xf32> to vector<32x32xf32>
    %68 = vector.extract_strided_slice %62 {offsets = [0, 32], sizes = [32, 32], strides = [1, 1]} : vector<32x128xf32> to vector<32x32xf32>
    %cst_26 = arith.constant dense<0xFF800000> : vector<32xf32>
    %69 = vector.multi_reduction <maximumf>, %68, %cst_26 [1] : vector<32x32xf32> to vector<32xf32>
    %70 = vector.shape_cast %69 : vector<32xf32> to vector<32x1xf32>
    %71 = vector.shape_cast %70 : vector<32x1xf32> to vector<32x1xf32>
    %72 = vector.broadcast %71 : vector<32x1xf32> to vector<32x32xf32>
    %73 = vector.extract_strided_slice %62 {offsets = [0, 64], sizes = [32, 32], strides = [1, 1]} : vector<32x128xf32> to vector<32x32xf32>
    %cst_27 = arith.constant dense<0xFF800000> : vector<32xf32>
    %74 = vector.multi_reduction <maximumf>, %73, %cst_27 [1] : vector<32x32xf32> to vector<32xf32>
    %75 = vector.shape_cast %74 : vector<32xf32> to vector<32x1xf32>
    %76 = vector.shape_cast %75 : vector<32x1xf32> to vector<32x1xf32>
    %77 = vector.broadcast %76 : vector<32x1xf32> to vector<32x32xf32>
    %78 = vector.extract_strided_slice %62 {offsets = [0, 96], sizes = [32, 32], strides = [1, 1]} : vector<32x128xf32> to vector<32x32xf32>
    %cst_28 = arith.constant dense<0xFF800000> : vector<32xf32>
    %79 = vector.multi_reduction <maximumf>, %78, %cst_28 [1] : vector<32x32xf32> to vector<32xf32>
    %80 = vector.shape_cast %79 : vector<32xf32> to vector<32x1xf32>
    %81 = vector.shape_cast %80 : vector<32x1xf32> to vector<32x1xf32>
    %82 = vector.broadcast %81 : vector<32x1xf32> to vector<32x32xf32>
    %83 = tpu.concatenate %67, %72, %77, %82 in 1 : vector<32x32xf32>, vector<32x32xf32>, vector<32x32xf32>, vector<32x32xf32> -> vector<32x128xf32>
    %84 = arith.subf %62, %83 : vector<32x128xf32>
    %85 = math.exp %84 : vector<32x128xf32>
    %86 = vector.extract_strided_slice %85 {offsets = [0, 0], sizes = [32, 32], strides = [1, 1]} : vector<32x128xf32> to vector<32x32xf32>
    %cst_29 = arith.constant dense<0.000000e+00> : vector<32xf32>
    %87 = vector.multi_reduction <add>, %86, %cst_29 [1] : vector<32x32xf32> to vector<32xf32>
    %88 = vector.shape_cast %87 : vector<32xf32> to vector<32x1xf32>
    %89 = vector.shape_cast %88 : vector<32x1xf32> to vector<32x1xf32>
    %90 = vector.broadcast %89 : vector<32x1xf32> to vector<32x32xf32>
    %91 = vector.extract_strided_slice %85 {offsets = [0, 32], sizes = [32, 32], strides = [1, 1]} : vector<32x128xf32> to vector<32x32xf32>
    %cst_30 = arith.constant dense<0.000000e+00> : vector<32xf32>
    %92 = vector.multi_reduction <add>, %91, %cst_30 [1] : vector<32x32xf32> to vector<32xf32>
    %93 = vector.shape_cast %92 : vector<32xf32> to vector<32x1xf32>
    %94 = vector.shape_cast %93 : vector<32x1xf32> to vector<32x1xf32>
    %95 = vector.broadcast %94 : vector<32x1xf32> to vector<32x32xf32>
    %96 = vector.extract_strided_slice %85 {offsets = [0, 64], sizes = [32, 32], strides = [1, 1]} : vector<32x128xf32> to vector<32x32xf32>
    %cst_31 = arith.constant dense<0.000000e+00> : vector<32xf32>
    %97 = vector.multi_reduction <add>, %96, %cst_31 [1] : vector<32x32xf32> to vector<32xf32>
    %98 = vector.shape_cast %97 : vector<32xf32> to vector<32x1xf32>
    %99 = vector.shape_cast %98 : vector<32x1xf32> to vector<32x1xf32>
    %100 = vector.broadcast %99 : vector<32x1xf32> to vector<32x32xf32>
    %101 = vector.extract_strided_slice %85 {offsets = [0, 96], sizes = [32, 32], strides = [1, 1]} : vector<32x128xf32> to vector<32x32xf32>
    %cst_32 = arith.constant dense<0.000000e+00> : vector<32xf32>
    %102 = vector.multi_reduction <add>, %101, %cst_32 [1] : vector<32x32xf32> to vector<32xf32>
    %103 = vector.shape_cast %102 : vector<32xf32> to vector<32x1xf32>
    %104 = vector.shape_cast %103 : vector<32x1xf32> to vector<32x1xf32>
    %105 = vector.broadcast %104 : vector<32x1xf32> to vector<32x32xf32>
    %106 = tpu.concatenate %90, %95, %100, %105 in 1 : vector<32x32xf32>, vector<32x32xf32>, vector<32x32xf32>, vector<32x32xf32> -> vector<32x128xf32>
    %107 = tpu.reciprocal %106 {approx = true} : vector<32x128xf32> -> vector<32x128xf32>
    %108 = arith.mulf %85, %107 : vector<32x128xf32>
    %109 = vector.extract_strided_slice %108 {offsets = [0, 0], sizes = [32, 32], strides = [1, 1]} : vector<32x128xf32> to vector<32x32xf32>
    %110 = arith.truncf %109 : vector<32x32xf32> to vector<32x32xbf16>
    %111 = vector.extract_strided_slice %38 {offsets = [0, 0], sizes = [32, 32], strides = [1, 1]} : vector<32x128xf32> to vector<32x32xf32>
    %112 = arith.truncf %111 : vector<32x32xf32> to vector<32x32xbf16>
    %cst_33 = arith.constant dense<0.000000e+00> : vector<32x32xf32>
    %113 = tpu.matmul %110, %112, %cst_33 {dimension_numbers = #tpu.dot_dimension_numbers<[1], [0], [0], [1], [0, 0, 1, 1], [], []>} : vector<32x32xbf16>, vector<32x32xbf16>, vector<32x32xf32> -> vector<32x32xf32>
    %114 = vector.extract_strided_slice %108 {offsets = [0, 32], sizes = [32, 32], strides = [1, 1]} : vector<32x128xf32> to vector<32x32xf32>
    %115 = arith.truncf %114 : vector<32x32xf32> to vector<32x32xbf16>
    %116 = vector.extract_strided_slice %38 {offsets = [0, 32], sizes = [32, 32], strides = [1, 1]} : vector<32x128xf32> to vector<32x32xf32>
    %117 = arith.truncf %116 : vector<32x32xf32> to vector<32x32xbf16>
    %cst_34 = arith.constant dense<0.000000e+00> : vector<32x32xf32>
    %118 = tpu.matmul %115, %117, %cst_34 {dimension_numbers = #tpu.dot_dimension_numbers<[1], [0], [0], [1], [0, 0, 1, 1], [], []>} : vector<32x32xbf16>, vector<32x32xbf16>, vector<32x32xf32> -> vector<32x32xf32>
    %119 = vector.extract_strided_slice %108 {offsets = [0, 64], sizes = [32, 32], strides = [1, 1]} : vector<32x128xf32> to vector<32x32xf32>
    %120 = arith.truncf %119 : vector<32x32xf32> to vector<32x32xbf16>
    %121 = vector.extract_strided_slice %38 {offsets = [0, 64], sizes = [32, 32], strides = [1, 1]} : vector<32x128xf32> to vector<32x32xf32>
    %122 = arith.truncf %121 : vector<32x32xf32> to vector<32x32xbf16>
    %cst_35 = arith.constant dense<0.000000e+00> : vector<32x32xf32>
    %123 = tpu.matmul %120, %122, %cst_35 {dimension_numbers = #tpu.dot_dimension_numbers<[1], [0], [0], [1], [0, 0, 1, 1], [], []>} : vector<32x32xbf16>, vector<32x32xbf16>, vector<32x32xf32> -> vector<32x32xf32>
    %124 = vector.extract_strided_slice %108 {offsets = [0, 96], sizes = [32, 32], strides = [1, 1]} : vector<32x128xf32> to vector<32x32xf32>
    %125 = arith.truncf %124 : vector<32x32xf32> to vector<32x32xbf16>
    %126 = vector.extract_strided_slice %38 {offsets = [0, 96], sizes = [32, 32], strides = [1, 1]} : vector<32x128xf32> to vector<32x32xf32>
    %127 = arith.truncf %126 : vector<32x32xf32> to vector<32x32xbf16>
    %cst_36 = arith.constant dense<0.000000e+00> : vector<32x32xf32>
    %128 = tpu.matmul %125, %127, %cst_36 {dimension_numbers = #tpu.dot_dimension_numbers<[1], [0], [0], [1], [0, 0, 1, 1], [], []>} : vector<32x32xbf16>, vector<32x32xbf16>, vector<32x32xf32> -> vector<32x32xf32>
    %129 = tpu.concatenate %113, %118, %123, %128 in 1 : vector<32x32xf32>, vector<32x32xf32>, vector<32x32xf32>, vector<32x32xf32> -> vector<32x128xf32>
    %130 = arith.truncf %129 : vector<32x128xf32> to vector<32x128xbf16>
    %c0_37 = arith.constant 0 : index
    %c0_38 = arith.constant 0 : index
    %c0_39 = arith.constant 0 : index
    %131 = vector.load %arg6[%c0_37, %c0_38, %c0_39] : memref<2x128x128xbf16, #tpu.memory_space<vmem>>, vector<1x128x128xbf16>
    %132 = vector.shape_cast %131 : vector<1x128x128xbf16> to vector<128x128xbf16>
    %cst_40 = arith.constant dense<0.000000e+00> : vector<32x128xf32>
    %133 = tpu.matmul %130, %132, %cst_40 {dimension_numbers = #tpu.dot_dimension_numbers<[1], [0], [0], [1], [0, 0, 1, 1], [], []>} : vector<32x128xbf16>, vector<128x128xbf16>, vector<32x128xf32> -> vector<32x128xf32>
    %c0_41 = arith.constant 0 : index
    %c0_42 = arith.constant 0 : index
    %c0_43 = arith.constant 0 : index
    %134 = vector.load %arg7[%c0_41, %c0_42, %c0_43] : memref<2x1x128xf32, #tpu.memory_space<vmem>>, vector<1x1x128xf32>
    %135 = vector.shape_cast %134 : vector<1x1x128xf32> to vector<1x128xf32>
    %136 = vector.broadcast %135 : vector<1x128xf32> to vector<32x128xf32>
    %137 = arith.addf %133, %136 : vector<32x128xf32>
    %138 = arith.addf %0, %137 : vector<32x128xf32>
    %c0_44 = arith.constant 0 : index
    %c0_45 = arith.constant 0 : index
    %c0_46 = arith.constant 0 : index
    %139 = vector.load %arg8[%c0_44, %c0_45, %c0_46] : memref<2x1x128xf32, #tpu.memory_space<vmem>>, vector<1x1x128xf32>
    %140 = vector.shape_cast %139 : vector<1x1x128xf32> to vector<1x128xf32>
    %c0_47 = arith.constant 0 : index
    %c0_48 = arith.constant 0 : index
    %c0_49 = arith.constant 0 : index
    %141 = vector.load %arg9[%c0_47, %c0_48, %c0_49] : memref<2x1x128xf32, #tpu.memory_space<vmem>>, vector<1x1x128xf32>
    %142 = vector.shape_cast %141 : vector<1x1x128xf32> to vector<1x128xf32>
    %cst_50 = arith.constant dense<0.000000e+00> : vector<32xf32>
    %143 = vector.multi_reduction <add>, %138, %cst_50 [1] : vector<32x128xf32> to vector<32xf32>
    %144 = vector.shape_cast %143 : vector<32xf32> to vector<32x1xf32>
    %cst_51 = arith.constant 1.280000e+02 : f32
    %145 = vector.broadcast %cst_51 : f32 to vector<32x1xf32>
    %146 = arith.divf %144, %145 : vector<32x1xf32>
    %147 = vector.broadcast %146 : vector<32x1xf32> to vector<32x128xf32>
    %148 = arith.subf %138, %147 : vector<32x128xf32>
    %149 = arith.mulf %148, %148 : vector<32x128xf32>
    %cst_52 = arith.constant dense<0.000000e+00> : vector<32xf32>
    %150 = vector.multi_reduction <add>, %149, %cst_52 [1] : vector<32x128xf32> to vector<32xf32>
    %151 = vector.shape_cast %150 : vector<32xf32> to vector<32x1xf32>
    %cst_53 = arith.constant 1.280000e+02 : f32
    %152 = vector.broadcast %cst_53 : f32 to vector<32x1xf32>
    %153 = arith.divf %151, %152 : vector<32x1xf32>
    %154 = vector.broadcast %146 : vector<32x1xf32> to vector<32x128xf32>
    %155 = arith.subf %138, %154 : vector<32x128xf32>
    %cst_54 = arith.constant 9.99999974E-6 : f32
    %156 = vector.broadcast %cst_54 : f32 to vector<32x1xf32>
    %157 = arith.addf %153, %156 : vector<32x1xf32>
    %158 = math.rsqrt %157 : vector<32x1xf32>
    %159 = vector.broadcast %158 : vector<32x1xf32> to vector<32x128xf32>
    %160 = arith.mulf %155, %159 : vector<32x128xf32>
    %161 = vector.broadcast %140 : vector<1x128xf32> to vector<32x128xf32>
    %162 = arith.mulf %160, %161 : vector<32x128xf32>
    %163 = vector.broadcast %142 : vector<1x128xf32> to vector<32x128xf32>
    %164 = arith.addf %162, %163 : vector<32x128xf32>
    %165 = arith.truncf %164 : vector<32x128xf32> to vector<32x128xbf16>
    %c0_55 = arith.constant 0 : index
    %c0_56 = arith.constant 0 : index
    %c0_57 = arith.constant 0 : index
    %166 = vector.load %arg10[%c0_55, %c0_56, %c0_57] : memref<2x128x512xbf16, #tpu.memory_space<vmem>>, vector<1x128x512xbf16>
    %167 = vector.shape_cast %166 : vector<1x128x512xbf16> to vector<128x512xbf16>
    %cst_58 = arith.constant dense<0.000000e+00> : vector<32x512xf32>
    %168 = tpu.matmul %165, %167, %cst_58 {dimension_numbers = #tpu.dot_dimension_numbers<[1], [0], [0], [1], [0, 0, 1, 1], [], []>} : vector<32x128xbf16>, vector<128x512xbf16>, vector<32x512xf32> -> vector<32x512xf32>
    %c0_59 = arith.constant 0 : index
    %c0_60 = arith.constant 0 : index
    %c0_61 = arith.constant 0 : index
    %169 = vector.load %arg11[%c0_59, %c0_60, %c0_61] : memref<2x1x512xf32, #tpu.memory_space<vmem>>, vector<1x1x512xf32>
    %170 = vector.shape_cast %169 : vector<1x1x512xf32> to vector<1x512xf32>
    %171 = vector.broadcast %170 : vector<1x512xf32> to vector<32x512xf32>
    %172 = arith.addf %168, %171 : vector<32x512xf32>
    %cst_62 = arith.constant 5.000000e-01 : f32
    %173 = vector.broadcast %cst_62 : f32 to vector<32x512xf32>
    %174 = arith.mulf %173, %172 : vector<32x512xf32>
    %cst_63 = arith.constant 4.471500e-02 : f32
    %175 = vector.broadcast %cst_63 : f32 to vector<32x512xf32>
    %176 = arith.mulf %175, %172 : vector<32x512xf32>
    %177 = arith.mulf %176, %172 : vector<32x512xf32>
    %178 = arith.mulf %177, %172 : vector<32x512xf32>
    %179 = arith.addf %172, %178 : vector<32x512xf32>
    %cst_64 = arith.constant 0.797884583 : f32
    %180 = vector.broadcast %cst_64 : f32 to vector<32x512xf32>
    %181 = arith.mulf %180, %179 : vector<32x512xf32>
    %182 = math.tanh %181 : vector<32x512xf32>
    %cst_65 = arith.constant 1.000000e+00 : f32
    %183 = vector.broadcast %cst_65 : f32 to vector<32x512xf32>
    %184 = arith.addf %183, %182 : vector<32x512xf32>
    %185 = arith.mulf %174, %184 : vector<32x512xf32>
    %186 = arith.truncf %185 : vector<32x512xf32> to vector<32x512xbf16>
    %c0_66 = arith.constant 0 : index
    %c0_67 = arith.constant 0 : index
    %c0_68 = arith.constant 0 : index
    %187 = vector.load %arg12[%c0_66, %c0_67, %c0_68] : memref<2x512x128xbf16, #tpu.memory_space<vmem>>, vector<1x512x128xbf16>
    %188 = vector.shape_cast %187 : vector<1x512x128xbf16> to vector<512x128xbf16>
    %cst_69 = arith.constant dense<0.000000e+00> : vector<32x128xf32>
    %189 = tpu.matmul %186, %188, %cst_69 {dimension_numbers = #tpu.dot_dimension_numbers<[1], [0], [0], [1], [0, 0, 1, 1], [], []>} : vector<32x512xbf16>, vector<512x128xbf16>, vector<32x128xf32> -> vector<32x128xf32>
    %190 = arith.addf %138, %189 : vector<32x128xf32>
    %c0_70 = arith.constant 0 : index
    %c0_71 = arith.constant 0 : index
    %c0_72 = arith.constant 0 : index
    %191 = vector.load %arg13[%c0_70, %c0_71, %c0_72] : memref<2x1x128xf32, #tpu.memory_space<vmem>>, vector<1x1x128xf32>
    %192 = vector.shape_cast %191 : vector<1x1x128xf32> to vector<1x128xf32>
    %193 = vector.broadcast %192 : vector<1x128xf32> to vector<32x128xf32>
    %194 = arith.addf %190, %193 : vector<32x128xf32>
    %c1 = arith.constant 1 : index
    %c0_73 = arith.constant 0 : index
    %c0_74 = arith.constant 0 : index
    %195 = vector.load %arg2[%c1, %c0_73, %c0_74] : memref<2x1x128xf32, #tpu.memory_space<vmem>>, vector<1x1x128xf32>
    %196 = vector.shape_cast %195 : vector<1x1x128xf32> to vector<1x128xf32>
    %c1_75 = arith.constant 1 : index
    %c0_76 = arith.constant 0 : index
    %c0_77 = arith.constant 0 : index
    %197 = vector.load %arg3[%c1_75, %c0_76, %c0_77] : memref<2x1x128xf32, #tpu.memory_space<vmem>>, vector<1x1x128xf32>
    %198 = vector.shape_cast %197 : vector<1x1x128xf32> to vector<1x128xf32>
    %cst_78 = arith.constant dense<0.000000e+00> : vector<32xf32>
    %199 = vector.multi_reduction <add>, %194, %cst_78 [1] : vector<32x128xf32> to vector<32xf32>
    %200 = vector.shape_cast %199 : vector<32xf32> to vector<32x1xf32>
    %cst_79 = arith.constant 1.280000e+02 : f32
    %201 = vector.broadcast %cst_79 : f32 to vector<32x1xf32>
    %202 = arith.divf %200, %201 : vector<32x1xf32>
    %203 = vector.broadcast %202 : vector<32x1xf32> to vector<32x128xf32>
    %204 = arith.subf %194, %203 : vector<32x128xf32>
    %205 = arith.mulf %204, %204 : vector<32x128xf32>
    %cst_80 = arith.constant dense<0.000000e+00> : vector<32xf32>
    %206 = vector.multi_reduction <add>, %205, %cst_80 [1] : vector<32x128xf32> to vector<32xf32>
    %207 = vector.shape_cast %206 : vector<32xf32> to vector<32x1xf32>
    %cst_81 = arith.constant 1.280000e+02 : f32
    %208 = vector.broadcast %cst_81 : f32 to vector<32x1xf32>
    %209 = arith.divf %207, %208 : vector<32x1xf32>
    %210 = vector.broadcast %202 : vector<32x1xf32> to vector<32x128xf32>
    %211 = arith.subf %194, %210 : vector<32x128xf32>
    %cst_82 = arith.constant 9.99999974E-6 : f32
    %212 = vector.broadcast %cst_82 : f32 to vector<32x1xf32>
    %213 = arith.addf %209, %212 : vector<32x1xf32>
    %214 = math.rsqrt %213 : vector<32x1xf32>
    %215 = vector.broadcast %214 : vector<32x1xf32> to vector<32x128xf32>
    %216 = arith.mulf %211, %215 : vector<32x128xf32>
    %217 = vector.broadcast %196 : vector<1x128xf32> to vector<32x128xf32>
    %218 = arith.mulf %216, %217 : vector<32x128xf32>
    %219 = vector.broadcast %198 : vector<1x128xf32> to vector<32x128xf32>
    %220 = arith.addf %218, %219 : vector<32x128xf32>
    %221 = arith.truncf %220 : vector<32x128xf32> to vector<32x128xbf16>
    %c1_83 = arith.constant 1 : index
    %c0_84 = arith.constant 0 : index
    %c0_85 = arith.constant 0 : index
    %222 = vector.load %arg4[%c1_83, %c0_84, %c0_85] : memref<2x128x384xbf16, #tpu.memory_space<vmem>>, vector<1x128x384xbf16>
    %223 = vector.shape_cast %222 : vector<1x128x384xbf16> to vector<128x384xbf16>
    %cst_86 = arith.constant dense<0.000000e+00> : vector<32x384xf32>
    %224 = tpu.matmul %221, %223, %cst_86 {dimension_numbers = #tpu.dot_dimension_numbers<[1], [0], [0], [1], [0, 0, 1, 1], [], []>} : vector<32x128xbf16>, vector<128x384xbf16>, vector<32x384xf32> -> vector<32x384xf32>
    %c1_87 = arith.constant 1 : index
    %c0_88 = arith.constant 0 : index
    %c0_89 = arith.constant 0 : index
    %225 = vector.load %arg5[%c1_87, %c0_88, %c0_89] : memref<2x1x384xf32, #tpu.memory_space<vmem>>, vector<1x1x384xf32>
    %226 = vector.shape_cast %225 : vector<1x1x384xf32> to vector<1x384xf32>
    %227 = vector.broadcast %226 : vector<1x384xf32> to vector<32x384xf32>
    %228 = arith.addf %224, %227 : vector<32x384xf32>
    %229 = vector.extract_strided_slice %228 {offsets = [0, 0], sizes = [32, 128], strides = [1, 1]} : vector<32x384xf32> to vector<32x128xf32>
    %230 = vector.extract_strided_slice %228 {offsets = [0, 128], sizes = [32, 128], strides = [1, 1]} : vector<32x384xf32> to vector<32x128xf32>
    %231 = vector.extract_strided_slice %228 {offsets = [0, 256], sizes = [32, 128], strides = [1, 1]} : vector<32x384xf32> to vector<32x128xf32>
    %232 = vector.extract_strided_slice %229 {offsets = [0, 0], sizes = [32, 32], strides = [1, 1]} : vector<32x128xf32> to vector<32x32xf32>
    %233 = arith.truncf %232 : vector<32x32xf32> to vector<32x32xbf16>
    %234 = vector.extract_strided_slice %230 {offsets = [0, 0], sizes = [32, 32], strides = [1, 1]} : vector<32x128xf32> to vector<32x32xf32>
    %235 = arith.truncf %234 : vector<32x32xf32> to vector<32x32xbf16>
    "tpu.trace_start"() <{level = 10 : i32, message = "qd,kd->qk"}> : () -> ()
    %cst_90 = arith.constant dense<0.000000e+00> : vector<32x32xf32>
    %236 = tpu.matmul %233, %235, %cst_90 {dimension_numbers = #tpu.dot_dimension_numbers<[1], [1], [0], [0], [0, 0, 1, 0], [], []>} : vector<32x32xbf16>, vector<32x32xbf16>, vector<32x32xf32> -> vector<32x32xf32>
    "tpu.trace_stop"() : () -> ()
    %237 = vector.extract_strided_slice %229 {offsets = [0, 32], sizes = [32, 32], strides = [1, 1]} : vector<32x128xf32> to vector<32x32xf32>
    %238 = arith.truncf %237 : vector<32x32xf32> to vector<32x32xbf16>
    %239 = vector.extract_strided_slice %230 {offsets = [0, 32], sizes = [32, 32], strides = [1, 1]} : vector<32x128xf32> to vector<32x32xf32>
    %240 = arith.truncf %239 : vector<32x32xf32> to vector<32x32xbf16>
    "tpu.trace_start"() <{level = 10 : i32, message = "qd,kd->qk"}> : () -> ()
    %cst_91 = arith.constant dense<0.000000e+00> : vector<32x32xf32>
    %241 = tpu.matmul %238, %240, %cst_91 {dimension_numbers = #tpu.dot_dimension_numbers<[1], [1], [0], [0], [0, 0, 1, 0], [], []>} : vector<32x32xbf16>, vector<32x32xbf16>, vector<32x32xf32> -> vector<32x32xf32>
    "tpu.trace_stop"() : () -> ()
    %242 = vector.extract_strided_slice %229 {offsets = [0, 64], sizes = [32, 32], strides = [1, 1]} : vector<32x128xf32> to vector<32x32xf32>
    %243 = arith.truncf %242 : vector<32x32xf32> to vector<32x32xbf16>
    %244 = vector.extract_strided_slice %230 {offsets = [0, 64], sizes = [32, 32], strides = [1, 1]} : vector<32x128xf32> to vector<32x32xf32>
    %245 = arith.truncf %244 : vector<32x32xf32> to vector<32x32xbf16>
    "tpu.trace_start"() <{level = 10 : i32, message = "qd,kd->qk"}> : () -> ()
    %cst_92 = arith.constant dense<0.000000e+00> : vector<32x32xf32>
    %246 = tpu.matmul %243, %245, %cst_92 {dimension_numbers = #tpu.dot_dimension_numbers<[1], [1], [0], [0], [0, 0, 1, 0], [], []>} : vector<32x32xbf16>, vector<32x32xbf16>, vector<32x32xf32> -> vector<32x32xf32>
    "tpu.trace_stop"() : () -> ()
    %247 = vector.extract_strided_slice %229 {offsets = [0, 96], sizes = [32, 32], strides = [1, 1]} : vector<32x128xf32> to vector<32x32xf32>
    %248 = arith.truncf %247 : vector<32x32xf32> to vector<32x32xbf16>
    %249 = vector.extract_strided_slice %230 {offsets = [0, 96], sizes = [32, 32], strides = [1, 1]} : vector<32x128xf32> to vector<32x32xf32>
    %250 = arith.truncf %249 : vector<32x32xf32> to vector<32x32xbf16>
    "tpu.trace_start"() <{level = 10 : i32, message = "qd,kd->qk"}> : () -> ()
    %cst_93 = arith.constant dense<0.000000e+00> : vector<32x32xf32>
    %251 = tpu.matmul %248, %250, %cst_93 {dimension_numbers = #tpu.dot_dimension_numbers<[1], [1], [0], [0], [0, 0, 1, 0], [], []>} : vector<32x32xbf16>, vector<32x32xbf16>, vector<32x32xf32> -> vector<32x32xf32>
    "tpu.trace_stop"() : () -> ()
    %252 = tpu.concatenate %236, %241, %246, %251 in 1 : vector<32x32xf32>, vector<32x32xf32>, vector<32x32xf32>, vector<32x32xf32> -> vector<32x128xf32>
    %cst_94 = arith.constant 0.176776692 : f32
    %253 = vector.broadcast %cst_94 : f32 to vector<32x128xf32>
    %254 = arith.mulf %252, %253 : vector<32x128xf32>
    %255 = arith.addf %254, %1 : vector<32x128xf32>
    %256 = vector.extract_strided_slice %255 {offsets = [0, 0], sizes = [32, 32], strides = [1, 1]} : vector<32x128xf32> to vector<32x32xf32>
    %cst_95 = arith.constant dense<0xFF800000> : vector<32xf32>
    %257 = vector.multi_reduction <maximumf>, %256, %cst_95 [1] : vector<32x32xf32> to vector<32xf32>
    %258 = vector.shape_cast %257 : vector<32xf32> to vector<32x1xf32>
    %259 = vector.shape_cast %258 : vector<32x1xf32> to vector<32x1xf32>
    %260 = vector.broadcast %259 : vector<32x1xf32> to vector<32x32xf32>
    %261 = vector.extract_strided_slice %255 {offsets = [0, 32], sizes = [32, 32], strides = [1, 1]} : vector<32x128xf32> to vector<32x32xf32>
    %cst_96 = arith.constant dense<0xFF800000> : vector<32xf32>
    %262 = vector.multi_reduction <maximumf>, %261, %cst_96 [1] : vector<32x32xf32> to vector<32xf32>
    %263 = vector.shape_cast %262 : vector<32xf32> to vector<32x1xf32>
    %264 = vector.shape_cast %263 : vector<32x1xf32> to vector<32x1xf32>
    %265 = vector.broadcast %264 : vector<32x1xf32> to vector<32x32xf32>
    %266 = vector.extract_strided_slice %255 {offsets = [0, 64], sizes = [32, 32], strides = [1, 1]} : vector<32x128xf32> to vector<32x32xf32>
    %cst_97 = arith.constant dense<0xFF800000> : vector<32xf32>
    %267 = vector.multi_reduction <maximumf>, %266, %cst_97 [1] : vector<32x32xf32> to vector<32xf32>
    %268 = vector.shape_cast %267 : vector<32xf32> to vector<32x1xf32>
    %269 = vector.shape_cast %268 : vector<32x1xf32> to vector<32x1xf32>
    %270 = vector.broadcast %269 : vector<32x1xf32> to vector<32x32xf32>
    %271 = vector.extract_strided_slice %255 {offsets = [0, 96], sizes = [32, 32], strides = [1, 1]} : vector<32x128xf32> to vector<32x32xf32>
    %cst_98 = arith.constant dense<0xFF800000> : vector<32xf32>
    %272 = vector.multi_reduction <maximumf>, %271, %cst_98 [1] : vector<32x32xf32> to vector<32xf32>
    %273 = vector.shape_cast %272 : vector<32xf32> to vector<32x1xf32>
    %274 = vector.shape_cast %273 : vector<32x1xf32> to vector<32x1xf32>
    %275 = vector.broadcast %274 : vector<32x1xf32> to vector<32x32xf32>
    %276 = tpu.concatenate %260, %265, %270, %275 in 1 : vector<32x32xf32>, vector<32x32xf32>, vector<32x32xf32>, vector<32x32xf32> -> vector<32x128xf32>
    %277 = arith.subf %255, %276 : vector<32x128xf32>
    %278 = math.exp %277 : vector<32x128xf32>
    %279 = vector.extract_strided_slice %278 {offsets = [0, 0], sizes = [32, 32], strides = [1, 1]} : vector<32x128xf32> to vector<32x32xf32>
    %cst_99 = arith.constant dense<0.000000e+00> : vector<32xf32>
    %280 = vector.multi_reduction <add>, %279, %cst_99 [1] : vector<32x32xf32> to vector<32xf32>
    %281 = vector.shape_cast %280 : vector<32xf32> to vector<32x1xf32>
    %282 = vector.shape_cast %281 : vector<32x1xf32> to vector<32x1xf32>
    %283 = vector.broadcast %282 : vector<32x1xf32> to vector<32x32xf32>
    %284 = vector.extract_strided_slice %278 {offsets = [0, 32], sizes = [32, 32], strides = [1, 1]} : vector<32x128xf32> to vector<32x32xf32>
    %cst_100 = arith.constant dense<0.000000e+00> : vector<32xf32>
    %285 = vector.multi_reduction <add>, %284, %cst_100 [1] : vector<32x32xf32> to vector<32xf32>
    %286 = vector.shape_cast %285 : vector<32xf32> to vector<32x1xf32>
    %287 = vector.shape_cast %286 : vector<32x1xf32> to vector<32x1xf32>
    %288 = vector.broadcast %287 : vector<32x1xf32> to vector<32x32xf32>
    %289 = vector.extract_strided_slice %278 {offsets = [0, 64], sizes = [32, 32], strides = [1, 1]} : vector<32x128xf32> to vector<32x32xf32>
    %cst_101 = arith.constant dense<0.000000e+00> : vector<32xf32>
    %290 = vector.multi_reduction <add>, %289, %cst_101 [1] : vector<32x32xf32> to vector<32xf32>
    %291 = vector.shape_cast %290 : vector<32xf32> to vector<32x1xf32>
    %292 = vector.shape_cast %291 : vector<32x1xf32> to vector<32x1xf32>
    %293 = vector.broadcast %292 : vector<32x1xf32> to vector<32x32xf32>
    %294 = vector.extract_strided_slice %278 {offsets = [0, 96], sizes = [32, 32], strides = [1, 1]} : vector<32x128xf32> to vector<32x32xf32>
    %cst_102 = arith.constant dense<0.000000e+00> : vector<32xf32>
    %295 = vector.multi_reduction <add>, %294, %cst_102 [1] : vector<32x32xf32> to vector<32xf32>
    %296 = vector.shape_cast %295 : vector<32xf32> to vector<32x1xf32>
    %297 = vector.shape_cast %296 : vector<32x1xf32> to vector<32x1xf32>
    %298 = vector.broadcast %297 : vector<32x1xf32> to vector<32x32xf32>
    %299 = tpu.concatenate %283, %288, %293, %298 in 1 : vector<32x32xf32>, vector<32x32xf32>, vector<32x32xf32>, vector<32x32xf32> -> vector<32x128xf32>
    %300 = tpu.reciprocal %299 {approx = true} : vector<32x128xf32> -> vector<32x128xf32>
    %301 = arith.mulf %278, %300 : vector<32x128xf32>
    %302 = vector.extract_strided_slice %301 {offsets = [0, 0], sizes = [32, 32], strides = [1, 1]} : vector<32x128xf32> to vector<32x32xf32>
    %303 = arith.truncf %302 : vector<32x32xf32> to vector<32x32xbf16>
    %304 = vector.extract_strided_slice %231 {offsets = [0, 0], sizes = [32, 32], strides = [1, 1]} : vector<32x128xf32> to vector<32x32xf32>
    %305 = arith.truncf %304 : vector<32x32xf32> to vector<32x32xbf16>
    %cst_103 = arith.constant dense<0.000000e+00> : vector<32x32xf32>
    %306 = tpu.matmul %303, %305, %cst_103 {dimension_numbers = #tpu.dot_dimension_numbers<[1], [0], [0], [1], [0, 0, 1, 1], [], []>} : vector<32x32xbf16>, vector<32x32xbf16>, vector<32x32xf32> -> vector<32x32xf32>
    %307 = vector.extract_strided_slice %301 {offsets = [0, 32], sizes = [32, 32], strides = [1, 1]} : vector<32x128xf32> to vector<32x32xf32>
    %308 = arith.truncf %307 : vector<32x32xf32> to vector<32x32xbf16>
    %309 = vector.extract_strided_slice %231 {offsets = [0, 32], sizes = [32, 32], strides = [1, 1]} : vector<32x128xf32> to vector<32x32xf32>
    %310 = arith.truncf %309 : vector<32x32xf32> to vector<32x32xbf16>
    %cst_104 = arith.constant dense<0.000000e+00> : vector<32x32xf32>
    %311 = tpu.matmul %308, %310, %cst_104 {dimension_numbers = #tpu.dot_dimension_numbers<[1], [0], [0], [1], [0, 0, 1, 1], [], []>} : vector<32x32xbf16>, vector<32x32xbf16>, vector<32x32xf32> -> vector<32x32xf32>
    %312 = vector.extract_strided_slice %301 {offsets = [0, 64], sizes = [32, 32], strides = [1, 1]} : vector<32x128xf32> to vector<32x32xf32>
    %313 = arith.truncf %312 : vector<32x32xf32> to vector<32x32xbf16>
    %314 = vector.extract_strided_slice %231 {offsets = [0, 64], sizes = [32, 32], strides = [1, 1]} : vector<32x128xf32> to vector<32x32xf32>
    %315 = arith.truncf %314 : vector<32x32xf32> to vector<32x32xbf16>
    %cst_105 = arith.constant dense<0.000000e+00> : vector<32x32xf32>
    %316 = tpu.matmul %313, %315, %cst_105 {dimension_numbers = #tpu.dot_dimension_numbers<[1], [0], [0], [1], [0, 0, 1, 1], [], []>} : vector<32x32xbf16>, vector<32x32xbf16>, vector<32x32xf32> -> vector<32x32xf32>
    %317 = vector.extract_strided_slice %301 {offsets = [0, 96], sizes = [32, 32], strides = [1, 1]} : vector<32x128xf32> to vector<32x32xf32>
    %318 = arith.truncf %317 : vector<32x32xf32> to vector<32x32xbf16>
    %319 = vector.extract_strided_slice %231 {offsets = [0, 96], sizes = [32, 32], strides = [1, 1]} : vector<32x128xf32> to vector<32x32xf32>
    %320 = arith.truncf %319 : vector<32x32xf32> to vector<32x32xbf16>
    %cst_106 = arith.constant dense<0.000000e+00> : vector<32x32xf32>
    %321 = tpu.matmul %318, %320, %cst_106 {dimension_numbers = #tpu.dot_dimension_numbers<[1], [0], [0], [1], [0, 0, 1, 1], [], []>} : vector<32x32xbf16>, vector<32x32xbf16>, vector<32x32xf32> -> vector<32x32xf32>
    %322 = tpu.concatenate %306, %311, %316, %321 in 1 : vector<32x32xf32>, vector<32x32xf32>, vector<32x32xf32>, vector<32x32xf32> -> vector<32x128xf32>
    %323 = arith.truncf %322 : vector<32x128xf32> to vector<32x128xbf16>
    %c1_107 = arith.constant 1 : index
    %c0_108 = arith.constant 0 : index
    %c0_109 = arith.constant 0 : index
    %324 = vector.load %arg6[%c1_107, %c0_108, %c0_109] : memref<2x128x128xbf16, #tpu.memory_space<vmem>>, vector<1x128x128xbf16>
    %325 = vector.shape_cast %324 : vector<1x128x128xbf16> to vector<128x128xbf16>
    %cst_110 = arith.constant dense<0.000000e+00> : vector<32x128xf32>
    %326 = tpu.matmul %323, %325, %cst_110 {dimension_numbers = #tpu.dot_dimension_numbers<[1], [0], [0], [1], [0, 0, 1, 1], [], []>} : vector<32x128xbf16>, vector<128x128xbf16>, vector<32x128xf32> -> vector<32x128xf32>
    %c1_111 = arith.constant 1 : index
    %c0_112 = arith.constant 0 : index
    %c0_113 = arith.constant 0 : index
    %327 = vector.load %arg7[%c1_111, %c0_112, %c0_113] : memref<2x1x128xf32, #tpu.memory_space<vmem>>, vector<1x1x128xf32>
    %328 = vector.shape_cast %327 : vector<1x1x128xf32> to vector<1x128xf32>
    %329 = vector.broadcast %328 : vector<1x128xf32> to vector<32x128xf32>
    %330 = arith.addf %326, %329 : vector<32x128xf32>
    %331 = arith.addf %194, %330 : vector<32x128xf32>
    %c1_114 = arith.constant 1 : index
    %c0_115 = arith.constant 0 : index
    %c0_116 = arith.constant 0 : index
    %332 = vector.load %arg8[%c1_114, %c0_115, %c0_116] : memref<2x1x128xf32, #tpu.memory_space<vmem>>, vector<1x1x128xf32>
    %333 = vector.shape_cast %332 : vector<1x1x128xf32> to vector<1x128xf32>
    %c1_117 = arith.constant 1 : index
    %c0_118 = arith.constant 0 : index
    %c0_119 = arith.constant 0 : index
    %334 = vector.load %arg9[%c1_117, %c0_118, %c0_119] : memref<2x1x128xf32, #tpu.memory_space<vmem>>, vector<1x1x128xf32>
    %335 = vector.shape_cast %334 : vector<1x1x128xf32> to vector<1x128xf32>
    %cst_120 = arith.constant dense<0.000000e+00> : vector<32xf32>
    %336 = vector.multi_reduction <add>, %331, %cst_120 [1] : vector<32x128xf32> to vector<32xf32>
    %337 = vector.shape_cast %336 : vector<32xf32> to vector<32x1xf32>
    %cst_121 = arith.constant 1.280000e+02 : f32
    %338 = vector.broadcast %cst_121 : f32 to vector<32x1xf32>
    %339 = arith.divf %337, %338 : vector<32x1xf32>
    %340 = vector.broadcast %339 : vector<32x1xf32> to vector<32x128xf32>
    %341 = arith.subf %331, %340 : vector<32x128xf32>
    %342 = arith.mulf %341, %341 : vector<32x128xf32>
    %cst_122 = arith.constant dense<0.000000e+00> : vector<32xf32>
    %343 = vector.multi_reduction <add>, %342, %cst_122 [1] : vector<32x128xf32> to vector<32xf32>
    %344 = vector.shape_cast %343 : vector<32xf32> to vector<32x1xf32>
    %cst_123 = arith.constant 1.280000e+02 : f32
    %345 = vector.broadcast %cst_123 : f32 to vector<32x1xf32>
    %346 = arith.divf %344, %345 : vector<32x1xf32>
    %347 = vector.broadcast %339 : vector<32x1xf32> to vector<32x128xf32>
    %348 = arith.subf %331, %347 : vector<32x128xf32>
    %cst_124 = arith.constant 9.99999974E-6 : f32
    %349 = vector.broadcast %cst_124 : f32 to vector<32x1xf32>
    %350 = arith.addf %346, %349 : vector<32x1xf32>
    %351 = math.rsqrt %350 : vector<32x1xf32>
    %352 = vector.broadcast %351 : vector<32x1xf32> to vector<32x128xf32>
    %353 = arith.mulf %348, %352 : vector<32x128xf32>
    %354 = vector.broadcast %333 : vector<1x128xf32> to vector<32x128xf32>
    %355 = arith.mulf %353, %354 : vector<32x128xf32>
    %356 = vector.broadcast %335 : vector<1x128xf32> to vector<32x128xf32>
    %357 = arith.addf %355, %356 : vector<32x128xf32>
    %358 = arith.truncf %357 : vector<32x128xf32> to vector<32x128xbf16>
    %c1_125 = arith.constant 1 : index
    %c0_126 = arith.constant 0 : index
    %c0_127 = arith.constant 0 : index
    %359 = vector.load %arg10[%c1_125, %c0_126, %c0_127] : memref<2x128x512xbf16, #tpu.memory_space<vmem>>, vector<1x128x512xbf16>
    %360 = vector.shape_cast %359 : vector<1x128x512xbf16> to vector<128x512xbf16>
    %cst_128 = arith.constant dense<0.000000e+00> : vector<32x512xf32>
    %361 = tpu.matmul %358, %360, %cst_128 {dimension_numbers = #tpu.dot_dimension_numbers<[1], [0], [0], [1], [0, 0, 1, 1], [], []>} : vector<32x128xbf16>, vector<128x512xbf16>, vector<32x512xf32> -> vector<32x512xf32>
    %c1_129 = arith.constant 1 : index
    %c0_130 = arith.constant 0 : index
    %c0_131 = arith.constant 0 : index
    %362 = vector.load %arg11[%c1_129, %c0_130, %c0_131] : memref<2x1x512xf32, #tpu.memory_space<vmem>>, vector<1x1x512xf32>
    %363 = vector.shape_cast %362 : vector<1x1x512xf32> to vector<1x512xf32>
    %364 = vector.broadcast %363 : vector<1x512xf32> to vector<32x512xf32>
    %365 = arith.addf %361, %364 : vector<32x512xf32>
    %cst_132 = arith.constant 5.000000e-01 : f32
    %366 = vector.broadcast %cst_132 : f32 to vector<32x512xf32>
    %367 = arith.mulf %366, %365 : vector<32x512xf32>
    %cst_133 = arith.constant 4.471500e-02 : f32
    %368 = vector.broadcast %cst_133 : f32 to vector<32x512xf32>
    %369 = arith.mulf %368, %365 : vector<32x512xf32>
    %370 = arith.mulf %369, %365 : vector<32x512xf32>
    %371 = arith.mulf %370, %365 : vector<32x512xf32>
    %372 = arith.addf %365, %371 : vector<32x512xf32>
    %cst_134 = arith.constant 0.797884583 : f32
    %373 = vector.broadcast %cst_134 : f32 to vector<32x512xf32>
    %374 = arith.mulf %373, %372 : vector<32x512xf32>
    %375 = math.tanh %374 : vector<32x512xf32>
    %cst_135 = arith.constant 1.000000e+00 : f32
    %376 = vector.broadcast %cst_135 : f32 to vector<32x512xf32>
    %377 = arith.addf %376, %375 : vector<32x512xf32>
    %378 = arith.mulf %367, %377 : vector<32x512xf32>
    %379 = arith.truncf %378 : vector<32x512xf32> to vector<32x512xbf16>
    %c1_136 = arith.constant 1 : index
    %c0_137 = arith.constant 0 : index
    %c0_138 = arith.constant 0 : index
    %380 = vector.load %arg12[%c1_136, %c0_137, %c0_138] : memref<2x512x128xbf16, #tpu.memory_space<vmem>>, vector<1x512x128xbf16>
    %381 = vector.shape_cast %380 : vector<1x512x128xbf16> to vector<512x128xbf16>
    %cst_139 = arith.constant dense<0.000000e+00> : vector<32x128xf32>
    %382 = tpu.matmul %379, %381, %cst_139 {dimension_numbers = #tpu.dot_dimension_numbers<[1], [0], [0], [1], [0, 0, 1, 1], [], []>} : vector<32x512xbf16>, vector<512x128xbf16>, vector<32x128xf32> -> vector<32x128xf32>
    %383 = arith.addf %331, %382 : vector<32x128xf32>
    %c1_140 = arith.constant 1 : index
    %c0_141 = arith.constant 0 : index
    %c0_142 = arith.constant 0 : index
    %384 = vector.load %arg13[%c1_140, %c0_141, %c0_142] : memref<2x1x128xf32, #tpu.memory_space<vmem>>, vector<1x1x128xf32>
    %385 = vector.shape_cast %384 : vector<1x1x128xf32> to vector<1x128xf32>
    %386 = vector.broadcast %385 : vector<1x128xf32> to vector<32x128xf32>
    %387 = arith.addf %383, %386 : vector<32x128xf32>
    %c0_143 = arith.constant 0 : index
    %c0_144 = arith.constant 0 : index
    %388 = vector.load %arg14[%c0_143, %c0_144] : memref<1x128xf32, #tpu.memory_space<vmem>>, vector<1x128xf32>
    %c0_145 = arith.constant 0 : index
    %c0_146 = arith.constant 0 : index
    %389 = vector.load %arg15[%c0_145, %c0_146] : memref<1x128xf32, #tpu.memory_space<vmem>>, vector<1x128xf32>
    %cst_147 = arith.constant dense<0.000000e+00> : vector<32xf32>
    %390 = vector.multi_reduction <add>, %387, %cst_147 [1] : vector<32x128xf32> to vector<32xf32>
    %391 = vector.shape_cast %390 : vector<32xf32> to vector<32x1xf32>
    %cst_148 = arith.constant 1.280000e+02 : f32
    %392 = vector.broadcast %cst_148 : f32 to vector<32x1xf32>
    %393 = arith.divf %391, %392 : vector<32x1xf32>
    %394 = vector.broadcast %393 : vector<32x1xf32> to vector<32x128xf32>
    %395 = arith.subf %387, %394 : vector<32x128xf32>
    %396 = arith.mulf %395, %395 : vector<32x128xf32>
    %cst_149 = arith.constant dense<0.000000e+00> : vector<32xf32>
    %397 = vector.multi_reduction <add>, %396, %cst_149 [1] : vector<32x128xf32> to vector<32xf32>
    %398 = vector.shape_cast %397 : vector<32xf32> to vector<32x1xf32>
    %cst_150 = arith.constant 1.280000e+02 : f32
    %399 = vector.broadcast %cst_150 : f32 to vector<32x1xf32>
    %400 = arith.divf %398, %399 : vector<32x1xf32>
    %401 = vector.broadcast %393 : vector<32x1xf32> to vector<32x128xf32>
    %402 = arith.subf %387, %401 : vector<32x128xf32>
    %cst_151 = arith.constant 9.99999974E-6 : f32
    %403 = vector.broadcast %cst_151 : f32 to vector<32x1xf32>
    %404 = arith.addf %400, %403 : vector<32x1xf32>
    %405 = math.rsqrt %404 : vector<32x1xf32>
    %406 = vector.broadcast %405 : vector<32x1xf32> to vector<32x128xf32>
    %407 = arith.mulf %402, %406 : vector<32x128xf32>
    %408 = vector.broadcast %388 : vector<1x128xf32> to vector<32x128xf32>
    %409 = arith.mulf %407, %408 : vector<32x128xf32>
    %410 = vector.broadcast %389 : vector<1x128xf32> to vector<32x128xf32>
    %411 = arith.addf %409, %410 : vector<32x128xf32>
    %412 = arith.truncf %411 : vector<32x128xf32> to vector<32x128xbf16>
    %c0_152 = arith.constant 0 : index
    %c0_153 = arith.constant 0 : index
    %413 = vector.load %arg16[%c0_152, %c0_153] : memref<128x256xbf16, #tpu.memory_space<vmem>>, vector<128x256xbf16>
    %cst_154 = arith.constant dense<0.000000e+00> : vector<32x256xf32>
    %414 = tpu.matmul %412, %413, %cst_154 {dimension_numbers = #tpu.dot_dimension_numbers<[1], [0], [0], [1], [0, 0, 1, 1], [], []>} : vector<32x128xbf16>, vector<128x256xbf16>, vector<32x256xf32> -> vector<32x256xf32>
    %c0_155 = arith.constant 0 : index
    %c0_156 = arith.constant 0 : index
    %415 = vector.load %arg17[%c0_155, %c0_156] : memref<32x256xf32, #tpu.memory_space<vmem>>, vector<32x256xf32>
    tpu.vector_store %arg17[%c0_155, %c0_156], %414 {strides = array<i32>} : memref<32x256xf32, #tpu.memory_space<vmem>>, vector<32x256xf32>,
    return
  }
}

</mosaic_0001>

<llo_original>
// kernel: tile.7
$region0: #{tile.7}
  %s0 = inlined_call_operand.vmem [shape: f32[32,4,32], index: 0, kind: input, shape index: {}]
  %s1 = inlined_call_operand.vmem [shape: f32[32,128], index: 1, kind: output, shape index: {}]
  $region1: #{tile.7} parent=0
    #allocation0 [shape = 'u8[131072]{0}', space=vmem, size = 0x20000, scoped, tag = 'scoped mem for input reshape']
    %s3 = sshllo.u32 0, 4
    %s4 = smul.addr 4, 31
    %s5 = scalar_lea.vmem %s0, %s4
    %v6 = vld [vmem:[%s5] sm:%s3]
    %s7 = scalar_lea.vmem [#allocation0], 248
    %8 = vst [vmem:[%s7] sm:%s3] %v6
    %s9 = smul.addr 4, 30
    %s10 = scalar_lea.vmem %s0, %s9
    %v11 = vld [vmem:[%s10] sm:%s3]
    %s12 = scalar_lea.vmem [#allocation0], 240
    %13 = vst [vmem:[%s12] sm:%s3] %v11
    %s14 = smul.addr 4, 29
    %s15 = scalar_lea.vmem %s0, %s14
    %v16 = vld [vmem:[%s15] sm:%s3]
    %s17 = scalar_lea.vmem [#allocation0], 232
    %18 = vst [vmem:[%s17] sm:%s3] %v16
    %s19 = smul.addr 4, 28
    %s20 = scalar_lea.vmem %s0, %s19
    %v21 = vld [vmem:[%s20] sm:%s3]
    %s22 = scalar_lea.vmem [#allocation0], 224
    %23 = vst [vmem:[%s22] sm:%s3] %v21
    %s24 = smul.addr 4, 27
    %s25 = scalar_lea.vmem %s0, %s24
    %v26 = vld [vmem:[%s25] sm:%s3]
    %s27 = scalar_lea.vmem [#allocation0], 216
    %28 = vst [vmem:[%s27] sm:%s3] %v26
    %s29 = smul.addr 4, 26
    %s30 = scalar_lea.vmem %s0, %s29
    %v31 = vld [vmem:[%s30] sm:%s3]
    %s32 = scalar_lea.vmem [#allocation0], 208
    %33 = vst [vmem:[%s32] sm:%s3] %v31
    %s34 = smul.addr 4, 25
    %s35 = scalar_lea.vmem %s0, %s34
    %v36 = vld [vmem:[%s35] sm:%s3]
    %s37 = scalar_lea.vmem [#allocation0], 200
    %38 = vst [vmem:[%s37] sm:%s3] %v36
    %s39 = smul.addr 4, 24
    %s40 = scalar_lea.vmem %s0, %s39
    %v41 = vld [vmem:[%s40] sm:%s3]
    %s42 = scalar_lea.vmem [#allocation0], 192
    %43 = vst [vmem:[%s42] sm:%s3] %v41
    %s44 = smul.addr 4, 23
    %s45 = scalar_lea.vmem %s0, %s44
    %v46 = vld [vmem:[%s45] sm:%s3]
    %s47 = scalar_lea.vmem [#allocation0], 184
    %48 = vst [vmem:[%s47] sm:%s3] %v46
    %s49 = smul.addr 4, 22
    %s50 = scalar_lea.vmem %s0, %s49
    %v51 = vld [vmem:[%s50] sm:%s3]
    %s52 = scalar_lea.vmem [#allocation0], 176
    %53 = vst [vmem:[%s52] sm:%s3] %v51
    %s54 = smul.addr 4, 21
    %s55 = scalar_lea.vmem %s0, %s54
    %v56 = vld [vmem:[%s55] sm:%s3]
    %s57 = scalar_lea.vmem [#allocation0], 168
    %58 = vst [vmem:[%s57] sm:%s3] %v56
    %s59 = smul.addr 4, 20
    %s60 = scalar_lea.vmem %s0, %s59
    %v61 = vld [vmem:[%s60] sm:%s3]
    %s62 = scalar_lea.vmem [#allocation0], 160
    %63 = vst [vmem:[%s62] sm:%s3] %v61
    %s64 = smul.addr 4, 19
    %s65 = scalar_lea.vmem %s0, %s64
    %v66 = vld [vmem:[%s65] sm:%s3]
    %s67 = scalar_lea.vmem [#allocation0], 152
    %68 = vst [vmem:[%s67] sm:%s3] %v66
    %s69 = smul.addr 4, 18
    %s70 = scalar_lea.vmem %s0, %s69
    %v71 = vld [vmem:[%s70] sm:%s3]
    %s72 = scalar_lea.vmem [#allocation0], 144
    %73 = vst [vmem:[%s72] sm:%s3] %v71
    %s74 = smul.addr 4, 17
    %s75 = scalar_lea.vmem %s0, %s74
    %v76 = vld [vmem:[%s75] sm:%s3]
    %s77 = scalar_lea.vmem [#allocation0], 136
    %78 = vst [vmem:[%s77] sm:%s3] %v76
    %s79 = smul.addr 4, 16
    %s80 = scalar_lea.vmem %s0, %s79
    %v81 = vld [vmem:[%s80] sm:%s3]
    %s82 = scalar_lea.vmem [#allocation0], 128
    %83 = vst [vmem:[%s82] sm:%s3] %v81
    %s84 = smul.addr 4, 15
    %s85 = scalar_lea.vmem %s0, %s84
    %v86 = vld [vmem:[%s85] sm:%s3]
    %s87 = scalar_lea.vmem [#allocation0], 120
    %88 = vst [vmem:[%s87] sm:%s3] %v86
    %s89 = smul.addr 4, 14
    %s90 = scalar_lea.vmem %s0, %s89
    %v91 = vld [vmem:[%s90] sm:%s3]
    %s92 = scalar_lea.vmem [#allocation0], 112
    %93 = vst [vmem:[%s92] sm:%s3] %v91
    %s94 = smul.addr 4, 13
    %s95 = scalar_lea.vmem %s0, %s94
    %v96 = vld [vmem:[%s95] sm:%s3]
    %s97 = scalar_lea.vmem [#allocation0], 104
    %98 = vst [vmem:[%s97] sm:%s3] %v96
    %s99 = smul.addr 4, 12
    %s100 = scalar_lea.vmem %s0, %s99
    %v101 = vld [vmem:[%s100] sm:%s3]
    %s102 = scalar_lea.vmem [#allocation0], 96
    %103 = vst [vmem:[%s102] sm:%s3] %v101
    %s104 = smul.addr 4, 11
    %s105 = scalar_lea.vmem %s0, %s104
    %v106 = vld [vmem:[%s105] sm:%s3]
    %s107 = scalar_lea.vmem [#allocation0], 88
    %108 = vst [vmem:[%s107] sm:%s3] %v106
    %s109 = smul.addr 4, 10
    %s110 = scalar_lea.vmem %s0, %s109
    %v111 = vld [vmem:[%s110] sm:%s3]
    %s112 = scalar_lea.vmem [#allocation0], 80
    %113 = vst [vmem:[%s112] sm:%s3] %v111
    %s114 = smul.addr 4, 9
    %s115 = scalar_lea.vmem %s0, %s114
    %v116 = vld [vmem:[%s115] sm:%s3]
    %s117 = scalar_lea.vmem [#allocation0], 72
    %118 = vst [vmem:[%s117] sm:%s3] %v116
    %s119 = smul.addr 4, 8
    %s120 = scalar_lea.vmem %s0, %s119
    %v121 = vld [vmem:[%s120] sm:%s3]
    %s122 = scalar_lea.vmem [#allocation0], 64
    %123 = vst [vmem:[%s122] sm:%s3] %v121
    %s124 = smul.addr 4, 7
    %s125 = scalar_lea.vmem %s0, %s124
    %v126 = vld [vmem:[%s125] sm:%s3]
    %s127 = scalar_lea.vmem [#allocation0], 56
    %128 = vst [vmem:[%s127] sm:%s3] %v126
    %s129 = smul.addr 4, 6
    %s130 = scalar_lea.vmem %s0, %s129
    %v131 = vld [vmem:[%s130] sm:%s3]
    %s132 = scalar_lea.vmem [#allocation0], 48
    %133 = vst [vmem:[%s132] sm:%s3] %v131
    %s134 = smul.addr 4, 5
    %s135 = scalar_lea.vmem %s0, %s134
    %v136 = vld [vmem:[%s135] sm:%s3]
    %s137 = scalar_lea.vmem [#allocation0], 40
    %138 = vst [vmem:[%s137] sm:%s3] %v136
    %s139 = smul.addr 4, 4
    %s140 = scalar_lea.vmem %s0, %s139
    %v141 = vld [vmem:[%s140] sm:%s3]
    %s142 = scalar_lea.vmem [#allocation0], 32
    %143 = vst [vmem:[%s142] sm:%s3] %v141
    %s144 = smul.addr 4, 3
    %s145 = scalar_lea.vmem %s0, %s144
    %v146 = vld [vmem:[%s145] sm:%s3]
    %s147 = scalar_lea.vmem [#allocation0], 24
    %148 = vst [vmem:[%s147] sm:%s3] %v146
    %s149 = smul.addr 4, 2
    %s150 = scalar_lea.vmem %s0, %s149
    %v151 = vld [vmem:[%s150] sm:%s3]
    %s152 = scalar_lea.vmem [#allocation0], 16
    %153 = vst [vmem:[%s152] sm:%s3] %v151
    %s154 = scalar_lea.vmem %s0, 4
    %v155 = vld [vmem:[%s154] sm:%s3]
    %s156 = scalar_lea.vmem [#allocation0], 8
    %157 = vst [vmem:[%s156] sm:%s3] %v155
    %v158 = vld [vmem:[%s0] sm:%s3]
    %159 = vst [vmem:[#allocation0] sm:%s3] %v158
    %v160 = vld [vmem:[#allocation0] ss:$8 sm:$0xf]
    %v161 = vld [vmem:[#allocation0] ss:$8 sm:$0xf0]
    %vm162 = vcmask 1047556
    %v163 = vsel %vm162, %v161, %v160
    %vm164 = vcmask 261120
    %165 = vst.msk [vmem:[%s1] sm:$0xff] %vm164, %v163
    %s166 = scalar_lea.vmem [#allocation0], 64
    %v167 = vld [vmem:[%s166] ss:$8 sm:$0xf]
    %s168 = scalar_lea.vmem [#allocation0], 64
    %v169 = vld [vmem:[%s168] ss:$8 sm:$0xf0]
    %vm170 = vcmask 1047556
    %v171 = vsel %vm170, %v169, %v167
    %vm172 = vcmask 261120
    %s173 = scalar_lea.vmem %s1, 8
    %174 = vst.msk [vmem:[%s173] sm:$0xff] %vm172, %v171
    %s175 = scalar_lea.vmem [#allocation0], 128
    %v176 = vld [vmem:[%s175] ss:$8 sm:$0xf]
    %s177 = scalar_lea.vmem [#allocation0], 128
    %v178 = vld [vmem:[%s177] ss:$8 sm:$0xf0]
    %vm179 = vcmask 1047556
    %v180 = vsel %vm179, %v178, %v176
    %vm181 = vcmask 261120
    %s182 = scalar_lea.vmem %s1, 16
    %183 = vst.msk [vmem:[%s182] sm:$0xff] %vm181, %v180
    %s184 = scalar_lea.vmem [#allocation0], 192
    %v185 = vld [vmem:[%s184] ss:$8 sm:$0xf]
    %s186 = scalar_lea.vmem [#allocation0], 192
    %v187 = vld [vmem:[%s186] ss:$8 sm:$0xf0]
    %vm188 = vcmask 1047556
    %v189 = vsel %vm188, %v187, %v185
    %vm190 = vcmask 261120
    %s191 = scalar_lea.vmem %s1, 24
    %192 = vst.msk [vmem:[%s191] sm:$0xff] %vm190, %v189
    %s193 = scalar_lea.vmem [#allocation0], 3
    %v194 = vld [vmem:[%s193] ss:$8 sm:$0xf]
    %s195 = scalar_lea.vmem [#allocation0], 3
    %v196 = vld [vmem:[%s195] ss:$8 sm:$0xf0]
    %vm197 = vcmask 1047556
    %v198 = vsel %vm197, %v196, %v194
    %199 = vrot.lane.b32.xlu0 %v198, 96
    %v200 = vpop.permute.xlu0 %199
    %vm201 = vcmask 1048320
    %202 = vst.msk [vmem:[%s1] sm:$0xff] %vm201, %v200
    %s203 = scalar_lea.vmem [#allocation0], 67
    %v204 = vld [vmem:[%s203] ss:$8 sm:$0xf]
    %s205 = scalar_lea.vmem [#allocation0], 67
    %v206 = vld [vmem:[%s205] ss:$8 sm:$0xf0]
    %vm207 = vcmask 1047556
    %v208 = vsel %vm207, %v206, %v204
    %209 = vrot.lane.b32.xlu0 %v208, 96
    %v210 = vpop.permute.xlu0 %209
    %vm211 = vcmask 1048320
    %s212 = scalar_lea.vmem %s1, 8
    %213 = vst.msk [vmem:[%s212] sm:$0xff] %vm211, %v210
    %s214 = scalar_lea.vmem [#allocation0], 131
    %v215 = vld [vmem:[%s214] ss:$8 sm:$0xf]
    %s216 = scalar_lea.vmem [#allocation0], 131
    %v217 = vld [vmem:[%s216] ss:$8 sm:$0xf0]
    %vm218 = vcmask 1047556
    %v219 = vsel %vm218, %v217, %v215
    %220 = vrot.lane.b32.xlu0 %v219, 96
    %v221 = vpop.permute.xlu0 %220
    %vm222 = vcmask 1048320
    %s223 = scalar_lea.vmem %s1, 16
    %224 = vst.msk [vmem:[%s223] sm:$0xff] %vm222, %v221
    %s225 = scalar_lea.vmem [#allocation0], 195
    %v226 = vld [vmem:[%s225] ss:$8 sm:$0xf]
    %s227 = scalar_lea.vmem [#allocation0], 195
    %v228 = vld [vmem:[%s227] ss:$8 sm:$0xf0]
    %vm229 = vcmask 1047556
    %v230 = vsel %vm229, %v228, %v226
    %231 = vrot.lane.b32.xlu0 %v230, 96
    %v232 = vpop.permute.xlu0 %231
    %vm233 = vcmask 1048320
    %s234 = scalar_lea.vmem %s1, 24
    %235 = vst.msk [vmem:[%s234] sm:$0xff] %vm233, %v232
    %s236 = scalar_lea.vmem [#allocation0], 2
    %v237 = vld [vmem:[%s236] ss:$8 sm:$0xf]
    %s238 = scalar_lea.vmem [#allocation0], 2
    %v239 = vld [vmem:[%s238] ss:$8 sm:$0xf0]
    %vm240 = vcmask 1047556
    %v241 = vsel %vm240, %v239, %v237
    %242 = vrot.lane.b32.xlu0 %v241, 64
    %v243 = vpop.permute.xlu0 %242
    %vm244 = vcmask 785920
    %245 = vst.msk [vmem:[%s1] sm:$0xff] %vm244, %v243
    %s246 = scalar_lea.vmem [#allocation0], 66
    %v247 = vld [vmem:[%s246] ss:$8 sm:$0xf]
    %s248 = scalar_lea.vmem [#allocation0], 66
    %v249 = vld [vmem:[%s248] ss:$8 sm:$0xf0]
    %vm250 = vcmask 1047556
    %v251 = vsel %vm250, %v249, %v247
    %252 = vrot.lane.b32.xlu0 %v251, 64
    %v253 = vpop.permute.xlu0 %252
    %vm254 = vcmask 785920
    %s255 = scalar_lea.vmem %s1, 8
    %256 = vst.msk [vmem:[%s255] sm:$0xff] %vm254, %v253
    %s257 = scalar_lea.vmem [#allocation0], 130
    %v258 = vld [vmem:[%s257] ss:$8 sm:$0xf]
    %s259 = scalar_lea.vmem [#allocation0], 130
    %v260 = vld [vmem:[%s259] ss:$8 sm:$0xf0]
    %vm261 = vcmask 1047556
    %v262 = vsel %vm261, %v260, %v258
    %263 = vrot.lane.b32.xlu0 %v262, 64
    %v264 = vpop.permute.xlu0 %263
    %vm265 = vcmask 785920
    %s266 = scalar_lea.vmem %s1, 16
    %267 = vst.msk [vmem:[%s266] sm:$0xff] %vm265, %v264
    %s268 = scalar_lea.vmem [#allocation0], 194
    %v269 = vld [vmem:[%s268] ss:$8 sm:$0xf]
    %s270 = scalar_lea.vmem [#allocation0], 194
    %v271 = vld [vmem:[%s270] ss:$8 sm:$0xf0]
    %vm272 = vcmask 1047556
    %v273 = vsel %vm272, %v271, %v269
    %274 = vrot.lane.b32.xlu0 %v273, 64
    %v275 = vpop.permute.xlu0 %274
    %vm276 = vcmask 785920
    %s277 = scalar_lea.vmem %s1, 24
    %278 = vst.msk [vmem:[%s277] sm:$0xff] %vm276, %v275
    %s279 = scalar_lea.vmem [#allocation0], 1
    %v280 = vld [vmem:[%s279] ss:$8 sm:$0xf]
    %s281 = scalar_lea.vmem [#allocation0], 1
    %v282 = vld [vmem:[%s281] ss:$8 sm:$0xf0]
    %vm283 = vcmask 1047556
    %v284 = vsel %vm283, %v282, %v280
    %285 = vrot.lane.b32.xlu0 %v284, 32
    %v286 = vpop.permute.xlu0 %285
    %vm287 = vcmask 523520
    %288 = vst.msk [vmem:[%s1] sm:$0xff] %vm287, %v286
    %s289 = scalar_lea.vmem [#allocation0], 65
    %v290 = vld [vmem:[%s289] ss:$8 sm:$0xf]
    %s291 = scalar_lea.vmem [#allocation0], 65
    %v292 = vld [vmem:[%s291] ss:$8 sm:$0xf0]
    %vm293 = vcmask 1047556
    %v294 = vsel %vm293, %v292, %v290
    %295 = vrot.lane.b32.xlu0 %v294, 32
    %v296 = vpop.permute.xlu0 %295
    %vm297 = vcmask 523520
    %s298 = scalar_lea.vmem %s1, 8
    %299 = vst.msk [vmem:[%s298] sm:$0xff] %vm297, %v296
    %s300 = scalar_lea.vmem [#allocation0], 129
    %v301 = vld [vmem:[%s300] ss:$8 sm:$0xf]
    %s302 = scalar_lea.vmem [#allocation0], 129
    %v303 = vld [vmem:[%s302] ss:$8 sm:$0xf0]
    %vm304 = vcmask 1047556
    %v305 = vsel %vm304, %v303, %v301
    %306 = vrot.lane.b32.xlu0 %v305, 32
    %v307 = vpop.permute.xlu0 %306
    %vm308 = vcmask 523520
    %s309 = scalar_lea.vmem %s1, 16
    %310 = vst.msk [vmem:[%s309] sm:$0xff] %vm308, %v307
    %s311 = scalar_lea.vmem [#allocation0], 193
    %v312 = vld [vmem:[%s311] ss:$8 sm:$0xf]
    %s313 = scalar_lea.vmem [#allocation0], 193
    %v314 = vld [vmem:[%s313] ss:$8 sm:$0xf0]
    %vm315 = vcmask 1047556
    %v316 = vsel %vm315, %v314, %v312
    %317 = vrot.lane.b32.xlu0 %v316, 32
    %v318 = vpop.permute.xlu0 %317
    %vm319 = vcmask 523520
    %s320 = scalar_lea.vmem %s1, 24
    %321 = vst.msk [vmem:[%s320] sm:$0xff] %vm319, %v318

// kernel: gpt_lm_forward.1
$region0: #{gpt_lm_forward.1}
  #allocation0 [shape = 'u32[]', space=smem, size = 0x4, offset = 0x4, fixed_abs, tag = 'smem constant byte address 0x4 - core index']
  #allocation1 [shape = 'u32[144,128]{1,0:T(1,128)}', space=vmem, size = 0x12000, scoped, tag = 'internal scratch']
  %s0 = inlined_call_operand.vmem [shape: f32[32,128], index: 0, kind: input, shape index: {}]
  %s1 = inlined_call_operand.vmem [shape: f32[32,128], index: 1, kind: input, shape index: {}]
  %s2 = inlined_call_operand.vmem [shape: f32[2,1,128], index: 2, kind: input, shape index: {}]
  %s3 = inlined_call_operand.vmem [shape: f32[2,1,128], index: 3, kind: input, shape index: {}]
  %s4 = inlined_call_operand.hbm [shape: bf16[2,128,384], index: 4, kind: input, shape index: {}]
  %s5 = inlined_call_operand.vmem [shape: f32[2,1,384], index: 5, kind: input, shape index: {}]
  %s6 = inlined_call_operand.vmem [shape: bf16[2,128,128], index: 6, kind: input, shape index: {}]
  %s7 = inlined_call_operand.vmem [shape: f32[2,1,128], index: 7, kind: input, shape index: {}]
  %s8 = inlined_call_operand.vmem [shape: f32[2,1,128], index: 8, kind: input, shape index: {}]
  %s9 = inlined_call_operand.vmem [shape: f32[2,1,128], index: 9, kind: input, shape index: {}]
  %s10 = inlined_call_operand.vmem [shape: bf16[2,128,512], index: 10, kind: input, shape index: {}]
  %s11 = inlined_call_operand.vmem [shape: f32[2,1,512], index: 11, kind: input, shape index: {}]
  %s12 = inlined_call_operand.hbm [shape: bf16[2,512,128], index: 12, kind: input, shape index: {}]
  %s13 = inlined_call_operand.vmem [shape: f32[2,1,128], index: 13, kind: input, shape index: {}]
  %s14 = inlined_call_operand.vmem [shape: f32[1,128], index: 14, kind: input, shape index: {}]
  %s15 = inlined_call_operand.vmem [shape: f32[1,128], index: 15, kind: input, shape index: {}]
  %s16 = inlined_call_operand.vmem [shape: bf16[128,256], index: 16, kind: input, shape index: {}]
  %s17 = inlined_call_operand.hbm [shape: f32[32,256], index: 17, kind: output, shape index: {}]
  %s18 = sld [smem:[#allocation0]]
  $region86: #{gpt_lm_forward.1} parent=0
    _
  %s20 = ssub.s32 1, %s18
  %s21 = scalar_select 0, %s20, %s18
  $region1: #{gpt_lm_forward.1} parent=0
    #allocation2 [shape = 'u8[196608]{0}', space=vmem, size = 0x30000, scoped, tag = 'input window, operand 4, single buffered']
    #allocation3 [shape = 's32[1]{0}', space=sflag, size = 0x4, scoped, tag = 'scoped memory for gpt_lm_forward.1']
    #allocation4 [shape = 's32[1]{0}', space=sflag, size = 0x4, scoped, tag = 'scoped memory for gpt_lm_forward.1']
    #allocation5 [shape = 'u8[262144]{0}', space=vmem, size = 0x40000, scoped, tag = 'input window, operand 12, single buffered']
    #allocation6 [shape = 's32[1]{0}', space=sflag, size = 0x4, scoped, tag = 'scoped memory for gpt_lm_forward.1']
    #allocation7 [shape = 'u8[32768]{0}', space=vmem, size = 0x8000, scoped, tag = 'output window, operand 0, single buffered']
    %22 = vsyncpa [#allocation3], 0
    %23 = vsyncpa [#allocation6], 0
    %24 = vsyncpa [#allocation4], 0
    // Predicated region
    $region2: #{gpt_lm_forward.1} parent=1 // pred_check
      _
    $region3: #{gpt_lm_forward.1} parent=1 // pred_check_branch
      %26 = sbr.rel (0) target = $region5
    $region4: #{gpt_lm_forward.1} parent=1 // pred_region
      _
    $region5: #{gpt_lm_forward.1} parent=1 // pred_fallthru
      _
    // Predicated region
    $region6: #{gpt_lm_forward.1} parent=1 // pred_check
      _
    $region7: #{gpt_lm_forward.1} parent=1 // pred_check_branch
      %28 = sbr.rel (0) target = $region9
    $region8: #{gpt_lm_forward.1} parent=1 // pred_region
      _
    $region9: #{gpt_lm_forward.1} parent=1 // pred_fallthru
      _
    // Predicated region
    $region10: #{gpt_lm_forward.1} parent=1 // pred_check
      _
    $region11: #{gpt_lm_forward.1} parent=1 // pred_check_branch
      %30 = sbr.rel (0) target = $region13
    $region12: #{gpt_lm_forward.1} parent=1 // pred_region
      _
    $region13: #{gpt_lm_forward.1} parent=1 // pred_fallthru
      _
    // Predicated region
    $region14: #{gpt_lm_forward.1} parent=1 // pred_check
      _
    $region15: #{gpt_lm_forward.1} parent=1 // pred_check_branch
      %32 = sbr.rel (0) target = $region17
    $region16: #{gpt_lm_forward.1} parent=1 // pred_region
      _
    $region17: #{gpt_lm_forward.1} parent=1 // pred_fallthru
      _
    // Predicated region
    $region18: #{gpt_lm_forward.1} parent=1 // pred_check
      _
    $region19: #{gpt_lm_forward.1} parent=1 // pred_check_branch
      %34 = sbr.rel (0) target = $region21
    $region20: #{gpt_lm_forward.1} parent=1 // pred_region
      %s36 = ssub.s32 6144, 6144
      %37 = vsyncadd [#allocation3], %s36
      %s38 = sshll.u32 [#allocation2], 4
      %s39 = int_to_ptr.vmem [resolvable:$true] %s38
      %44 = dma.hbm_to_vmem [thread:$0]  %s4, 6144, %s39, [#allocation3], 192, 192, 12
    $region21: #{gpt_lm_forward.1} parent=1 // pred_fallthru
      _
    // Predicated region
    $region22: #{gpt_lm_forward.1} parent=1 // pred_check
      _
    $region23: #{gpt_lm_forward.1} parent=1 // pred_check_branch
      %46 = sbr.rel (0) target = $region25
    $region24: #{gpt_lm_forward.1} parent=1 // pred_region
      _
    $region25: #{gpt_lm_forward.1} parent=1 // pred_fallthru
      _
    // Predicated region
    $region26: #{gpt_lm_forward.1} parent=1 // pred_check
      _
    $region27: #{gpt_lm_forward.1} parent=1 // pred_check_branch
      %48 = sbr.rel (0) target = $region29
    $region28: #{gpt_lm_forward.1} parent=1 // pred_region
      _
    $region29: #{gpt_lm_forward.1} parent=1 // pred_fallthru
      _
    // Predicated region
    $region30: #{gpt_lm_forward.1} parent=1 // pred_check
      _
    $region31: #{gpt_lm_forward.1} parent=1 // pred_check_branch
      %50 = sbr.rel (0) target = $region33
    $region32: #{gpt_lm_forward.1} parent=1 // pred_region
      _
    $region33: #{gpt_lm_forward.1} parent=1 // pred_fallthru
      _
    // Predicated region
    $region34: #{gpt_lm_forward.1} parent=1 // pred_check
      _
    $region35: #{gpt_lm_forward.1} parent=1 // pred_check_branch
      %52 = sbr.rel (0) target = $region37
    $region36: #{gpt_lm_forward.1} parent=1 // pred_region
      _
    $region37: #{gpt_lm_forward.1} parent=1 // pred_fallthru
      _
    // Predicated region
    $region38: #{gpt_lm_forward.1} parent=1 // pred_check
      _
    $region39: #{gpt_lm_forward.1} parent=1 // pred_check_branch
      %54 = sbr.rel (0) target = $region41
    $region40: #{gpt_lm_forward.1} parent=1 // pred_region
      _
    $region41: #{gpt_lm_forward.1} parent=1 // pred_fallthru
      _
    // Predicated region
    $region42: #{gpt_lm_forward.1} parent=1 // pred_check
      _
    $region43: #{gpt_lm_forward.1} parent=1 // pred_check_branch
      %56 = sbr.rel (0) target = $region45
    $region44: #{gpt_lm_forward.1} parent=1 // pred_region
      _
    $region45: #{gpt_lm_forward.1} parent=1 // pred_fallthru
      _
    // Predicated region
    $region46: #{gpt_lm_forward.1} parent=1 // pred_check
      _
    $region47: #{gpt_lm_forward.1} parent=1 // pred_check_branch
      %58 = sbr.rel (0) target = $region49
    $region48: #{gpt_lm_forward.1} parent=1 // pred_region
      _
    $region49: #{gpt_lm_forward.1} parent=1 // pred_fallthru
      _
    // Predicated region
    $region50: #{gpt_lm_forward.1} parent=1 // pred_check
      _
    $region51: #{gpt_lm_forward.1} parent=1 // pred_check_branch
      %60 = sbr.rel (0) target = $region53
    $region52: #{gpt_lm_forward.1} parent=1 // pred_region
      %s62 = ssub.s32 8192, 8192
      %63 = vsyncadd [#allocation6], %s62
      %s64 = sshll.u32 [#allocation5], 4
      %s65 = int_to_ptr.vmem [resolvable:$true] %s64
      %70 = dma.hbm_to_vmem [thread:$0]  %s12, 8192, %s65, [#allocation6], 64, 64, 4
    $region53: #{gpt_lm_forward.1} parent=1 // pred_fallthru
      _
    // Predicated region
    $region54: #{gpt_lm_forward.1} parent=1 // pred_check
      _
    $region55: #{gpt_lm_forward.1} parent=1 // pred_check_branch
      %72 = sbr.rel (0) target = $region57
    $region56: #{gpt_lm_forward.1} parent=1 // pred_region
      _
    $region57: #{gpt_lm_forward.1} parent=1 // pred_fallthru
      _
    // Predicated region
    $region58: #{gpt_lm_forward.1} parent=1 // pred_check
      _
    $region59: #{gpt_lm_forward.1} parent=1 // pred_check_branch
      %74 = sbr.rel (0) target = $region61
    $region60: #{gpt_lm_forward.1} parent=1 // pred_region
      _
    $region61: #{gpt_lm_forward.1} parent=1 // pred_fallthru
      _
    // Predicated region
    $region62: #{gpt_lm_forward.1} parent=1 // pred_check
      _
    $region63: #{gpt_lm_forward.1} parent=1 // pred_check_branch
      %76 = sbr.rel (0) target = $region65
    $region64: #{gpt_lm_forward.1} parent=1 // pred_region
      _
    $region65: #{gpt_lm_forward.1} parent=1 // pred_fallthru
      _
    // Predicated region
    $region66: #{gpt_lm_forward.1} parent=1 // pred_check
      _
    $region67: #{gpt_lm_forward.1} parent=1 // pred_check_branch
      %78 = sbr.rel (0) target = $region69
    $region68: #{gpt_lm_forward.1} parent=1 // pred_region
      _
    $region69: #{gpt_lm_forward.1} parent=1 // pred_fallthru
      _
    // Predicated region
    $region70: #{gpt_lm_forward.1} parent=1 // pred_check
      _
    $region71: #{gpt_lm_forward.1} parent=1 // pred_check_branch
      %80 = sbr.rel (0) target = $region73
    $region72: #{gpt_lm_forward.1} parent=1 // pred_region
      %81 = dma.done [#allocation3], 6144
    $region73: #{gpt_lm_forward.1} parent=1 // pred_fallthru
      _
    // Predicated region
    $region74: #{gpt_lm_forward.1} parent=1 // pred_check
      _
    $region75: #{gpt_lm_forward.1} parent=1 // pred_check_branch
      %83 = sbr.rel (0) target = $region77
    $region76: #{gpt_lm_forward.1} parent=1 // pred_region
      %84 = dma.done [#allocation6], 8192
    $region77: #{gpt_lm_forward.1} parent=1 // pred_fallthru
      _
    %v86 = vld [vmem:[%s0] sm:$0xff]
    %v87 = vld [vmem:[%s0 + $0x8] sm:$0xff]
    %v88 = vld [vmem:[%s0 + $0x10] sm:$0xff]
    %v89 = vld [vmem:[%s0 + $0x18] sm:$0xff]
    %v90 = vld [vmem:[%s1] sm:$0xff]
    %v91 = vld [vmem:[%s1 + $0x8] sm:$0xff]
    %v92 = vld [vmem:[%s1 + $0x10] sm:$0xff]
    %v93 = vld [vmem:[%s1 + $0x18] sm:$0xff]
    %v94 = vld [vmem:[%s2] sm:$0x1]
    %v95 = vld [vmem:[%s3] sm:$0x1]
    %96 = vadd.xlane.f32.xlu0 %v86
    %v97 = vpop.xlane.xlu0 %96
    %98 = vadd.xlane.f32.xlu0 %v87
    %v99 = vpop.xlane.xlu0 %98
    %100 = vadd.xlane.f32.xlu0 %v88
    %v101 = vpop.xlane.xlu0 %100
    %102 = vadd.xlane.f32.xlu0 %v89
    %v103 = vpop.xlane.xlu0 %102
    %v104 = vrcp.pop 128.0
    %v105 = vmul.f32 %v97, %v104
    %v106 = vmul.f32 %v99, %v104
    %v107 = vmul.f32 %v101, %v104
    %v108 = vmul.f32 %v103, %v104
    %v109 = vsub.f32 %v86, %v105
    %v110 = vsub.f32 %v87, %v106
    %v111 = vsub.f32 %v88, %v107
    %v112 = vsub.f32 %v89, %v108
    %v113 = vmul.f32 %v109, %v109
    %v114 = vmul.f32 %v110, %v110
    %v115 = vmul.f32 %v111, %v111
    %v116 = vmul.f32 %v112, %v112
    %117 = vadd.xlane.f32.xlu0 %v113
    %v118 = vpop.xlane.xlu0 %117
    %119 = vadd.xlane.f32.xlu0 %v114
    %v120 = vpop.xlane.xlu0 %119
    %121 = vadd.xlane.f32.xlu0 %v115
    %v122 = vpop.xlane.xlu0 %121
    %123 = vadd.xlane.f32.xlu0 %v116
    %v124 = vpop.xlane.xlu0 %123
    %v125 = vmul.f32 %v118, %v104
    %v126 = vmul.f32 %v120, %v104
    %v127 = vmul.f32 %v122, %v104
    %v128 = vmul.f32 %v124, %v104
    %v129 = vadd.f32 %v125, 1e-05
    %v130 = vadd.f32 %v126, 1e-05
    %v131 = vadd.f32 %v127, 1e-05
    %v132 = vadd.f32 %v128, 1e-05
    %v133 = vrsqrt.pop %v129
    %v134 = vrsqrt.pop %v130
    %v135 = vrsqrt.pop %v131
    %v136 = vrsqrt.pop %v132
    %v137 = vmul.f32 %v109, %v133
    %v138 = vmul.f32 %v110, %v134
    %v139 = vmul.f32 %v111, %v135
    %v140 = vmul.f32 %v112, %v136
    %v142 = vlaneseq
    %v143 = vshrl.u32 %v142, 7
    %v144 = vsub.s32 0, %v143
    %v145 = vrot.slane %v94, %v144
    %v147 = vmul.f32 %v137, %v145
    %v148 = vmul.f32 %v138, %v145
    %v149 = vmul.f32 %v139, %v145
    %v150 = vmul.f32 %v140, %v145
    %v152 = vlaneseq
    %v153 = vshrl.u32 %v152, 7
    %v154 = vsub.s32 0, %v153
    %v155 = vrot.slane %v95, %v154
    %v157 = vadd.f32 %v147, %v155
    %v158 = vadd.f32 %v148, %v155
    %v159 = vadd.f32 %v149, %v155
    %v160 = vadd.f32 %v150, %v155
    %v161 = vpack.c.bf16 %v158, %v157
    %v162 = vpack.c.bf16 %v160, %v159
    %v163 = vld [vmem:[#allocation2] sm:$0xff]
    %v164 = vld [vmem:[#allocation2 + $0x8] sm:$0xf]
    %v165 = vld [vmem:[#allocation2 + $0xc] sm:$0xff]
    %v166 = vld [vmem:[#allocation2 + $0x14] sm:$0xf]
    %v167 = vld [vmem:[#allocation2 + $0x18] sm:$0xff]
    %v168 = vld [vmem:[#allocation2 + $0x20] sm:$0xf]
    %v169 = vld [vmem:[#allocation2 + $0x24] sm:$0xff]
    %v170 = vld [vmem:[#allocation2 + $0x2c] sm:$0xf]
    %v171 = vld [vmem:[#allocation2 + $0x30] sm:$0xff]
    %v172 = vld [vmem:[#allocation2 + $0x38] sm:$0xf]
    %v173 = vld [vmem:[#allocation2 + $0x3c] sm:$0xff]
    %v174 = vld [vmem:[#allocation2 + $0x44] sm:$0xf]
    %v175 = vld [vmem:[#allocation2 + $0x48] sm:$0xff]
    %v176 = vld [vmem:[#allocation2 + $0x50] sm:$0xf]
    %v177 = vld [vmem:[#allocation2 + $0x54] sm:$0xff]
    %v178 = vld [vmem:[#allocation2 + $0x5c] sm:$0xf]
    %v179 = vld [vmem:[#allocation2 + $0x60] sm:$0xff]
    %v180 = vld [vmem:[#allocation2 + $0x68] sm:$0xf]
    %v181 = vld [vmem:[#allocation2 + $0x6c] sm:$0xff]
    %v182 = vld [vmem:[#allocation2 + $0x74] sm:$0xf]
    %v183 = vld [vmem:[#allocation2 + $0x78] sm:$0xff]
    %v184 = vld [vmem:[#allocation2 + $0x80] sm:$0xf]
    %v185 = vld [vmem:[#allocation2 + $0x84] sm:$0xff]
    %v186 = vld [vmem:[#allocation2 + $0x8c] sm:$0xf]
    %v187 = vld [vmem:[#allocation2 + $0x90] sm:$0xff]
    %v188 = vld [vmem:[#allocation2 + $0x98] sm:$0xf]
    %v189 = vld [vmem:[#allocation2 + $0x9c] sm:$0xff]
    %v190 = vld [vmem:[#allocation2 + $0xa4] sm:$0xf]
    %v191 = vld [vmem:[#allocation2 + $0xa8] sm:$0xff]
    %v192 = vld [vmem:[#allocation2 + $0xb0] sm:$0xf]
    %v193 = vld [vmem:[#allocation2 + $0xb4] sm:$0xff]
    %v194 = vld [vmem:[#allocation2 + $0xbc] sm:$0xf]
    %v195 = vld [vmem:[%s5] sm:$0x7]
    %v197 = vlaneseq
    %v198 = vshrl.u32 %v197, 7
    %v199 = vsub.s32 0, %v198
    %v200 = vrot.slane %v195, %v199
    %v201 = vlaneseq
    %v202 = vshrl.u32 %v201, 7
    %v203 = vsub.s32 1, %v202
    %v204 = vrot.slane %v195, %v203
    %v205 = vlaneseq
    %v206 = vshrl.u32 %v205, 7
    %v207 = vsub.s32 2, %v206
    %v208 = vrot.slane %v195, %v207
    %v244 = vunpack.c.l.b16 %v163
    %v245 = vunpack.c.h.b16 %v163
    %v246 = vunpack.c.l.b16 %v164
    %v247 = vunpack.c.l.b16 %v165
    %v248 = vunpack.c.h.b16 %v165
    %v249 = vunpack.c.l.b16 %v166
    %v250 = vunpack.c.l.b16 %v167
    %v251 = vunpack.c.h.b16 %v167
    %v252 = vunpack.c.l.b16 %v168
    %v253 = vunpack.c.l.b16 %v169
    %v254 = vunpack.c.h.b16 %v169
    %v255 = vunpack.c.l.b16 %v170
    %v256 = vunpack.c.l.b16 %v171
    %v257 = vunpack.c.h.b16 %v171
    %v258 = vunpack.c.l.b16 %v172
    %v259 = vunpack.c.l.b16 %v173
    %v260 = vunpack.c.h.b16 %v173
    %v261 = vunpack.c.l.b16 %v174
    %v262 = vunpack.c.l.b16 %v175
    %v263 = vunpack.c.h.b16 %v175
    %v264 = vunpack.c.l.b16 %v176
    %v265 = vunpack.c.l.b16 %v177
    %v266 = vunpack.c.h.b16 %v177
    %v267 = vunpack.c.l.b16 %v178
    %v268 = vunpack.c.l.b16 %v179
    %v269 = vunpack.c.h.b16 %v179
    %v270 = vunpack.c.l.b16 %v180
    %v271 = vunpack.c.l.b16 %v181
    %v272 = vunpack.c.h.b16 %v181
    %v273 = vunpack.c.l.b16 %v182
    %v274 = vunpack.c.l.b16 %v183
    %v275 = vunpack.c.h.b16 %v183
    %v276 = vunpack.c.l.b16 %v184
    %v277 = vunpack.c.l.b16 %v185
    %v278 = vunpack.c.h.b16 %v185
    %v279 = vunpack.c.l.b16 %v186
    %v280 = vunpack.c.l.b16 %v187
    %v281 = vunpack.c.h.b16 %v187
    %v282 = vunpack.c.l.b16 %v188
    %v283 = vunpack.c.l.b16 %v189
    %v284 = vunpack.c.h.b16 %v189
    %v285 = vunpack.c.l.b16 %v190
    %v286 = vunpack.c.l.b16 %v191
    %v287 = vunpack.c.h.b16 %v191
    %v288 = vunpack.c.l.b16 %v192
    %v289 = vunpack.c.l.b16 %v193
    %v290 = vunpack.c.h.b16 %v193
    %v291 = vunpack.c.l.b16 %v194
    %v292 = vpack.c.b16 %v247, %v244
    %v293 = vpack.c.b16 %v248, %v245
    %v294 = vpack.c.b16 %v249, %v246
    %v295 = vpack.c.b16 %v253, %v250
    %v296 = vpack.c.b16 %v254, %v251
    %v297 = vpack.c.b16 %v255, %v252
    %v298 = vpack.c.b16 %v259, %v256
    %v299 = vpack.c.b16 %v260, %v257
    %v300 = vpack.c.b16 %v261, %v258
    %v301 = vpack.c.b16 %v265, %v262
    %v302 = vpack.c.b16 %v266, %v263
    %v303 = vpack.c.b16 %v267, %v264
    %v304 = vpack.c.b16 %v271, %v268
    %v305 = vpack.c.b16 %v272, %v269
    %v306 = vpack.c.b16 %v273, %v270
    %v307 = vpack.c.b16 %v277, %v274
    %v308 = vpack.c.b16 %v278, %v275
    %v309 = vpack.c.b16 %v279, %v276
    %v310 = vpack.c.b16 %v283, %v280
    %v311 = vpack.c.b16 %v284, %v281
    %v312 = vpack.c.b16 %v285, %v282
    %v313 = vpack.c.b16 %v289, %v286
    %v314 = vpack.c.b16 %v290, %v287
    %v315 = vpack.c.b16 %v291, %v288
    %340 = vmatprep.subr.bf16.mxu0 %v293
    %341 = vmatpush1.bf16.msra.mxu0 %v292
    %342 = vmatprep.subr.bf16.mxu0 %v296
    %343 = vmatpush1.bf16.msra.mxu0 %v295
    %344 = vmatprep.subr.bf16.mxu0 %v299
    %345 = vmatpush1.bf16.msra.mxu0 %v298
    %346 = vmatprep.subr.bf16.mxu0 %v302
    %347 = vmatpush1.bf16.msra.mxu0 %v301
    %348 = vmatprep.subr.bf16.mxu0 %v305
    %349 = vmatpush1.bf16.msra.mxu0 %v304
    %350 = vmatprep.subr.bf16.mxu0 %v308
    %351 = vmatpush1.bf16.msra.mxu0 %v307
    %352 = vmatprep.subr.bf16.mxu0 %v311
    %353 = vmatpush1.bf16.msra.mxu0 %v310
    %354 = vmatprep.subr.bf16.mxu0 %v314
    %355 = vmatpush1.bf16.msra.mxu0 %v313
    %356 = vmatprep.subr.bf16.mxu0 0
    %357 = vmatpush1.bf16.msra.mxu0 0
    %358 = vmatprep.subr.bf16.mxu0 0
    %359 = vmatpush1.bf16.msra.mxu0 0
    %360 = vmatprep.subr.bf16.mxu0 0
    %361 = vmatpush1.bf16.msra.mxu0 0
    %362 = vmatprep.subr.bf16.mxu0 0
    %363 = vmatpush1.bf16.msra.mxu0 0
    %364 = vmatprep.subr.bf16.mxu0 0
    %365 = vmatpush1.bf16.msra.mxu0 0
    %366 = vmatprep.subr.bf16.mxu0 0
    %367 = vmatpush1.bf16.msra.mxu0 0
    %368 = vmatprep.subr.bf16.mxu0 0
    %369 = vmatpush1.bf16.msra.mxu0 0
    %370 = vmatprep.subr.bf16.mxu0 0
    %371 = vmatpush1.bf16.msra.mxu0 0
    %372 = vmatprep.mubr.bf16.mxu0 0
    %373 = vmatmul.mubr.bf16.gmra.mrb[0].mxu0 %v161
    %v374 = vpop.f32.mrb[0].mxu0
    %v375 = vadd.f32 %v200, %v374
    %v376 = vpop.f32.mrb[0].mxu0
    %v377 = vadd.f32 %v204, %v376
    %v378 = vpop.f32.mrb[0].mxu0
    %v379 = vadd.f32 %v200, %v378
    %v380 = vpop.f32.mrb[0].mxu0
    %v381 = vadd.f32 %v204, %v380
    %382 = vmatprep.mubr.bf16.mxu0 0
    %383 = vmatmul.mubr.bf16.gmra.mrb[0].mxu0 %v162
    %v384 = vpop.f32.mrb[0].mxu0
    %v385 = vadd.f32 %v200, %v384
    %v386 = vpop.f32.mrb[0].mxu0
    %v387 = vadd.f32 %v204, %v386
    %v388 = vpop.f32.mrb[0].mxu0
    %v389 = vadd.f32 %v200, %v388
    %v390 = vpop.f32.mrb[0].mxu0
    %v391 = vadd.f32 %v204, %v390
    %392 = vdwg.mxu0
    %393 = vmatprep.subr.bf16.mxu0 0
    %394 = vmatpush1.bf16.msra.mxu0 %v294
    %395 = vmatprep.subr.bf16.mxu0 0
    %396 = vmatpush1.bf16.msra.mxu0 %v297
    %397 = vmatprep.subr.bf16.mxu0 0
    %398 = vmatpush1.bf16.msra.mxu0 %v300
    %399 = vmatprep.subr.bf16.mxu0 0
    %400 = vmatpush1.bf16.msra.mxu0 %v303
    %401 = vmatprep.subr.bf16.mxu0 0
    %402 = vmatpush1.bf16.msra.mxu0 %v306
    %403 = vmatprep.subr.bf16.mxu0 0
    %404 = vmatpush1.bf16.msra.mxu0 %v309
    %405 = vmatprep.subr.bf16.mxu0 0
    %406 = vmatpush1.bf16.msra.mxu0 %v312
    %407 = vmatprep.subr.bf16.mxu0 0
    %408 = vmatpush1.bf16.msra.mxu0 %v315
    %409 = vmatprep.subr.bf16.mxu0 0
    %410 = vmatpush1.bf16.msra.mxu0 0
    %411 = vmatprep.subr.bf16.mxu0 0
    %412 = vmatpush1.bf16.msra.mxu0 0
    %413 = vmatprep.subr.bf16.mxu0 0
    %414 = vmatpush1.bf16.msra.mxu0 0
    %415 = vmatprep.subr.bf16.mxu0 0
    %416 = vmatpush1.bf16.msra.mxu0 0
    %417 = vmatprep.subr.bf16.mxu0 0
    %418 = vmatpush1.bf16.msra.mxu0 0
    %419 = vmatprep.subr.bf16.mxu0 0
    %420 = vmatpush1.bf16.msra.mxu0 0
    %421 = vmatprep.subr.bf16.mxu0 0
    %422 = vmatpush1.bf16.msra.mxu0 0
    %423 = vmatprep.subr.bf16.mxu0 0
    %424 = vmatpush1.bf16.msra.mxu0 0
    %425 = vmatprep.mubr.bf16.mxu0 0
    %426 = vmatmul.mubr.bf16.gmra.mrb[0].mxu0 %v161
    %v427 = vpop.f32.mrb[0].mxu0
    %v428 = vadd.f32 %v208, %v427
    %v429 = vpop.f32.mrb[0].mxu0
    %v430 = vpop.f32.mrb[0].mxu0
    %v431 = vadd.f32 %v208, %v430
    %v432 = vpop.f32.mrb[0].mxu0
    %433 = vmatprep.mubr.bf16.mxu0 0
    %434 = vmatmul.mubr.bf16.gmra.mrb[0].mxu0 %v162
    %v435 = vpop.f32.mrb[0].mxu0
    %v436 = vadd.f32 %v208, %v435
    %v437 = vpop.f32.mrb[0].mxu0
    %v438 = vpop.f32.mrb[0].mxu0
    %v439 = vadd.f32 %v208, %v438
    %v440 = vpop.f32.mrb[0].mxu0
    %441 = vdwg.mxu0
    %v442 = vpack.c.bf16 %v379, %v375
    %v443 = vpack.c.bf16 %v389, %v385
    %v444 = vpack.c.bf16 %v381, %v377
    %v445 = vpack.c.bf16 %v391, %v387
    %vm446 = vcmask 261120
    %v448 = vsel %vm446, %v442, 0
    %v451 = vsel %vm446, %v443, 0
    %v454 = vsel %vm446, %v444, 0
    %v457 = vsel %vm446, %v445, 0
    %459 = vmatprep.subr.bf16.mxu0 0
    %460 = vmatpush1.bf16.xpose.msra.mxu0 %v454
    %461 = vmatprep.subr.bf16.mxu0 0
    %462 = vmatpush1.bf16.xpose.msra.mxu0 %v457
    %463 = vmatprep.subr.bf16.mxu0 0
    %464 = vmatpush1.bf16.xpose.msra.mxu0 0
    %465 = vmatprep.subr.bf16.mxu0 0
    %466 = vmatpush1.bf16.xpose.msra.mxu0 0
    %467 = vmatprep.subr.bf16.mxu0 0
    %468 = vmatpush1.bf16.xpose.msra.mxu0 0
    %469 = vmatprep.subr.bf16.mxu0 0
    %470 = vmatpush1.bf16.xpose.msra.mxu0 0
    %471 = vmatprep.subr.bf16.mxu0 0
    %472 = vmatpush1.bf16.xpose.msra.mxu0 0
    %473 = vmatprep.subr.bf16.mxu0 0
    %474 = vmatpush1.bf16.xpose.msra.mxu0 0
    %475 = vmatprep.subr.bf16.mxu0 0
    %476 = vmatpush1.bf16.xpose.msra.mxu0 0
    %477 = vmatprep.subr.bf16.mxu0 0
    %478 = vmatpush1.bf16.xpose.msra.mxu0 0
    %479 = vmatprep.subr.bf16.mxu0 0
    %480 = vmatpush1.bf16.xpose.msra.mxu0 0
    %481 = vmatprep.subr.bf16.mxu0 0
    %482 = vmatpush1.bf16.xpose.msra.mxu0 0
    %483 = vmatprep.subr.bf16.mxu0 0
    %484 = vmatpush1.bf16.xpose.msra.mxu0 0
    %485 = vmatprep.subr.bf16.mxu0 0
    %486 = vmatpush1.bf16.xpose.msra.mxu0 0
    %487 = vmatprep.subr.bf16.mxu0 0
    %488 = vmatpush1.bf16.xpose.msra.mxu0 0
    %489 = vmatprep.subr.bf16.mxu0 0
    %490 = vmatpush1.bf16.xpose.msra.mxu0 0
    %491 = vmatprep.mubr.bf16.mxu0 0
    %492 = vmatmul.mubr.bf16.gmra.mrb[0].mxu0 %v448
    %v493 = vpop.f32.mrb[0].mxu0
    %v494 = vadd.f32 0.0, %v493
    %v495 = vpop.f32.mrb[0].mxu0
    %v496 = vpop.f32.mrb[0].mxu0
    %v497 = vadd.f32 0.0, %v496
    %v498 = vpop.f32.mrb[0].mxu0
    %499 = vmatprep.mubr.bf16.mxu0 0
    %500 = vmatmul.mubr.bf16.gmra.mrb[0].mxu0 %v451
    %v501 = vpop.f32.mrb[0].mxu0
    %v502 = vadd.f32 0.0, %v501
    %v503 = vpop.f32.mrb[0].mxu0
    %v504 = vpop.f32.mrb[0].mxu0
    %v505 = vadd.f32 0.0, %v504
    %v506 = vpop.f32.mrb[0].mxu0
    %507 = vdwg.mxu0
    %510 = vrot.lane.b32.xlu0 %v442, 96
    %v511 = vpop.permute.xlu0 %510
    %512 = vrot.lane.b32.xlu0 %v443, 96
    %v513 = vpop.permute.xlu0 %512
    %516 = vrot.lane.b32.xlu0 %v444, 96
    %v517 = vpop.permute.xlu0 %516
    %518 = vrot.lane.b32.xlu0 %v445, 96
    %v519 = vpop.permute.xlu0 %518
    %v521 = vsel %vm446, %v511, 0
    %v524 = vsel %vm446, %v513, 0
    %v527 = vsel %vm446, %v517, 0
    %v530 = vsel %vm446, %v519, 0
    %532 = vmatprep.subr.bf16.mxu0 0
    %533 = vmatpush1.bf16.xpose.msra.mxu0 %v527
    %534 = vmatprep.subr.bf16.mxu0 0
    %535 = vmatpush1.bf16.xpose.msra.mxu0 %v530
    %536 = vmatprep.subr.bf16.mxu0 0
    %537 = vmatpush1.bf16.xpose.msra.mxu0 0
    %538 = vmatprep.subr.bf16.mxu0 0
    %539 = vmatpush1.bf16.xpose.msra.mxu0 0
    %540 = vmatprep.subr.bf16.mxu0 0
    %541 = vmatpush1.bf16.xpose.msra.mxu0 0
    %542 = vmatprep.subr.bf16.mxu0 0
    %543 = vmatpush1.bf16.xpose.msra.mxu0 0
    %544 = vmatprep.subr.bf16.mxu0 0
    %545 = vmatpush1.bf16.xpose.msra.mxu0 0
    %546 = vmatprep.subr.bf16.mxu0 0
    %547 = vmatpush1.bf16.xpose.msra.mxu0 0
    %548 = vmatprep.subr.bf16.mxu0 0
    %549 = vmatpush1.bf16.xpose.msra.mxu0 0
    %550 = vmatprep.subr.bf16.mxu0 0
    %551 = vmatpush1.bf16.xpose.msra.mxu0 0
    %552 = vmatprep.subr.bf16.mxu0 0
    %553 = vmatpush1.bf16.xpose.msra.mxu0 0
    %554 = vmatprep.subr.bf16.mxu0 0
    %555 = vmatpush1.bf16.xpose.msra.mxu0 0
    %556 = vmatprep.subr.bf16.mxu0 0
    %557 = vmatpush1.bf16.xpose.msra.mxu0 0
    %558 = vmatprep.subr.bf16.mxu0 0
    %559 = vmatpush1.bf16.xpose.msra.mxu0 0
    %560 = vmatprep.subr.bf16.mxu0 0
    %561 = vmatpush1.bf16.xpose.msra.mxu0 0
    %562 = vmatprep.subr.bf16.mxu0 0
    %563 = vmatpush1.bf16.xpose.msra.mxu0 0
    %564 = vmatprep.mubr.bf16.mxu0 0
    %565 = vmatmul.mubr.bf16.gmra.mrb[0].mxu0 %v521
    %v566 = vpop.f32.mrb[0].mxu0
    %v567 = vadd.f32 0.0, %v566
    %v568 = vpop.f32.mrb[0].mxu0
    %v569 = vpop.f32.mrb[0].mxu0
    %v570 = vadd.f32 0.0, %v569
    %v571 = vpop.f32.mrb[0].mxu0
    %572 = vmatprep.mubr.bf16.mxu0 0
    %573 = vmatmul.mubr.bf16.gmra.mrb[0].mxu0 %v524
    %v574 = vpop.f32.mrb[0].mxu0
    %v575 = vadd.f32 0.0, %v574
    %v576 = vpop.f32.mrb[0].mxu0
    %v577 = vpop.f32.mrb[0].mxu0
    %v578 = vadd.f32 0.0, %v577
    %v579 = vpop.f32.mrb[0].mxu0
    %580 = vdwg.mxu0
    %581 = vrot.lane.b32.xlu0 %v442, 64
    %v582 = vpop.permute.xlu0 %581
    %583 = vrot.lane.b32.xlu0 %v443, 64
    %v584 = vpop.permute.xlu0 %583
    %585 = vrot.lane.b32.xlu0 %v444, 64
    %v586 = vpop.permute.xlu0 %585
    %587 = vrot.lane.b32.xlu0 %v445, 64
    %v588 = vpop.permute.xlu0 %587
    %v590 = vsel %vm446, %v582, 0
    %v593 = vsel %vm446, %v584, 0
    %v596 = vsel %vm446, %v586, 0
    %v599 = vsel %vm446, %v588, 0
    %601 = vmatprep.subr.bf16.mxu0 0
    %602 = vmatpush1.bf16.xpose.msra.mxu0 %v596
    %603 = vmatprep.subr.bf16.mxu0 0
    %604 = vmatpush1.bf16.xpose.msra.mxu0 %v599
    %605 = vmatprep.subr.bf16.mxu0 0
    %606 = vmatpush1.bf16.xpose.msra.mxu0 0
    %607 = vmatprep.subr.bf16.mxu0 0
    %608 = vmatpush1.bf16.xpose.msra.mxu0 0
    %609 = vmatprep.subr.bf16.mxu0 0
    %610 = vmatpush1.bf16.xpose.msra.mxu0 0
    %611 = vmatprep.subr.bf16.mxu0 0
    %612 = vmatpush1.bf16.xpose.msra.mxu0 0
    %613 = vmatprep.subr.bf16.mxu0 0
    %614 = vmatpush1.bf16.xpose.msra.mxu0 0
    %615 = vmatprep.subr.bf16.mxu0 0
    %616 = vmatpush1.bf16.xpose.msra.mxu0 0
    %617 = vmatprep.subr.bf16.mxu0 0
    %618 = vmatpush1.bf16.xpose.msra.mxu0 0
    %619 = vmatprep.subr.bf16.mxu0 0
    %620 = vmatpush1.bf16.xpose.msra.mxu0 0
    %621 = vmatprep.subr.bf16.mxu0 0
    %622 = vmatpush1.bf16.xpose.msra.mxu0 0
    %623 = vmatprep.subr.bf16.mxu0 0
    %624 = vmatpush1.bf16.xpose.msra.mxu0 0
    %625 = vmatprep.subr.bf16.mxu0 0
    %626 = vmatpush1.bf16.xpose.msra.mxu0 0
    %627 = vmatprep.subr.bf16.mxu0 0
    %628 = vmatpush1.bf16.xpose.msra.mxu0 0
    %629 = vmatprep.subr.bf16.mxu0 0
    %630 = vmatpush1.bf16.xpose.msra.mxu0 0
    %631 = vmatprep.subr.bf16.mxu0 0
    %632 = vmatpush1.bf16.xpose.msra.mxu0 0
    %633 = vmatprep.mubr.bf16.mxu0 0
    %634 = vmatmul.mubr.bf16.gmra.mrb[0].mxu0 %v590
    %v635 = vpop.f32.mrb[0].mxu0
    %v636 = vadd.f32 0.0, %v635
    %v637 = vpop.f32.mrb[0].mxu0
    %v638 = vpop.f32.mrb[0].mxu0
    %v639 = vadd.f32 0.0, %v638
    %v640 = vpop.f32.mrb[0].mxu0
    %641 = vmatprep.mubr.bf16.mxu0 0
    %642 = vmatmul.mubr.bf16.gmra.mrb[0].mxu0 %v593
    %v643 = vpop.f32.mrb[0].mxu0
    %v644 = vadd.f32 0.0, %v643
    %v645 = vpop.f32.mrb[0].mxu0
    %v646 = vpop.f32.mrb[0].mxu0
    %v647 = vadd.f32 0.0, %v646
    %v648 = vpop.f32.mrb[0].mxu0
    %649 = vdwg.mxu0
    %650 = vrot.lane.b32.xlu0 %v442, 32
    %v651 = vpop.permute.xlu0 %650
    %652 = vrot.lane.b32.xlu0 %v443, 32
    %v653 = vpop.permute.xlu0 %652
    %654 = vrot.lane.b32.xlu0 %v444, 32
    %v655 = vpop.permute.xlu0 %654
    %656 = vrot.lane.b32.xlu0 %v445, 32
    %v657 = vpop.permute.xlu0 %656
    %v659 = vsel %vm446, %v651, 0
    %v662 = vsel %vm446, %v653, 0
    %v665 = vsel %vm446, %v655, 0
    %v668 = vsel %vm446, %v657, 0
    %670 = vmatprep.subr.bf16.mxu0 0
    %671 = vmatpush1.bf16.xpose.msra.mxu0 %v665
    %672 = vmatprep.subr.bf16.mxu0 0
    %673 = vmatpush1.bf16.xpose.msra.mxu0 %v668
    %674 = vmatprep.subr.bf16.mxu0 0
    %675 = vmatpush1.bf16.xpose.msra.mxu0 0
    %676 = vmatprep.subr.bf16.mxu0 0
    %677 = vmatpush1.bf16.xpose.msra.mxu0 0
    %678 = vmatprep.subr.bf16.mxu0 0
    %679 = vmatpush1.bf16.xpose.msra.mxu0 0
    %680 = vmatprep.subr.bf16.mxu0 0
    %681 = vmatpush1.bf16.xpose.msra.mxu0 0
    %682 = vmatprep.subr.bf16.mxu0 0
    %683 = vmatpush1.bf16.xpose.msra.mxu0 0
    %684 = vmatprep.subr.bf16.mxu0 0
    %685 = vmatpush1.bf16.xpose.msra.mxu0 0
    %686 = vmatprep.subr.bf16.mxu0 0
    %687 = vmatpush1.bf16.xpose.msra.mxu0 0
    %688 = vmatprep.subr.bf16.mxu0 0
    %689 = vmatpush1.bf16.xpose.msra.mxu0 0
    %690 = vmatprep.subr.bf16.mxu0 0
    %691 = vmatpush1.bf16.xpose.msra.mxu0 0
    %692 = vmatprep.subr.bf16.mxu0 0
    %693 = vmatpush1.bf16.xpose.msra.mxu0 0
    %694 = vmatprep.subr.bf16.mxu0 0
    %695 = vmatpush1.bf16.xpose.msra.mxu0 0
    %696 = vmatprep.subr.bf16.mxu0 0
    %697 = vmatpush1.bf16.xpose.msra.mxu0 0
    %698 = vmatprep.subr.bf16.mxu0 0
    %699 = vmatpush1.bf16.xpose.msra.mxu0 0
    %700 = vmatprep.subr.bf16.mxu0 0
    %701 = vmatpush1.bf16.xpose.msra.mxu0 0
    %702 = vmatprep.mubr.bf16.mxu0 0
    %703 = vmatmul.mubr.bf16.gmra.mrb[0].mxu0 %v659
    %v704 = vpop.f32.mrb[0].mxu0
    %v705 = vadd.f32 0.0, %v704
    %v706 = vpop.f32.mrb[0].mxu0
    %v707 = vpop.f32.mrb[0].mxu0
    %v708 = vadd.f32 0.0, %v707
    %v709 = vpop.f32.mrb[0].mxu0
    %710 = vmatprep.mubr.bf16.mxu0 0
    %711 = vmatmul.mubr.bf16.gmra.mrb[0].mxu0 %v662
    %v712 = vpop.f32.mrb[0].mxu0
    %v713 = vadd.f32 0.0, %v712
    %v714 = vpop.f32.mrb[0].mxu0
    %v715 = vpop.f32.mrb[0].mxu0
    %v716 = vadd.f32 0.0, %v715
    %v717 = vpop.f32.mrb[0].mxu0
    %718 = vdwg.mxu0
    %723 = vrot.lane.b32.xlu0 %v567, 32
    %v724 = vpop.permute.xlu0 %723
    %725 = vrot.lane.b32.xlu0 %v570, 32
    %v726 = vpop.permute.xlu0 %725
    %727 = vrot.lane.b32.xlu0 %v575, 32
    %v728 = vpop.permute.xlu0 %727
    %729 = vrot.lane.b32.xlu0 %v578, 32
    %v730 = vpop.permute.xlu0 %729
    %739 = vrot.lane.b32.xlu0 %v636, 64
    %v740 = vpop.permute.xlu0 %739
    %741 = vrot.lane.b32.xlu0 %v639, 64
    %v742 = vpop.permute.xlu0 %741
    %743 = vrot.lane.b32.xlu0 %v644, 64
    %v744 = vpop.permute.xlu0 %743
    %745 = vrot.lane.b32.xlu0 %v647, 64
    %v746 = vpop.permute.xlu0 %745
    %755 = vrot.lane.b32.xlu0 %v705, 96
    %v756 = vpop.permute.xlu0 %755
    %757 = vrot.lane.b32.xlu0 %v708, 96
    %v758 = vpop.permute.xlu0 %757
    %759 = vrot.lane.b32.xlu0 %v713, 96
    %v760 = vpop.permute.xlu0 %759
    %761 = vrot.lane.b32.xlu0 %v716, 96
    %v762 = vpop.permute.xlu0 %761
    %v767 = vsel %vm446, %v494, %v724
    %v768 = vsel %vm446, %v497, %v726
    %v769 = vsel %vm446, %v502, %v728
    %v770 = vsel %vm446, %v505, %v730
    %vm771 = vcmask 523264
    %v772 = vsel %vm771, %v767, %v740
    %v773 = vsel %vm771, %v768, %v742
    %v774 = vsel %vm771, %v769, %v744
    %v775 = vsel %vm771, %v770, %v746
    %vm776 = vcmask 785408
    %v777 = vsel %vm776, %v772, %v756
    %v778 = vsel %vm776, %v773, %v758
    %v779 = vsel %vm776, %v774, %v760
    %v780 = vsel %vm776, %v775, %v762
    %v781 = vmul.f32 %v777, 0.17677669
    %v782 = vmul.f32 %v778, 0.17677669
    %v783 = vmul.f32 %v779, 0.17677669
    %v784 = vmul.f32 %v780, 0.17677669
    %v785 = vadd.f32 %v781, %v90
    %v786 = vadd.f32 %v782, %v91
    %v787 = vadd.f32 %v783, %v92
    %v788 = vadd.f32 %v784, %v93
    %v789 = vsel %vm446, %v785, -inf
    %790 = vmax.xlane.f32.xlu0 %v789
    %v791 = vpop.xlane.xlu0 %790
    %v792 = vsel %vm446, %v786, -inf
    %793 = vmax.xlane.f32.xlu0 %v792
    %v794 = vpop.xlane.xlu0 %793
    %v795 = vsel %vm446, %v787, -inf
    %796 = vmax.xlane.f32.xlu0 %v795
    %v797 = vpop.xlane.xlu0 %796
    %v798 = vsel %vm446, %v788, -inf
    %799 = vmax.xlane.f32.xlu0 %v798
    %v800 = vpop.xlane.xlu0 %799
    %vm801 = vcmask 523520
    %v802 = vsel %vm801, %v785, -inf
    %803 = vmax.xlane.f32.xlu0 %v802
    %v804 = vpop.xlane.xlu0 %803
    %v805 = vsel %vm801, %v786, -inf
    %806 = vmax.xlane.f32.xlu0 %v805
    %v807 = vpop.xlane.xlu0 %806
    %v808 = vsel %vm801, %v787, -inf
    %809 = vmax.xlane.f32.xlu0 %v808
    %v810 = vpop.xlane.xlu0 %809
    %v811 = vsel %vm801, %v788, -inf
    %812 = vmax.xlane.f32.xlu0 %v811
    %v813 = vpop.xlane.xlu0 %812
    %vm814 = vcmask 785920
    %v815 = vsel %vm814, %v785, -inf
    %816 = vmax.xlane.f32.xlu0 %v815
    %v817 = vpop.xlane.xlu0 %816
    %v818 = vsel %vm814, %v786, -inf
    %819 = vmax.xlane.f32.xlu0 %v818
    %v820 = vpop.xlane.xlu0 %819
    %v821 = vsel %vm814, %v787, -inf
    %822 = vmax.xlane.f32.xlu0 %v821
    %v823 = vpop.xlane.xlu0 %822
    %v824 = vsel %vm814, %v788, -inf
    %825 = vmax.xlane.f32.xlu0 %v824
    %v826 = vpop.xlane.xlu0 %825
    %vm827 = vcmask 1048320
    %v828 = vsel %vm827, %v785, -inf
    %829 = vmax.xlane.f32.xlu0 %v828
    %v830 = vpop.xlane.xlu0 %829
    %v831 = vsel %vm827, %v786, -inf
    %832 = vmax.xlane.f32.xlu0 %v831
    %v833 = vpop.xlane.xlu0 %832
    %v834 = vsel %vm827, %v787, -inf
    %835 = vmax.xlane.f32.xlu0 %v834
    %v836 = vpop.xlane.xlu0 %835
    %v837 = vsel %vm827, %v788, -inf
    %838 = vmax.xlane.f32.xlu0 %v837
    %v839 = vpop.xlane.xlu0 %838
    %v840 = vsel %vm446, %v791, %v804
    %v841 = vsel %vm446, %v794, %v807
    %v842 = vsel %vm446, %v797, %v810
    %v843 = vsel %vm446, %v800, %v813
    %v844 = vsel %vm771, %v840, %v817
    %v845 = vsel %vm771, %v841, %v820
    %v846 = vsel %vm771, %v842, %v823
    %v847 = vsel %vm771, %v843, %v826
    %v848 = vsel %vm776, %v844, %v830
    %v849 = vsel %vm776, %v845, %v833
    %v850 = vsel %vm776, %v846, %v836
    %v851 = vsel %vm776, %v847, %v839
    %v852 = vsub.f32 %v785, %v848
    %v853 = vsub.f32 %v786, %v849
    %v854 = vsub.f32 %v787, %v850
    %v855 = vsub.f32 %v788, %v851
    %v856 = vmul.f32 %v852, 1.442695
    %v857 = vpow.pop %v856
    %v858 = vmul.f32 %v853, 1.442695
    %v859 = vpow.pop %v858
    %v860 = vmul.f32 %v854, 1.442695
    %v861 = vpow.pop %v860
    %v862 = vmul.f32 %v855, 1.442695
    %v863 = vpow.pop %v862
    %v864 = vsel %vm446, %v857, 0.0
    %865 = vadd.xlane.f32.xlu0 %v864
    %v866 = vpop.xlane.xlu0 %865
    %v867 = vsel %vm446, %v859, 0.0
    %868 = vadd.xlane.f32.xlu0 %v867
    %v869 = vpop.xlane.xlu0 %868
    %v870 = vsel %vm446, %v861, 0.0
    %871 = vadd.xlane.f32.xlu0 %v870
    %v872 = vpop.xlane.xlu0 %871
    %v873 = vsel %vm446, %v863, 0.0
    %874 = vadd.xlane.f32.xlu0 %v873
    %v875 = vpop.xlane.xlu0 %874
    %880 = vrot.lane.b32.xlu0 %v857, 96
    %v881 = vpop.permute.xlu0 %880
    %882 = vrot.lane.b32.xlu0 %v859, 96
    %v883 = vpop.permute.xlu0 %882
    %884 = vrot.lane.b32.xlu0 %v861, 96
    %v885 = vpop.permute.xlu0 %884
    %886 = vrot.lane.b32.xlu0 %v863, 96
    %v887 = vpop.permute.xlu0 %886
    %v892 = vsel %vm446, %v881, 0.0
    %893 = vadd.xlane.f32.xlu0 %v892
    %v894 = vpop.xlane.xlu0 %893
    %v895 = vsel %vm446, %v883, 0.0
    %896 = vadd.xlane.f32.xlu0 %v895
    %v897 = vpop.xlane.xlu0 %896
    %v898 = vsel %vm446, %v885, 0.0
    %899 = vadd.xlane.f32.xlu0 %v898
    %v900 = vpop.xlane.xlu0 %899
    %v901 = vsel %vm446, %v887, 0.0
    %902 = vadd.xlane.f32.xlu0 %v901
    %v903 = vpop.xlane.xlu0 %902
    %904 = vrot.lane.b32.xlu0 %v857, 64
    %v905 = vpop.permute.xlu0 %904
    %906 = vrot.lane.b32.xlu0 %v859, 64
    %v907 = vpop.permute.xlu0 %906
    %908 = vrot.lane.b32.xlu0 %v861, 64
    %v909 = vpop.permute.xlu0 %908
    %910 = vrot.lane.b32.xlu0 %v863, 64
    %v911 = vpop.permute.xlu0 %910
    %v916 = vsel %vm446, %v905, 0.0
    %917 = vadd.xlane.f32.xlu0 %v916
    %v918 = vpop.xlane.xlu0 %917
    %v919 = vsel %vm446, %v907, 0.0
    %920 = vadd.xlane.f32.xlu0 %v919
    %v921 = vpop.xlane.xlu0 %920
    %v922 = vsel %vm446, %v909, 0.0
    %923 = vadd.xlane.f32.xlu0 %v922
    %v924 = vpop.xlane.xlu0 %923
    %v925 = vsel %vm446, %v911, 0.0
    %926 = vadd.xlane.f32.xlu0 %v925
    %v927 = vpop.xlane.xlu0 %926
    %928 = vrot.lane.b32.xlu0 %v857, 32
    %v929 = vpop.permute.xlu0 %928
    %930 = vrot.lane.b32.xlu0 %v859, 32
    %v931 = vpop.permute.xlu0 %930
    %932 = vrot.lane.b32.xlu0 %v861, 32
    %v933 = vpop.permute.xlu0 %932
    %934 = vrot.lane.b32.xlu0 %v863, 32
    %v935 = vpop.permute.xlu0 %934
    %v940 = vsel %vm446, %v929, 0.0
    %941 = vadd.xlane.f32.xlu0 %v940
    %v942 = vpop.xlane.xlu0 %941
    %v943 = vsel %vm446, %v931, 0.0
    %944 = vadd.xlane.f32.xlu0 %v943
    %v945 = vpop.xlane.xlu0 %944
    %v946 = vsel %vm446, %v933, 0.0
    %947 = vadd.xlane.f32.xlu0 %v946
    %v948 = vpop.xlane.xlu0 %947
    %v949 = vsel %vm446, %v935, 0.0
    %950 = vadd.xlane.f32.xlu0 %v949
    %v951 = vpop.xlane.xlu0 %950
    %v952 = vsel %vm446, %v866, %v894
    %v953 = vsel %vm446, %v869, %v897
    %v954 = vsel %vm446, %v872, %v900
    %v955 = vsel %vm446, %v875, %v903
    %v956 = vsel %vm771, %v952, %v918
    %v957 = vsel %vm771, %v953, %v921
    %v958 = vsel %vm771, %v954, %v924
    %v959 = vsel %vm771, %v955, %v927
    %v960 = vsel %vm776, %v956, %v942
    %v961 = vsel %vm776, %v957, %v945
    %v962 = vsel %vm776, %v958, %v948
    %v963 = vsel %vm776, %v959, %v951
    %v964 = vrcp.pop %v960
    %v965 = vrcp.pop %v961
    %v966 = vrcp.pop %v962
    %v967 = vrcp.pop %v963
    %v968 = vmul.f32 %v857, %v964
    %v969 = vmul.f32 %v859, %v965
    %v970 = vmul.f32 %v861, %v966
    %v971 = vmul.f32 %v863, %v967
    %v972 = vpack.c.bf16 %v969, %v968
    %v973 = vpack.c.bf16 %v971, %v970
    %v974 = vpack.c.bf16 %v431, %v428
    %v975 = vpack.c.bf16 %v439, %v436
    %v977 = vsel %vm446, %v972, 0
    %v980 = vsel %vm446, %v973, 0
    %982 = vmatprep.subr.bf16.mxu0 0
    %983 = vmatpush1.bf16.msra.mxu0 %v974
    %984 = vmatprep.subr.bf16.mxu0 0
    %985 = vmatpush1.bf16.msra.mxu0 %v975
    %986 = vmatprep.subr.bf16.mxu0 0
    %987 = vmatpush1.bf16.msra.mxu0 0
    %988 = vmatprep.subr.bf16.mxu0 0
    %989 = vmatpush1.bf16.msra.mxu0 0
    %990 = vmatprep.subr.bf16.mxu0 0
    %991 = vmatpush1.bf16.msra.mxu0 0
    %992 = vmatprep.subr.bf16.mxu0 0
    %993 = vmatpush1.bf16.msra.mxu0 0
    %994 = vmatprep.subr.bf16.mxu0 0
    %995 = vmatpush1.bf16.msra.mxu0 0
    %996 = vmatprep.subr.bf16.mxu0 0
    %997 = vmatpush1.bf16.msra.mxu0 0
    %998 = vmatprep.subr.bf16.mxu0 0
    %999 = vmatpush1.bf16.msra.mxu0 0
    %1000 = vmatprep.subr.bf16.mxu0 0
    %1001 = vmatpush1.bf16.msra.mxu0 0
    %1002 = vmatprep.subr.bf16.mxu0 0
    %1003 = vmatpush1.bf16.msra.mxu0 0
    %1004 = vmatprep.subr.bf16.mxu0 0
    %1005 = vmatpush1.bf16.msra.mxu0 0
    %1006 = vmatprep.subr.bf16.mxu0 0
    %1007 = vmatpush1.bf16.msra.mxu0 0
    %1008 = vmatprep.subr.bf16.mxu0 0
    %1009 = vmatpush1.bf16.msra.mxu0 0
    %1010 = vmatprep.subr.bf16.mxu0 0
    %1011 = vmatpush1.bf16.msra.mxu0 0
    %1012 = vmatprep.subr.bf16.mxu0 0
    %1013 = vmatpush1.bf16.msra.mxu0 0
    %1014 = vmatprep.mubr.bf16.mxu0 0
    %1015 = vmatmul.mubr.bf16.gmra.mrb[0].mxu0 %v977
    %v1016 = vpop.f32.mrb[0].mxu0
    %v1017 = vadd.f32 0.0, %v1016
    %v1018 = vpop.f32.mrb[0].mxu0
    %v1019 = vpop.f32.mrb[0].mxu0
    %v1020 = vadd.f32 0.0, %v1019
    %v1021 = vpop.f32.mrb[0].mxu0
    %1022 = vmatprep.mubr.bf16.mxu0 0
    %1023 = vmatmul.mubr.bf16.gmra.mrb[0].mxu0 %v980
    %v1024 = vpop.f32.mrb[0].mxu0
    %v1025 = vadd.f32 0.0, %v1024
    %v1026 = vpop.f32.mrb[0].mxu0
    %v1027 = vpop.f32.mrb[0].mxu0
    %v1028 = vadd.f32 0.0, %v1027
    %v1029 = vpop.f32.mrb[0].mxu0
    %1030 = vdwg.mxu0
    %1033 = vrot.lane.b32.xlu0 %v972, 96
    %v1034 = vpop.permute.xlu0 %1033
    %1035 = vrot.lane.b32.xlu0 %v973, 96
    %v1036 = vpop.permute.xlu0 %1035
    %1039 = vrot.lane.b32.xlu0 %v974, 96
    %v1040 = vpop.permute.xlu0 %1039
    %1041 = vrot.lane.b32.xlu0 %v975, 96
    %v1042 = vpop.permute.xlu0 %1041
    %v1046 = vsel %vm446, %v1034, 0
    %v1049 = vsel %vm446, %v1036, 0
    %1051 = vmatprep.subr.bf16.mxu0 0
    %1052 = vmatpush1.bf16.msra.mxu0 %v1040
    %1053 = vmatprep.subr.bf16.mxu0 0
    %1054 = vmatpush1.bf16.msra.mxu0 %v1042
    %1055 = vmatprep.subr.bf16.mxu0 0
    %1056 = vmatpush1.bf16.msra.mxu0 0
    %1057 = vmatprep.subr.bf16.mxu0 0
    %1058 = vmatpush1.bf16.msra.mxu0 0
    %1059 = vmatprep.subr.bf16.mxu0 0
    %1060 = vmatpush1.bf16.msra.mxu0 0
    %1061 = vmatprep.subr.bf16.mxu0 0
    %1062 = vmatpush1.bf16.msra.mxu0 0
    %1063 = vmatprep.subr.bf16.mxu0 0
    %1064 = vmatpush1.bf16.msra.mxu0 0
    %1065 = vmatprep.subr.bf16.mxu0 0
    %1066 = vmatpush1.bf16.msra.mxu0 0
    %1067 = vmatprep.subr.bf16.mxu0 0
    %1068 = vmatpush1.bf16.msra.mxu0 0
    %1069 = vmatprep.subr.bf16.mxu0 0
    %1070 = vmatpush1.bf16.msra.mxu0 0
    %1071 = vmatprep.subr.bf16.mxu0 0
    %1072 = vmatpush1.bf16.msra.mxu0 0
    %1073 = vmatprep.subr.bf16.mxu0 0
    %1074 = vmatpush1.bf16.msra.mxu0 0
    %1075 = vmatprep.subr.bf16.mxu0 0
    %1076 = vmatpush1.bf16.msra.mxu0 0
    %1077 = vmatprep.subr.bf16.mxu0 0
    %1078 = vmatpush1.bf16.msra.mxu0 0
    %1079 = vmatprep.subr.bf16.mxu0 0
    %1080 = vmatpush1.bf16.msra.mxu0 0
    %1081 = vmatprep.subr.bf16.mxu0 0
    %1082 = vmatpush1.bf16.msra.mxu0 0
    %1083 = vmatprep.mubr.bf16.mxu0 0
    %1084 = vmatmul.mubr.bf16.gmra.mrb[0].mxu0 %v1046
    %v1085 = vpop.f32.mrb[0].mxu0
    %v1086 = vadd.f32 0.0, %v1085
    %v1087 = vpop.f32.mrb[0].mxu0
    %v1088 = vpop.f32.mrb[0].mxu0
    %v1089 = vadd.f32 0.0, %v1088
    %v1090 = vpop.f32.mrb[0].mxu0
    %1091 = vmatprep.mubr.bf16.mxu0 0
    %1092 = vmatmul.mubr.bf16.gmra.mrb[0].mxu0 %v1049
    %v1093 = vpop.f32.mrb[0].mxu0
    %v1094 = vadd.f32 0.0, %v1093
    %v1095 = vpop.f32.mrb[0].mxu0
    %v1096 = vpop.f32.mrb[0].mxu0
    %v1097 = vadd.f32 0.0, %v1096
    %v1098 = vpop.f32.mrb[0].mxu0
    %1099 = vdwg.mxu0
    %1100 = vrot.lane.b32.xlu0 %v972, 64
    %v1101 = vpop.permute.xlu0 %1100
    %1102 = vrot.lane.b32.xlu0 %v973, 64
    %v1103 = vpop.permute.xlu0 %1102
    %1104 = vrot.lane.b32.xlu0 %v974, 64
    %v1105 = vpop.permute.xlu0 %1104
    %1106 = vrot.lane.b32.xlu0 %v975, 64
    %v1107 = vpop.permute.xlu0 %1106
    %v1111 = vsel %vm446, %v1101, 0
    %v1114 = vsel %vm446, %v1103, 0
    %1116 = vmatprep.subr.bf16.mxu0 0
    %1117 = vmatpush1.bf16.msra.mxu0 %v1105
    %1118 = vmatprep.subr.bf16.mxu0 0
    %1119 = vmatpush1.bf16.msra.mxu0 %v1107
    %1120 = vmatprep.subr.bf16.mxu0 0
    %1121 = vmatpush1.bf16.msra.mxu0 0
    %1122 = vmatprep.subr.bf16.mxu0 0
    %1123 = vmatpush1.bf16.msra.mxu0 0
    %1124 = vmatprep.subr.bf16.mxu0 0
    %1125 = vmatpush1.bf16.msra.mxu0 0
    %1126 = vmatprep.subr.bf16.mxu0 0
    %1127 = vmatpush1.bf16.msra.mxu0 0
    %1128 = vmatprep.subr.bf16.mxu0 0
    %1129 = vmatpush1.bf16.msra.mxu0 0
    %1130 = vmatprep.subr.bf16.mxu0 0
    %1131 = vmatpush1.bf16.msra.mxu0 0
    %1132 = vmatprep.subr.bf16.mxu0 0
    %1133 = vmatpush1.bf16.msra.mxu0 0
    %1134 = vmatprep.subr.bf16.mxu0 0
    %1135 = vmatpush1.bf16.msra.mxu0 0
    %1136 = vmatprep.subr.bf16.mxu0 0
    %1137 = vmatpush1.bf16.msra.mxu0 0
    %1138 = vmatprep.subr.bf16.mxu0 0
    %1139 = vmatpush1.bf16.msra.mxu0 0
    %1140 = vmatprep.subr.bf16.mxu0 0
    %1141 = vmatpush1.bf16.msra.mxu0 0
    %1142 = vmatprep.subr.bf16.mxu0 0
    %1143 = vmatpush1.bf16.msra.mxu0 0
    %1144 = vmatprep.subr.bf16.mxu0 0
    %1145 = vmatpush1.bf16.msra.mxu0 0
    %1146 = vmatprep.subr.bf16.mxu0 0
    %1147 = vmatpush1.bf16.msra.mxu0 0
    %1148 = vmatprep.mubr.bf16.mxu0 0
    %1149 = vmatmul.mubr.bf16.gmra.mrb[0].mxu0 %v1111
    %v1150 = vpop.f32.mrb[0].mxu0
    %v1151 = vadd.f32 0.0, %v1150
    %v1152 = vpop.f32.mrb[0].mxu0
    %v1153 = vpop.f32.mrb[0].mxu0
    %v1154 = vadd.f32 0.0, %v1153
    %v1155 = vpop.f32.mrb[0].mxu0
    %1156 = vmatprep.mubr.bf16.mxu0 0
    %1157 = vmatmul.mubr.bf16.gmra.mrb[0].mxu0 %v1114
    %v1158 = vpop.f32.mrb[0].mxu0
    %v1159 = vadd.f32 0.0, %v1158
    %v1160 = vpop.f32.mrb[0].mxu0
    %v1161 = vpop.f32.mrb[0].mxu0
    %v1162 = vadd.f32 0.0, %v1161
    %v1163 = vpop.f32.mrb[0].mxu0
    %1164 = vdwg.mxu0
    %1165 = vrot.lane.b32.xlu0 %v972, 32
    %v1166 = vpop.permute.xlu0 %1165
    %1167 = vrot.lane.b32.xlu0 %v973, 32
    %v1168 = vpop.permute.xlu0 %1167
    %1169 = vrot.lane.b32.xlu0 %v974, 32
    %v1170 = vpop.permute.xlu0 %1169
    %1171 = vrot.lane.b32.xlu0 %v975, 32
    %v1172 = vpop.permute.xlu0 %1171
    %v1176 = vsel %vm446, %v1166, 0
    %v1179 = vsel %vm446, %v1168, 0
    %1181 = vmatprep.subr.bf16.mxu0 0
    %1182 = vmatpush1.bf16.msra.mxu0 %v1170
    %1183 = vmatprep.subr.bf16.mxu0 0
    %1184 = vmatpush1.bf16.msra.mxu0 %v1172
    %1185 = vmatprep.subr.bf16.mxu0 0
    %1186 = vmatpush1.bf16.msra.mxu0 0
    %1187 = vmatprep.subr.bf16.mxu0 0
    %1188 = vmatpush1.bf16.msra.mxu0 0
    %1189 = vmatprep.subr.bf16.mxu0 0
    %1190 = vmatpush1.bf16.msra.mxu0 0
    %1191 = vmatprep.subr.bf16.mxu0 0
    %1192 = vmatpush1.bf16.msra.mxu0 0
    %1193 = vmatprep.subr.bf16.mxu0 0
    %1194 = vmatpush1.bf16.msra.mxu0 0
    %1195 = vmatprep.subr.bf16.mxu0 0
    %1196 = vmatpush1.bf16.msra.mxu0 0
    %1197 = vmatprep.subr.bf16.mxu0 0
    %1198 = vmatpush1.bf16.msra.mxu0 0
    %1199 = vmatprep.subr.bf16.mxu0 0
    %1200 = vmatpush1.bf16.msra.mxu0 0
    %1201 = vmatprep.subr.bf16.mxu0 0
    %1202 = vmatpush1.bf16.msra.mxu0 0
    %1203 = vmatprep.subr.bf16.mxu0 0
    %1204 = vmatpush1.bf16.msra.mxu0 0
    %1205 = vmatprep.subr.bf16.mxu0 0
    %1206 = vmatpush1.bf16.msra.mxu0 0
    %1207 = vmatprep.subr.bf16.mxu0 0
    %1208 = vmatpush1.bf16.msra.mxu0 0
    %1209 = vmatprep.subr.bf16.mxu0 0
    %1210 = vmatpush1.bf16.msra.mxu0 0
    %1211 = vmatprep.subr.bf16.mxu0 0
    %1212 = vmatpush1.bf16.msra.mxu0 0
    %1213 = vmatprep.mubr.bf16.mxu0 0
    %1214 = vmatmul.mubr.bf16.gmra.mrb[0].mxu0 %v1176
    %v1215 = vpop.f32.mrb[0].mxu0
    %v1216 = vadd.f32 0.0, %v1215
    %v1217 = vpop.f32.mrb[0].mxu0
    %v1218 = vpop.f32.mrb[0].mxu0
    %v1219 = vadd.f32 0.0, %v1218
    %v1220 = vpop.f32.mrb[0].mxu0
    %1221 = vmatprep.mubr.bf16.mxu0 0
    %1222 = vmatmul.mubr.bf16.gmra.mrb[0].mxu0 %v1179
    %v1223 = vpop.f32.mrb[0].mxu0
    %v1224 = vadd.f32 0.0, %v1223
    %v1225 = vpop.f32.mrb[0].mxu0
    %v1226 = vpop.f32.mrb[0].mxu0
    %v1227 = vadd.f32 0.0, %v1226
    %v1228 = vpop.f32.mrb[0].mxu0
    %1229 = vdwg.mxu0
    %1234 = vrot.lane.b32.xlu0 %v1086, 32
    %v1235 = vpop.permute.xlu0 %1234
    %1236 = vrot.lane.b32.xlu0 %v1089, 32
    %v1237 = vpop.permute.xlu0 %1236
    %1238 = vrot.lane.b32.xlu0 %v1094, 32
    %v1239 = vpop.permute.xlu0 %1238
    %1240 = vrot.lane.b32.xlu0 %v1097, 32
    %v1241 = vpop.permute.xlu0 %1240
    %1250 = vrot.lane.b32.xlu0 %v1151, 64
    %v1251 = vpop.permute.xlu0 %1250
    %1252 = vrot.lane.b32.xlu0 %v1154, 64
    %v1253 = vpop.permute.xlu0 %1252
    %1254 = vrot.lane.b32.xlu0 %v1159, 64
    %v1255 = vpop.permute.xlu0 %1254
    %1256 = vrot.lane.b32.xlu0 %v1162, 64
    %v1257 = vpop.permute.xlu0 %1256
    %1266 = vrot.lane.b32.xlu0 %v1216, 96
    %v1267 = vpop.permute.xlu0 %1266
    %1268 = vrot.lane.b32.xlu0 %v1219, 96
    %v1269 = vpop.permute.xlu0 %1268
    %1270 = vrot.lane.b32.xlu0 %v1224, 96
    %v1271 = vpop.permute.xlu0 %1270
    %1272 = vrot.lane.b32.xlu0 %v1227, 96
    %v1273 = vpop.permute.xlu0 %1272
    %v1278 = vsel %vm446, %v1017, %v1235
    %v1279 = vsel %vm446, %v1020, %v1237
    %v1280 = vsel %vm446, %v1025, %v1239
    %v1281 = vsel %vm446, %v1028, %v1241
    %v1282 = vsel %vm771, %v1278, %v1251
    %v1283 = vsel %vm771, %v1279, %v1253
    %v1284 = vsel %vm771, %v1280, %v1255
    %v1285 = vsel %vm771, %v1281, %v1257
    %v1286 = vsel %vm776, %v1282, %v1267
    %v1287 = vsel %vm776, %v1283, %v1269
    %v1288 = vsel %vm776, %v1284, %v1271
    %v1289 = vsel %vm776, %v1285, %v1273
    %v1290 = vpack.c.bf16 %v1287, %v1286
    %v1291 = vpack.c.bf16 %v1289, %v1288
    %v1292 = vld [vmem:[%s6] sm:$0xf]
    %v1293 = vld [vmem:[%s6 + $0x4] sm:$0xf]
    %v1294 = vld [vmem:[%s6 + $0x8] sm:$0xf]
    %v1295 = vld [vmem:[%s6 + $0xc] sm:$0xf]
    %v1296 = vld [vmem:[%s6 + $0x10] sm:$0xf]
    %v1297 = vld [vmem:[%s6 + $0x14] sm:$0xf]
    %v1298 = vld [vmem:[%s6 + $0x18] sm:$0xf]
    %v1299 = vld [vmem:[%s6 + $0x1c] sm:$0xf]
    %v1300 = vld [vmem:[%s6 + $0x20] sm:$0xf]
    %v1301 = vld [vmem:[%s6 + $0x24] sm:$0xf]
    %v1302 = vld [vmem:[%s6 + $0x28] sm:$0xf]
    %v1303 = vld [vmem:[%s6 + $0x2c] sm:$0xf]
    %v1304 = vld [vmem:[%s6 + $0x30] sm:$0xf]
    %v1305 = vld [vmem:[%s6 + $0x34] sm:$0xf]
    %v1306 = vld [vmem:[%s6 + $0x38] sm:$0xf]
    %v1307 = vld [vmem:[%s6 + $0x3c] sm:$0xf]
    %v1308 = vld [vmem:[%s7] sm:$0x1]
    %v1310 = vlaneseq
    %v1311 = vshrl.u32 %v1310, 7
    %v1312 = vsub.s32 0, %v1311
    %v1313 = vrot.slane %v1308, %v1312
    %v1331 = vunpack.c.l.b16 %v1292
    %v1332 = vunpack.c.l.b16 %v1293
    %v1333 = vunpack.c.l.b16 %v1294
    %v1334 = vunpack.c.l.b16 %v1295
    %v1335 = vunpack.c.l.b16 %v1296
    %v1336 = vunpack.c.l.b16 %v1297
    %v1337 = vunpack.c.l.b16 %v1298
    %v1338 = vunpack.c.l.b16 %v1299
    %v1339 = vunpack.c.l.b16 %v1300
    %v1340 = vunpack.c.l.b16 %v1301
    %v1341 = vunpack.c.l.b16 %v1302
    %v1342 = vunpack.c.l.b16 %v1303
    %v1343 = vunpack.c.l.b16 %v1304
    %v1344 = vunpack.c.l.b16 %v1305
    %v1345 = vunpack.c.l.b16 %v1306
    %v1346 = vunpack.c.l.b16 %v1307
    %v1347 = vpack.c.b16 %v1332, %v1331
    %v1348 = vpack.c.b16 %v1334, %v1333
    %v1349 = vpack.c.b16 %v1336, %v1335
    %v1350 = vpack.c.b16 %v1338, %v1337
    %v1351 = vpack.c.b16 %v1340, %v1339
    %v1352 = vpack.c.b16 %v1342, %v1341
    %v1353 = vpack.c.b16 %v1344, %v1343
    %v1354 = vpack.c.b16 %v1346, %v1345
    %1363 = vmatprep.subr.bf16.mxu0 0
    %1364 = vmatpush1.bf16.msra.mxu0 %v1347
    %1365 = vmatprep.subr.bf16.mxu0 0
    %1366 = vmatpush1.bf16.msra.mxu0 %v1348
    %1367 = vmatprep.subr.bf16.mxu0 0
    %1368 = vmatpush1.bf16.msra.mxu0 %v1349
    %1369 = vmatprep.subr.bf16.mxu0 0
    %1370 = vmatpush1.bf16.msra.mxu0 %v1350
    %1371 = vmatprep.subr.bf16.mxu0 0
    %1372 = vmatpush1.bf16.msra.mxu0 %v1351
    %1373 = vmatprep.subr.bf16.mxu0 0
    %1374 = vmatpush1.bf16.msra.mxu0 %v1352
    %1375 = vmatprep.subr.bf16.mxu0 0
    %1376 = vmatpush1.bf16.msra.mxu0 %v1353
    %1377 = vmatprep.subr.bf16.mxu0 0
    %1378 = vmatpush1.bf16.msra.mxu0 %v1354
    %1379 = vmatprep.subr.bf16.mxu0 0
    %1380 = vmatpush1.bf16.msra.mxu0 0
    %1381 = vmatprep.subr.bf16.mxu0 0
    %1382 = vmatpush1.bf16.msra.mxu0 0
    %1383 = vmatprep.subr.bf16.mxu0 0
    %1384 = vmatpush1.bf16.msra.mxu0 0
    %1385 = vmatprep.subr.bf16.mxu0 0
    %1386 = vmatpush1.bf16.msra.mxu0 0
    %1387 = vmatprep.subr.bf16.mxu0 0
    %1388 = vmatpush1.bf16.msra.mxu0 0
    %1389 = vmatprep.subr.bf16.mxu0 0
    %1390 = vmatpush1.bf16.msra.mxu0 0
    %1391 = vmatprep.subr.bf16.mxu0 0
    %1392 = vmatpush1.bf16.msra.mxu0 0
    %1393 = vmatprep.subr.bf16.mxu0 0
    %1394 = vmatpush1.bf16.msra.mxu0 0
    %1395 = vmatprep.mubr.bf16.mxu0 0
    %1396 = vmatmul.mubr.bf16.gmra.mrb[0].mxu0 %v1290
    %v1397 = vpop.f32.mrb[0].mxu0
    %v1398 = vadd.f32 %v1313, %v1397
    %v1399 = vpop.f32.mrb[0].mxu0
    %v1400 = vpop.f32.mrb[0].mxu0
    %v1401 = vadd.f32 %v1313, %v1400
    %v1402 = vpop.f32.mrb[0].mxu0
    %1403 = vmatprep.mubr.bf16.mxu0 0
    %1404 = vmatmul.mubr.bf16.gmra.mrb[0].mxu0 %v1291
    %v1405 = vpop.f32.mrb[0].mxu0
    %v1406 = vadd.f32 %v1313, %v1405
    %v1407 = vpop.f32.mrb[0].mxu0
    %v1408 = vpop.f32.mrb[0].mxu0
    %v1409 = vadd.f32 %v1313, %v1408
    %v1410 = vpop.f32.mrb[0].mxu0
    %1411 = vdwg.mxu0
    %v1412 = vadd.f32 %v86, %v1398
    %v1413 = vadd.f32 %v87, %v1401
    %v1414 = vadd.f32 %v88, %v1406
    %v1415 = vadd.f32 %v89, %v1409
    %v1416 = vld [vmem:[%s8] sm:$0x1]
    %v1417 = vld [vmem:[%s9] sm:$0x1]
    %1418 = vadd.xlane.f32.xlu0 %v1412
    %v1419 = vpop.xlane.xlu0 %1418
    %1420 = vadd.xlane.f32.xlu0 %v1413
    %v1421 = vpop.xlane.xlu0 %1420
    %1422 = vadd.xlane.f32.xlu0 %v1414
    %v1423 = vpop.xlane.xlu0 %1422
    %1424 = vadd.xlane.f32.xlu0 %v1415
    %v1425 = vpop.xlane.xlu0 %1424
    %v1426 = vmul.f32 %v1419, %v104
    %v1427 = vmul.f32 %v1421, %v104
    %v1428 = vmul.f32 %v1423, %v104
    %v1429 = vmul.f32 %v1425, %v104
    %v1430 = vsub.f32 %v1412, %v1426
    %v1431 = vsub.f32 %v1413, %v1427
    %v1432 = vsub.f32 %v1414, %v1428
    %v1433 = vsub.f32 %v1415, %v1429
    %v1434 = vmul.f32 %v1430, %v1430
    %v1435 = vmul.f32 %v1431, %v1431
    %v1436 = vmul.f32 %v1432, %v1432
    %v1437 = vmul.f32 %v1433, %v1433
    %1438 = vadd.xlane.f32.xlu0 %v1434
    %v1439 = vpop.xlane.xlu0 %1438
    %1440 = vadd.xlane.f32.xlu0 %v1435
    %v1441 = vpop.xlane.xlu0 %1440
    %1442 = vadd.xlane.f32.xlu0 %v1436
    %v1443 = vpop.xlane.xlu0 %1442
    %1444 = vadd.xlane.f32.xlu0 %v1437
    %v1445 = vpop.xlane.xlu0 %1444
    %v1446 = vmul.f32 %v1439, %v104
    %v1447 = vmul.f32 %v1441, %v104
    %v1448 = vmul.f32 %v1443, %v104
    %v1449 = vmul.f32 %v1445, %v104
    %v1450 = vadd.f32 %v1446, 1e-05
    %v1451 = vadd.f32 %v1447, 1e-05
    %v1452 = vadd.f32 %v1448, 1e-05
    %v1453 = vadd.f32 %v1449, 1e-05
    %v1454 = vrsqrt.pop %v1450
    %v1455 = vrsqrt.pop %v1451
    %v1456 = vrsqrt.pop %v1452
    %v1457 = vrsqrt.pop %v1453
    %v1458 = vmul.f32 %v1430, %v1454
    %v1459 = vmul.f32 %v1431, %v1455
    %v1460 = vmul.f32 %v1432, %v1456
    %v1461 = vmul.f32 %v1433, %v1457
    %v1463 = vlaneseq
    %v1464 = vshrl.u32 %v1463, 7
    %v1465 = vsub.s32 0, %v1464
    %v1466 = vrot.slane %v1416, %v1465
    %v1468 = vmul.f32 %v1458, %v1466
    %v1469 = vmul.f32 %v1459, %v1466
    %v1470 = vmul.f32 %v1460, %v1466
    %v1471 = vmul.f32 %v1461, %v1466
    %v1473 = vlaneseq
    %v1474 = vshrl.u32 %v1473, 7
    %v1475 = vsub.s32 0, %v1474
    %v1476 = vrot.slane %v1417, %v1475
    %v1478 = vadd.f32 %v1468, %v1476
    %v1479 = vadd.f32 %v1469, %v1476
    %v1480 = vadd.f32 %v1470, %v1476
    %v1481 = vadd.f32 %v1471, %v1476
    %v1482 = vpack.c.bf16 %v1479, %v1478
    %v1483 = vpack.c.bf16 %v1481, %v1480
    %v1484 = vld [vmem:[%s10] sm:$0xff]
    %v1485 = vld [vmem:[%s10 + $0x8] sm:$0xff]
    %v1486 = vld [vmem:[%s10 + $0x10] sm:$0xff]
    %v1487 = vld [vmem:[%s10 + $0x18] sm:$0xff]
    %v1488 = vld [vmem:[%s10 + $0x20] sm:$0xff]
    %v1489 = vld [vmem:[%s10 + $0x28] sm:$0xff]
    %v1490 = vld [vmem:[%s10 + $0x30] sm:$0xff]
    %v1491 = vld [vmem:[%s10 + $0x38] sm:$0xff]
    %v1492 = vld [vmem:[%s10 + $0x40] sm:$0xff]
    %v1493 = vld [vmem:[%s10 + $0x48] sm:$0xff]
    %v1494 = vld [vmem:[%s10 + $0x50] sm:$0xff]
    %v1495 = vld [vmem:[%s10 + $0x58] sm:$0xff]
    %v1496 = vld [vmem:[%s10 + $0x60] sm:$0xff]
    %v1497 = vld [vmem:[%s10 + $0x68] sm:$0xff]
    %v1498 = vld [vmem:[%s10 + $0x70] sm:$0xff]
    %v1499 = vld [vmem:[%s10 + $0x78] sm:$0xff]
    %v1500 = vld [vmem:[%s10 + $0x80] sm:$0xff]
    %v1501 = vld [vmem:[%s10 + $0x88] sm:$0xff]
    %v1502 = vld [vmem:[%s10 + $0x90] sm:$0xff]
    %v1503 = vld [vmem:[%s10 + $0x98] sm:$0xff]
    %v1504 = vld [vmem:[%s10 + $0xa0] sm:$0xff]
    %v1505 = vld [vmem:[%s10 + $0xa8] sm:$0xff]
    %v1506 = vld [vmem:[%s10 + $0xb0] sm:$0xff]
    %v1507 = vld [vmem:[%s10 + $0xb8] sm:$0xff]
    %v1508 = vld [vmem:[%s10 + $0xc0] sm:$0xff]
    %v1509 = vld [vmem:[%s10 + $0xc8] sm:$0xff]
    %v1510 = vld [vmem:[%s10 + $0xd0] sm:$0xff]
    %v1511 = vld [vmem:[%s10 + $0xd8] sm:$0xff]
    %v1512 = vld [vmem:[%s10 + $0xe0] sm:$0xff]
    %v1513 = vld [vmem:[%s10 + $0xe8] sm:$0xff]
    %v1514 = vld [vmem:[%s10 + $0xf0] sm:$0xff]
    %v1515 = vld [vmem:[%s10 + $0xf8] sm:$0xff]
    %v1516 = vld [vmem:[%s11] sm:$0xf]
    %v1518 = vlaneseq
    %v1519 = vshrl.u32 %v1518, 7
    %v1520 = vsub.s32 0, %v1519
    %v1521 = vrot.slane %v1516, %v1520
    %v1522 = vlaneseq
    %v1523 = vshrl.u32 %v1522, 7
    %v1524 = vsub.s32 1, %v1523
    %v1525 = vrot.slane %v1516, %v1524
    %v1526 = vlaneseq
    %v1527 = vshrl.u32 %v1526, 7
    %v1528 = vsub.s32 2, %v1527
    %v1529 = vrot.slane %v1516, %v1528
    %v1530 = vlaneseq
    %v1531 = vshrl.u32 %v1530, 7
    %v1532 = vsub.s32 3, %v1531
    %v1533 = vrot.slane %v1516, %v1532
    %v1570 = vunpack.c.l.b16 %v1484
    %v1571 = vunpack.c.h.b16 %v1484
    %v1572 = vunpack.c.l.b16 %v1485
    %v1573 = vunpack.c.h.b16 %v1485
    %v1574 = vunpack.c.l.b16 %v1486
    %v1575 = vunpack.c.h.b16 %v1486
    %v1576 = vunpack.c.l.b16 %v1487
    %v1577 = vunpack.c.h.b16 %v1487
    %v1578 = vunpack.c.l.b16 %v1488
    %v1579 = vunpack.c.h.b16 %v1488
    %v1580 = vunpack.c.l.b16 %v1489
    %v1581 = vunpack.c.h.b16 %v1489
    %v1582 = vunpack.c.l.b16 %v1490
    %v1583 = vunpack.c.h.b16 %v1490
    %v1584 = vunpack.c.l.b16 %v1491
    %v1585 = vunpack.c.h.b16 %v1491
    %v1586 = vunpack.c.l.b16 %v1492
    %v1587 = vunpack.c.h.b16 %v1492
    %v1588 = vunpack.c.l.b16 %v1493
    %v1589 = vunpack.c.h.b16 %v1493
    %v1590 = vunpack.c.l.b16 %v1494
    %v1591 = vunpack.c.h.b16 %v1494
    %v1592 = vunpack.c.l.b16 %v1495
    %v1593 = vunpack.c.h.b16 %v1495
    %v1594 = vunpack.c.l.b16 %v1496
    %v1595 = vunpack.c.h.b16 %v1496
    %v1596 = vunpack.c.l.b16 %v1497
    %v1597 = vunpack.c.h.b16 %v1497
    %v1598 = vunpack.c.l.b16 %v1498
    %v1599 = vunpack.c.h.b16 %v1498
    %v1600 = vunpack.c.l.b16 %v1499
    %v1601 = vunpack.c.h.b16 %v1499
    %v1602 = vunpack.c.l.b16 %v1500
    %v1603 = vunpack.c.h.b16 %v1500
    %v1604 = vunpack.c.l.b16 %v1501
    %v1605 = vunpack.c.h.b16 %v1501
    %v1606 = vunpack.c.l.b16 %v1502
    %v1607 = vunpack.c.h.b16 %v1502
    %v1608 = vunpack.c.l.b16 %v1503
    %v1609 = vunpack.c.h.b16 %v1503
    %v1610 = vunpack.c.l.b16 %v1504
    %v1611 = vunpack.c.h.b16 %v1504
    %v1612 = vunpack.c.l.b16 %v1505
    %v1613 = vunpack.c.h.b16 %v1505
    %v1614 = vunpack.c.l.b16 %v1506
    %v1615 = vunpack.c.h.b16 %v1506
    %v1616 = vunpack.c.l.b16 %v1507
    %v1617 = vunpack.c.h.b16 %v1507
    %v1618 = vunpack.c.l.b16 %v1508
    %v1619 = vunpack.c.h.b16 %v1508
    %v1620 = vunpack.c.l.b16 %v1509
    %v1621 = vunpack.c.h.b16 %v1509
    %v1622 = vunpack.c.l.b16 %v1510
    %v1623 = vunpack.c.h.b16 %v1510
    %v1624 = vunpack.c.l.b16 %v1511
    %v1625 = vunpack.c.h.b16 %v1511
    %v1626 = vunpack.c.l.b16 %v1512
    %v1627 = vunpack.c.h.b16 %v1512
    %v1628 = vunpack.c.l.b16 %v1513
    %v1629 = vunpack.c.h.b16 %v1513
    %v1630 = vunpack.c.l.b16 %v1514
    %v1631 = vunpack.c.h.b16 %v1514
    %v1632 = vunpack.c.l.b16 %v1515
    %v1633 = vunpack.c.h.b16 %v1515
    %v1634 = vpack.c.b16 %v1574, %v1570
    %v1635 = vpack.c.b16 %v1575, %v1571
    %v1636 = vpack.c.b16 %v1576, %v1572
    %v1637 = vpack.c.b16 %v1577, %v1573
    %v1638 = vpack.c.b16 %v1582, %v1578
    %v1639 = vpack.c.b16 %v1583, %v1579
    %v1640 = vpack.c.b16 %v1584, %v1580
    %v1641 = vpack.c.b16 %v1585, %v1581
    %v1642 = vpack.c.b16 %v1590, %v1586
    %v1643 = vpack.c.b16 %v1591, %v1587
    %v1644 = vpack.c.b16 %v1592, %v1588
    %v1645 = vpack.c.b16 %v1593, %v1589
    %v1646 = vpack.c.b16 %v1598, %v1594
    %v1647 = vpack.c.b16 %v1599, %v1595
    %v1648 = vpack.c.b16 %v1600, %v1596
    %v1649 = vpack.c.b16 %v1601, %v1597
    %v1650 = vpack.c.b16 %v1606, %v1602
    %v1651 = vpack.c.b16 %v1607, %v1603
    %v1652 = vpack.c.b16 %v1608, %v1604
    %v1653 = vpack.c.b16 %v1609, %v1605
    %v1654 = vpack.c.b16 %v1614, %v1610
    %v1655 = vpack.c.b16 %v1615, %v1611
    %v1656 = vpack.c.b16 %v1616, %v1612
    %v1657 = vpack.c.b16 %v1617, %v1613
    %v1658 = vpack.c.b16 %v1622, %v1618
    %v1659 = vpack.c.b16 %v1623, %v1619
    %v1660 = vpack.c.b16 %v1624, %v1620
    %v1661 = vpack.c.b16 %v1625, %v1621
    %v1662 = vpack.c.b16 %v1630, %v1626
    %v1663 = vpack.c.b16 %v1631, %v1627
    %v1664 = vpack.c.b16 %v1632, %v1628
    %v1665 = vpack.c.b16 %v1633, %v1629
    %1698 = vmatprep.subr.bf16.mxu0 %v1635
    %1699 = vmatpush1.bf16.msra.mxu0 %v1634
    %1700 = vmatprep.subr.bf16.mxu0 %v1639
    %1701 = vmatpush1.bf16.msra.mxu0 %v1638
    %1702 = vmatprep.subr.bf16.mxu0 %v1643
    %1703 = vmatpush1.bf16.msra.mxu0 %v1642
    %1704 = vmatprep.subr.bf16.mxu0 %v1647
    %1705 = vmatpush1.bf16.msra.mxu0 %v1646
    %1706 = vmatprep.subr.bf16.mxu0 %v1651
    %1707 = vmatpush1.bf16.msra.mxu0 %v1650
    %1708 = vmatprep.subr.bf16.mxu0 %v1655
    %1709 = vmatpush1.bf16.msra.mxu0 %v1654
    %1710 = vmatprep.subr.bf16.mxu0 %v1659
    %1711 = vmatpush1.bf16.msra.mxu0 %v1658
    %1712 = vmatprep.subr.bf16.mxu0 %v1663
    %1713 = vmatpush1.bf16.msra.mxu0 %v1662
    %1714 = vmatprep.subr.bf16.mxu0 0
    %1715 = vmatpush1.bf16.msra.mxu0 0
    %1716 = vmatprep.subr.bf16.mxu0 0
    %1717 = vmatpush1.bf16.msra.mxu0 0
    %1718 = vmatprep.subr.bf16.mxu0 0
    %1719 = vmatpush1.bf16.msra.mxu0 0
    %1720 = vmatprep.subr.bf16.mxu0 0
    %1721 = vmatpush1.bf16.msra.mxu0 0
    %1722 = vmatprep.subr.bf16.mxu0 0
    %1723 = vmatpush1.bf16.msra.mxu0 0
    %1724 = vmatprep.subr.bf16.mxu0 0
    %1725 = vmatpush1.bf16.msra.mxu0 0
    %1726 = vmatprep.subr.bf16.mxu0 0
    %1727 = vmatpush1.bf16.msra.mxu0 0
    %1728 = vmatprep.subr.bf16.mxu0 0
    %1729 = vmatpush1.bf16.msra.mxu0 0
    %1730 = vmatprep.mubr.bf16.mxu0 0
    %1731 = vmatmul.mubr.bf16.gmra.mrb[0].mxu0 %v1482
    %v1732 = vpop.f32.mrb[0].mxu0
    %v1733 = vadd.f32 %v1521, %v1732
    %v1734 = vpop.f32.mrb[0].mxu0
    %v1735 = vadd.f32 %v1525, %v1734
    %v1736 = vpop.f32.mrb[0].mxu0
    %v1737 = vadd.f32 %v1521, %v1736
    %v1738 = vpop.f32.mrb[0].mxu0
    %v1739 = vadd.f32 %v1525, %v1738
    %1740 = vmatprep.mubr.bf16.mxu0 0
    %1741 = vmatmul.mubr.bf16.gmra.mrb[0].mxu0 %v1483
    %v1742 = vpop.f32.mrb[0].mxu0
    %v1743 = vadd.f32 %v1521, %v1742
    %v1744 = vpop.f32.mrb[0].mxu0
    %v1745 = vadd.f32 %v1525, %v1744
    %v1746 = vpop.f32.mrb[0].mxu0
    %v1747 = vadd.f32 %v1521, %v1746
    %v1748 = vpop.f32.mrb[0].mxu0
    %v1749 = vadd.f32 %v1525, %v1748
    %1750 = vdwg.mxu0
    %1751 = vmatprep.subr.bf16.mxu0 %v1637
    %1752 = vmatpush1.bf16.msra.mxu0 %v1636
    %1753 = vmatprep.subr.bf16.mxu0 %v1641
    %1754 = vmatpush1.bf16.msra.mxu0 %v1640
    %1755 = vmatprep.subr.bf16.mxu0 %v1645
    %1756 = vmatpush1.bf16.msra.mxu0 %v1644
    %1757 = vmatprep.subr.bf16.mxu0 %v1649
    %1758 = vmatpush1.bf16.msra.mxu0 %v1648
    %1759 = vmatprep.subr.bf16.mxu0 %v1653
    %1760 = vmatpush1.bf16.msra.mxu0 %v1652
    %1761 = vmatprep.subr.bf16.mxu0 %v1657
    %1762 = vmatpush1.bf16.msra.mxu0 %v1656
    %1763 = vmatprep.subr.bf16.mxu0 %v1661
    %1764 = vmatpush1.bf16.msra.mxu0 %v1660
    %1765 = vmatprep.subr.bf16.mxu0 %v1665
    %1766 = vmatpush1.bf16.msra.mxu0 %v1664
    %1767 = vmatprep.subr.bf16.mxu0 0
    %1768 = vmatpush1.bf16.msra.mxu0 0
    %1769 = vmatprep.subr.bf16.mxu0 0
    %1770 = vmatpush1.bf16.msra.mxu0 0
    %1771 = vmatprep.subr.bf16.mxu0 0
    %1772 = vmatpush1.bf16.msra.mxu0 0
    %1773 = vmatprep.subr.bf16.mxu0 0
    %1774 = vmatpush1.bf16.msra.mxu0 0
    %1775 = vmatprep.subr.bf16.mxu0 0
    %1776 = vmatpush1.bf16.msra.mxu0 0
    %1777 = vmatprep.subr.bf16.mxu0 0
    %1778 = vmatpush1.bf16.msra.mxu0 0
    %1779 = vmatprep.subr.bf16.mxu0 0
    %1780 = vmatpush1.bf16.msra.mxu0 0
    %1781 = vmatprep.subr.bf16.mxu0 0
    %1782 = vmatpush1.bf16.msra.mxu0 0
    %1783 = vmatprep.mubr.bf16.mxu0 0
    %1784 = vmatmul.mubr.bf16.gmra.mrb[0].mxu0 %v1482
    %v1785 = vpop.f32.mrb[0].mxu0
    %v1786 = vadd.f32 %v1529, %v1785
    %v1787 = vpop.f32.mrb[0].mxu0
    %v1788 = vadd.f32 %v1533, %v1787
    %v1789 = vpop.f32.mrb[0].mxu0
    %v1790 = vadd.f32 %v1529, %v1789
    %v1791 = vpop.f32.mrb[0].mxu0
    %v1792 = vadd.f32 %v1533, %v1791
    %1793 = vmatprep.mubr.bf16.mxu0 0
    %1794 = vmatmul.mubr.bf16.gmra.mrb[0].mxu0 %v1483
    %v1795 = vpop.f32.mrb[0].mxu0
    %v1796 = vadd.f32 %v1529, %v1795
    %v1797 = vpop.f32.mrb[0].mxu0
    %v1798 = vadd.f32 %v1533, %v1797
    %v1799 = vpop.f32.mrb[0].mxu0
    %v1800 = vadd.f32 %v1529, %v1799
    %v1801 = vpop.f32.mrb[0].mxu0
    %v1802 = vadd.f32 %v1533, %v1801
    %1803 = vdwg.mxu0
    %v1804 = vmul.f32 %v1733, 0.5
    %v1805 = vmul.f32 %v1735, 0.5
    %v1806 = vmul.f32 %v1786, 0.5
    %v1807 = vmul.f32 %v1788, 0.5
    %v1808 = vmul.f32 %v1737, 0.5
    %v1809 = vmul.f32 %v1739, 0.5
    %v1810 = vmul.f32 %v1790, 0.5
    %v1811 = vmul.f32 %v1792, 0.5
    %v1812 = vmul.f32 %v1743, 0.5
    %v1813 = vmul.f32 %v1745, 0.5
    %v1814 = vmul.f32 %v1796, 0.5
    %v1815 = vmul.f32 %v1798, 0.5
    %v1816 = vmul.f32 %v1747, 0.5
    %v1817 = vmul.f32 %v1749, 0.5
    %v1818 = vmul.f32 %v1800, 0.5
    %v1819 = vmul.f32 %v1802, 0.5
    %v1820 = vmul.f32 %v1733, 0.044715
    %v1821 = vmul.f32 %v1735, 0.044715
    %v1822 = vmul.f32 %v1786, 0.044715
    %v1823 = vmul.f32 %v1788, 0.044715
    %v1824 = vmul.f32 %v1737, 0.044715
    %v1825 = vmul.f32 %v1739, 0.044715
    %v1826 = vmul.f32 %v1790, 0.044715
    %v1827 = vmul.f32 %v1792, 0.044715
    %v1828 = vmul.f32 %v1743, 0.044715
    %v1829 = vmul.f32 %v1745, 0.044715
    %v1830 = vmul.f32 %v1796, 0.044715
    %v1831 = vmul.f32 %v1798, 0.044715
    %v1832 = vmul.f32 %v1747, 0.044715
    %v1833 = vmul.f32 %v1749, 0.044715
    %v1834 = vmul.f32 %v1800, 0.044715
    %v1835 = vmul.f32 %v1802, 0.044715
    %v1836 = vmul.f32 %v1820, %v1733
    %v1837 = vmul.f32 %v1821, %v1735
    %v1838 = vmul.f32 %v1822, %v1786
    %v1839 = vmul.f32 %v1823, %v1788
    %v1840 = vmul.f32 %v1824, %v1737
    %v1841 = vmul.f32 %v1825, %v1739
    %v1842 = vmul.f32 %v1826, %v1790
    %v1843 = vmul.f32 %v1827, %v1792
    %v1844 = vmul.f32 %v1828, %v1743
    %v1845 = vmul.f32 %v1829, %v1745
    %v1846 = vmul.f32 %v1830, %v1796
    %v1847 = vmul.f32 %v1831, %v1798
    %v1848 = vmul.f32 %v1832, %v1747
    %v1849 = vmul.f32 %v1833, %v1749
    %v1850 = vmul.f32 %v1834, %v1800
    %v1851 = vmul.f32 %v1835, %v1802
    %v1852 = vmul.f32 %v1836, %v1733
    %v1853 = vmul.f32 %v1837, %v1735
    %v1854 = vmul.f32 %v1838, %v1786
    %v1855 = vmul.f32 %v1839, %v1788
    %v1856 = vmul.f32 %v1840, %v1737
    %v1857 = vmul.f32 %v1841, %v1739
    %v1858 = vmul.f32 %v1842, %v1790
    %v1859 = vmul.f32 %v1843, %v1792
    %v1860 = vmul.f32 %v1844, %v1743
    %v1861 = vmul.f32 %v1845, %v1745
    %v1862 = vmul.f32 %v1846, %v1796
    %v1863 = vmul.f32 %v1847, %v1798
    %v1864 = vmul.f32 %v1848, %v1747
    %v1865 = vmul.f32 %v1849, %v1749
    %v1866 = vmul.f32 %v1850, %v1800
    %v1867 = vmul.f32 %v1851, %v1802
    %v1868 = vadd.f32 %v1733, %v1852
    %v1869 = vadd.f32 %v1735, %v1853
    %v1870 = vadd.f32 %v1786, %v1854
    %v1871 = vadd.f32 %v1788, %v1855
    %v1872 = vadd.f32 %v1737, %v1856
    %v1873 = vadd.f32 %v1739, %v1857
    %v1874 = vadd.f32 %v1790, %v1858
    %v1875 = vadd.f32 %v1792, %v1859
    %v1876 = vadd.f32 %v1743, %v1860
    %v1877 = vadd.f32 %v1745, %v1861
    %v1878 = vadd.f32 %v1796, %v1862
    %v1879 = vadd.f32 %v1798, %v1863
    %v1880 = vadd.f32 %v1747, %v1864
    %v1881 = vadd.f32 %v1749, %v1865
    %v1882 = vadd.f32 %v1800, %v1866
    %v1883 = vadd.f32 %v1802, %v1867
    %v1884 = vmul.f32 %v1868, 0.7978846
    %v1885 = vmul.f32 %v1869, 0.7978846
    %v1886 = vmul.f32 %v1870, 0.7978846
    %v1887 = vmul.f32 %v1871, 0.7978846
    %v1888 = vmul.f32 %v1872, 0.7978846
    %v1889 = vmul.f32 %v1873, 0.7978846
    %v1890 = vmul.f32 %v1874, 0.7978846
    %v1891 = vmul.f32 %v1875, 0.7978846
    %v1892 = vmul.f32 %v1876, 0.7978846
    %v1893 = vmul.f32 %v1877, 0.7978846
    %v1894 = vmul.f32 %v1878, 0.7978846
    %v1895 = vmul.f32 %v1879, 0.7978846
    %v1896 = vmul.f32 %v1880, 0.7978846
    %v1897 = vmul.f32 %v1881, 0.7978846
    %v1898 = vmul.f32 %v1882, 0.7978846
    %v1899 = vmul.f32 %v1883, 0.7978846
    %v1900 = vtanh.pop %v1884
    %v1901 = vtanh.pop %v1885
    %v1902 = vtanh.pop %v1886
    %v1903 = vtanh.pop %v1887
    %v1904 = vtanh.pop %v1888
    %v1905 = vtanh.pop %v1889
    %v1906 = vtanh.pop %v1890
    %v1907 = vtanh.pop %v1891
    %v1908 = vtanh.pop %v1892
    %v1909 = vtanh.pop %v1893
    %v1910 = vtanh.pop %v1894
    %v1911 = vtanh.pop %v1895
    %v1912 = vtanh.pop %v1896
    %v1913 = vtanh.pop %v1897
    %v1914 = vtanh.pop %v1898
    %v1915 = vtanh.pop %v1899
    %v1916 = vadd.f32 %v1900, 1.0
    %v1917 = vadd.f32 %v1901, 1.0
    %v1918 = vadd.f32 %v1902, 1.0
    %v1919 = vadd.f32 %v1903, 1.0
    %v1920 = vadd.f32 %v1904, 1.0
    %v1921 = vadd.f32 %v1905, 1.0
    %v1922 = vadd.f32 %v1906, 1.0
    %v1923 = vadd.f32 %v1907, 1.0
    %v1924 = vadd.f32 %v1908, 1.0
    %v1925 = vadd.f32 %v1909, 1.0
    %v1926 = vadd.f32 %v1910, 1.0
    %v1927 = vadd.f32 %v1911, 1.0
    %v1928 = vadd.f32 %v1912, 1.0
    %v1929 = vadd.f32 %v1913, 1.0
    %v1930 = vadd.f32 %v1914, 1.0
    %v1931 = vadd.f32 %v1915, 1.0
    %v1932 = vmul.f32 %v1804, %v1916
    %v1933 = vmul.f32 %v1805, %v1917
    %v1934 = vmul.f32 %v1806, %v1918
    %v1935 = vmul.f32 %v1807, %v1919
    %v1936 = vmul.f32 %v1808, %v1920
    %v1937 = vmul.f32 %v1809, %v1921
    %v1938 = vmul.f32 %v1810, %v1922
    %v1939 = vmul.f32 %v1811, %v1923
    %v1940 = vmul.f32 %v1812, %v1924
    %v1941 = vmul.f32 %v1813, %v1925
    %v1942 = vmul.f32 %v1814, %v1926
    %v1943 = vmul.f32 %v1815, %v1927
    %v1944 = vmul.f32 %v1816, %v1928
    %v1945 = vmul.f32 %v1817, %v1929
    %v1946 = vmul.f32 %v1818, %v1930
    %v1947 = vmul.f32 %v1819, %v1931
    %v1948 = vpack.c.bf16 %v1936, %v1932
    %v1949 = vpack.c.bf16 %v1937, %v1933
    %v1950 = vpack.c.bf16 %v1938, %v1934
    %v1951 = vpack.c.bf16 %v1939, %v1935
    %v1952 = vpack.c.bf16 %v1944, %v1940
    %v1953 = vpack.c.bf16 %v1945, %v1941
    %v1954 = vpack.c.bf16 %v1946, %v1942
    %v1955 = vpack.c.bf16 %v1947, %v1943
    %v1956 = vld [vmem:[#allocation5] sm:$0xf]
    %v1957 = vld [vmem:[#allocation5 + $0x4] sm:$0xf]
    %v1958 = vld [vmem:[#allocation5 + $0x8] sm:$0xf]
    %v1959 = vld [vmem:[#allocation5 + $0xc] sm:$0xf]
    %v1960 = vld [vmem:[#allocation5 + $0x10] sm:$0xf]
    %v1961 = vld [vmem:[#allocation5 + $0x14] sm:$0xf]
    %v1962 = vld [vmem:[#allocation5 + $0x18] sm:$0xf]
    %v1963 = vld [vmem:[#allocation5 + $0x1c] sm:$0xf]
    %v1964 = vld [vmem:[#allocation5 + $0x20] sm:$0xf]
    %v1965 = vld [vmem:[#allocation5 + $0x24] sm:$0xf]
    %v1966 = vld [vmem:[#allocation5 + $0x28] sm:$0xf]
    %v1967 = vld [vmem:[#allocation5 + $0x2c] sm:$0xf]
    %v1968 = vld [vmem:[#allocation5 + $0x30] sm:$0xf]
    %v1969 = vld [vmem:[#allocation5 + $0x34] sm:$0xf]
    %v1970 = vld [vmem:[#allocation5 + $0x38] sm:$0xf]
    %v1971 = vld [vmem:[#allocation5 + $0x3c] sm:$0xf]
    %v1972 = vld [vmem:[#allocation5 + $0x40] sm:$0xf]
    %v1973 = vld [vmem:[#allocation5 + $0x44] sm:$0xf]
    %v1974 = vld [vmem:[#allocation5 + $0x48] sm:$0xf]
    %v1975 = vld [vmem:[#allocation5 + $0x4c] sm:$0xf]
    %v1976 = vld [vmem:[#allocation5 + $0x50] sm:$0xf]
    %v1977 = vld [vmem:[#allocation5 + $0x54] sm:$0xf]
    %v1978 = vld [vmem:[#allocation5 + $0x58] sm:$0xf]
    %v1979 = vld [vmem:[#allocation5 + $0x5c] sm:$0xf]
    %v1980 = vld [vmem:[#allocation5 + $0x60] sm:$0xf]
    %v1981 = vld [vmem:[#allocation5 + $0x64] sm:$0xf]
    %v1982 = vld [vmem:[#allocation5 + $0x68] sm:$0xf]
    %v1983 = vld [vmem:[#allocation5 + $0x6c] sm:$0xf]
    %v1984 = vld [vmem:[#allocation5 + $0x70] sm:$0xf]
    %v1985 = vld [vmem:[#allocation5 + $0x74] sm:$0xf]
    %v1986 = vld [vmem:[#allocation5 + $0x78] sm:$0xf]
    %v1987 = vld [vmem:[#allocation5 + $0x7c] sm:$0xf]
    %v1988 = vld [vmem:[#allocation5 + $0x80] sm:$0xf]
    %v1989 = vld [vmem:[#allocation5 + $0x84] sm:$0xf]
    %v1990 = vld [vmem:[#allocation5 + $0x88] sm:$0xf]
    %v1991 = vld [vmem:[#allocation5 + $0x8c] sm:$0xf]
    %v1992 = vld [vmem:[#allocation5 + $0x90] sm:$0xf]
    %v1993 = vld [vmem:[#allocation5 + $0x94] sm:$0xf]
    %v1994 = vld [vmem:[#allocation5 + $0x98] sm:$0xf]
    %v1995 = vld [vmem:[#allocation5 + $0x9c] sm:$0xf]
    %v1996 = vld [vmem:[#allocation5 + $0xa0] sm:$0xf]
    %v1997 = vld [vmem:[#allocation5 + $0xa4] sm:$0xf]
    %v1998 = vld [vmem:[#allocation5 + $0xa8] sm:$0xf]
    %v1999 = vld [vmem:[#allocation5 + $0xac] sm:$0xf]
    %v2000 = vld [vmem:[#allocation5 + $0xb0] sm:$0xf]
    %v2001 = vld [vmem:[#allocation5 + $0xb4] sm:$0xf]
    %v2002 = vld [vmem:[#allocation5 + $0xb8] sm:$0xf]
    %v2003 = vld [vmem:[#allocation5 + $0xbc] sm:$0xf]
    %v2004 = vld [vmem:[#allocation5 + $0xc0] sm:$0xf]
    %v2005 = vld [vmem:[#allocation5 + $0xc4] sm:$0xf]
    %v2006 = vld [vmem:[#allocation5 + $0xc8] sm:$0xf]
    %v2007 = vld [vmem:[#allocation5 + $0xcc] sm:$0xf]
    %v2008 = vld [vmem:[#allocation5 + $0xd0] sm:$0xf]
    %v2009 = vld [vmem:[#allocation5 + $0xd4] sm:$0xf]
    %v2010 = vld [vmem:[#allocation5 + $0xd8] sm:$0xf]
    %v2011 = vld [vmem:[#allocation5 + $0xdc] sm:$0xf]
    %v2012 = vld [vmem:[#allocation5 + $0xe0] sm:$0xf]
    %v2013 = vld [vmem:[#allocation5 + $0xe4] sm:$0xf]
    %v2014 = vld [vmem:[#allocation5 + $0xe8] sm:$0xf]
    %v2015 = vld [vmem:[#allocation5 + $0xec] sm:$0xf]
    %v2016 = vld [vmem:[#allocation5 + $0xf0] sm:$0xf]
    %v2017 = vld [vmem:[#allocation5 + $0xf4] sm:$0xf]
    %v2018 = vld [vmem:[#allocation5 + $0xf8] sm:$0xf]
    %v2019 = vld [vmem:[#allocation5 + $0xfc] sm:$0xf]
    %v2084 = vunpack.c.l.b16 %v1956
    %v2085 = vunpack.c.l.b16 %v1957
    %v2086 = vunpack.c.l.b16 %v1958
    %v2087 = vunpack.c.l.b16 %v1959
    %v2088 = vunpack.c.l.b16 %v1960
    %v2089 = vunpack.c.l.b16 %v1961
    %v2090 = vunpack.c.l.b16 %v1962
    %v2091 = vunpack.c.l.b16 %v1963
    %v2092 = vunpack.c.l.b16 %v1964
    %v2093 = vunpack.c.l.b16 %v1965
    %v2094 = vunpack.c.l.b16 %v1966
    %v2095 = vunpack.c.l.b16 %v1967
    %v2096 = vunpack.c.l.b16 %v1968
    %v2097 = vunpack.c.l.b16 %v1969
    %v2098 = vunpack.c.l.b16 %v1970
    %v2099 = vunpack.c.l.b16 %v1971
    %v2100 = vunpack.c.l.b16 %v1972
    %v2101 = vunpack.c.l.b16 %v1973
    %v2102 = vunpack.c.l.b16 %v1974
    %v2103 = vunpack.c.l.b16 %v1975
    %v2104 = vunpack.c.l.b16 %v1976
    %v2105 = vunpack.c.l.b16 %v1977
    %v2106 = vunpack.c.l.b16 %v1978
    %v2107 = vunpack.c.l.b16 %v1979
    %v2108 = vunpack.c.l.b16 %v1980
    %v2109 = vunpack.c.l.b16 %v1981
    %v2110 = vunpack.c.l.b16 %v1982
    %v2111 = vunpack.c.l.b16 %v1983
    %v2112 = vunpack.c.l.b16 %v1984
    %v2113 = vunpack.c.l.b16 %v1985
    %v2114 = vunpack.c.l.b16 %v1986
    %v2115 = vunpack.c.l.b16 %v1987
    %v2116 = vunpack.c.l.b16 %v1988
    %v2117 = vunpack.c.l.b16 %v1989
    %v2118 = vunpack.c.l.b16 %v1990
    %v2119 = vunpack.c.l.b16 %v1991
    %v2120 = vunpack.c.l.b16 %v1992
    %v2121 = vunpack.c.l.b16 %v1993
    %v2122 = vunpack.c.l.b16 %v1994
    %v2123 = vunpack.c.l.b16 %v1995
    %v2124 = vunpack.c.l.b16 %v1996
    %v2125 = vunpack.c.l.b16 %v1997
    %v2126 = vunpack.c.l.b16 %v1998
    %v2127 = vunpack.c.l.b16 %v1999
    %v2128 = vunpack.c.l.b16 %v2000
    %v2129 = vunpack.c.l.b16 %v2001
    %v2130 = vunpack.c.l.b16 %v2002
    %v2131 = vunpack.c.l.b16 %v2003
    %v2132 = vunpack.c.l.b16 %v2004
    %v2133 = vunpack.c.l.b16 %v2005
    %v2134 = vunpack.c.l.b16 %v2006
    %v2135 = vunpack.c.l.b16 %v2007
    %v2136 = vunpack.c.l.b16 %v2008
    %v2137 = vunpack.c.l.b16 %v2009
    %v2138 = vunpack.c.l.b16 %v2010
    %v2139 = vunpack.c.l.b16 %v2011
    %v2140 = vunpack.c.l.b16 %v2012
    %v2141 = vunpack.c.l.b16 %v2013
    %v2142 = vunpack.c.l.b16 %v2014
    %v2143 = vunpack.c.l.b16 %v2015
    %v2144 = vunpack.c.l.b16 %v2016
    %v2145 = vunpack.c.l.b16 %v2017
    %v2146 = vunpack.c.l.b16 %v2018
    %v2147 = vunpack.c.l.b16 %v2019
    %v2148 = vpack.c.b16 %v2085, %v2084
    %v2149 = vpack.c.b16 %v2087, %v2086
    %v2150 = vpack.c.b16 %v2089, %v2088
    %v2151 = vpack.c.b16 %v2091, %v2090
    %v2152 = vpack.c.b16 %v2093, %v2092
    %v2153 = vpack.c.b16 %v2095, %v2094
    %v2154 = vpack.c.b16 %v2097, %v2096
    %v2155 = vpack.c.b16 %v2099, %v2098
    %v2156 = vpack.c.b16 %v2101, %v2100
    %v2157 = vpack.c.b16 %v2103, %v2102
    %v2158 = vpack.c.b16 %v2105, %v2104
    %v2159 = vpack.c.b16 %v2107, %v2106
    %v2160 = vpack.c.b16 %v2109, %v2108
    %v2161 = vpack.c.b16 %v2111, %v2110
    %v2162 = vpack.c.b16 %v2113, %v2112
    %v2163 = vpack.c.b16 %v2115, %v2114
    %v2164 = vpack.c.b16 %v2117, %v2116
    %v2165 = vpack.c.b16 %v2119, %v2118
    %v2166 = vpack.c.b16 %v2121, %v2120
    %v2167 = vpack.c.b16 %v2123, %v2122
    %v2168 = vpack.c.b16 %v2125, %v2124
    %v2169 = vpack.c.b16 %v2127, %v2126
    %v2170 = vpack.c.b16 %v2129, %v2128
    %v2171 = vpack.c.b16 %v2131, %v2130
    %v2172 = vpack.c.b16 %v2133, %v2132
    %v2173 = vpack.c.b16 %v2135, %v2134
    %v2174 = vpack.c.b16 %v2137, %v2136
    %v2175 = vpack.c.b16 %v2139, %v2138
    %v2176 = vpack.c.b16 %v2141, %v2140
    %v2177 = vpack.c.b16 %v2143, %v2142
    %v2178 = vpack.c.b16 %v2145, %v2144
    %v2179 = vpack.c.b16 %v2147, %v2146
    %2212 = vmatprep.subr.bf16.mxu0 0
    %2213 = vmatpush1.bf16.msra.mxu0 %v2148
    %2214 = vmatprep.subr.bf16.mxu0 0
    %2215 = vmatpush1.bf16.msra.mxu0 %v2149
    %2216 = vmatprep.subr.bf16.mxu0 0
    %2217 = vmatpush1.bf16.msra.mxu0 %v2150
    %2218 = vmatprep.subr.bf16.mxu0 0
    %2219 = vmatpush1.bf16.msra.mxu0 %v2151
    %2220 = vmatprep.subr.bf16.mxu0 0
    %2221 = vmatpush1.bf16.msra.mxu0 %v2152
    %2222 = vmatprep.subr.bf16.mxu0 0
    %2223 = vmatpush1.bf16.msra.mxu0 %v2153
    %2224 = vmatprep.subr.bf16.mxu0 0
    %2225 = vmatpush1.bf16.msra.mxu0 %v2154
    %2226 = vmatprep.subr.bf16.mxu0 0
    %2227 = vmatpush1.bf16.msra.mxu0 %v2155
    %2228 = vmatprep.subr.bf16.mxu0 0
    %2229 = vmatpush1.bf16.msra.mxu0 %v2156
    %2230 = vmatprep.subr.bf16.mxu0 0
    %2231 = vmatpush1.bf16.msra.mxu0 %v2157
    %2232 = vmatprep.subr.bf16.mxu0 0
    %2233 = vmatpush1.bf16.msra.mxu0 %v2158
    %2234 = vmatprep.subr.bf16.mxu0 0
    %2235 = vmatpush1.bf16.msra.mxu0 %v2159
    %2236 = vmatprep.subr.bf16.mxu0 0
    %2237 = vmatpush1.bf16.msra.mxu0 %v2160
    %2238 = vmatprep.subr.bf16.mxu0 0
    %2239 = vmatpush1.bf16.msra.mxu0 %v2161
    %2240 = vmatprep.subr.bf16.mxu0 0
    %2241 = vmatpush1.bf16.msra.mxu0 %v2162
    %2242 = vmatprep.subr.bf16.mxu0 0
    %2243 = vmatpush1.bf16.msra.mxu0 %v2163
    %2244 = vmatprep.mubr.bf16.mxu0 %v1949
    %2245 = vmatmul.mubr.bf16.gmra.mrb[0].mxu0 %v1948
    %v2246 = vpop.f32.mrb[0].mxu0
    %v2247 = vadd.f32 0.0, %v2246
    %v2248 = vpop.f32.mrb[0].mxu0
    %v2249 = vpop.f32.mrb[0].mxu0
    %v2250 = vadd.f32 0.0, %v2249
    %v2251 = vpop.f32.mrb[0].mxu0
    %2252 = vmatprep.mubr.bf16.mxu0 %v1953
    %2253 = vmatmul.mubr.bf16.gmra.mrb[0].mxu0 %v1952
    %v2254 = vpop.f32.mrb[0].mxu0
    %v2255 = vadd.f32 0.0, %v2254
    %v2256 = vpop.f32.mrb[0].mxu0
    %v2257 = vpop.f32.mrb[0].mxu0
    %v2258 = vadd.f32 0.0, %v2257
    %v2259 = vpop.f32.mrb[0].mxu0
    %2260 = vdwg.mxu0
    %2261 = vmatprep.subr.bf16.mxu0 0
    %2262 = vmatpush1.bf16.msra.mxu0 %v2164
    %2263 = vmatprep.subr.bf16.mxu0 0
    %2264 = vmatpush1.bf16.msra.mxu0 %v2165
    %2265 = vmatprep.subr.bf16.mxu0 0
    %2266 = vmatpush1.bf16.msra.mxu0 %v2166
    %2267 = vmatprep.subr.bf16.mxu0 0
    %2268 = vmatpush1.bf16.msra.mxu0 %v2167
    %2269 = vmatprep.subr.bf16.mxu0 0
    %2270 = vmatpush1.bf16.msra.mxu0 %v2168
    %2271 = vmatprep.subr.bf16.mxu0 0
    %2272 = vmatpush1.bf16.msra.mxu0 %v2169
    %2273 = vmatprep.subr.bf16.mxu0 0
    %2274 = vmatpush1.bf16.msra.mxu0 %v2170
    %2275 = vmatprep.subr.bf16.mxu0 0
    %2276 = vmatpush1.bf16.msra.mxu0 %v2171
    %2277 = vmatprep.subr.bf16.mxu0 0
    %2278 = vmatpush1.bf16.msra.mxu0 %v2172
    %2279 = vmatprep.subr.bf16.mxu0 0
    %2280 = vmatpush1.bf16.msra.mxu0 %v2173
    %2281 = vmatprep.subr.bf16.mxu0 0
    %2282 = vmatpush1.bf16.msra.mxu0 %v2174
    %2283 = vmatprep.subr.bf16.mxu0 0
    %2284 = vmatpush1.bf16.msra.mxu0 %v2175
    %2285 = vmatprep.subr.bf16.mxu0 0
    %2286 = vmatpush1.bf16.msra.mxu0 %v2176
    %2287 = vmatprep.subr.bf16.mxu0 0
    %2288 = vmatpush1.bf16.msra.mxu0 %v2177
    %2289 = vmatprep.subr.bf16.mxu0 0
    %2290 = vmatpush1.bf16.msra.mxu0 %v2178
    %2291 = vmatprep.subr.bf16.mxu0 0
    %2292 = vmatpush1.bf16.msra.mxu0 %v2179
    %2293 = vmatprep.mubr.bf16.mxu0 %v1951
    %2294 = vmatmul.mubr.bf16.gmra.mrb[0].mxu0 %v1950
    %v2295 = vpop.f32.mrb[0].mxu0
    %v2296 = vadd.f32 %v2247, %v2295
    %v2297 = vpop.f32.mrb[0].mxu0
    %v2298 = vpop.f32.mrb[0].mxu0
    %v2299 = vadd.f32 %v2250, %v2298
    %v2300 = vpop.f32.mrb[0].mxu0
    %2301 = vmatprep.mubr.bf16.mxu0 %v1955
    %2302 = vmatmul.mubr.bf16.gmra.mrb[0].mxu0 %v1954
    %v2303 = vpop.f32.mrb[0].mxu0
    %v2304 = vadd.f32 %v2255, %v2303
    %v2305 = vpop.f32.mrb[0].mxu0
    %v2306 = vpop.f32.mrb[0].mxu0
    %v2307 = vadd.f32 %v2258, %v2306
    %v2308 = vpop.f32.mrb[0].mxu0
    %2309 = vdwg.mxu0
    %v2310 = vadd.f32 %v1412, %v2296
    %v2311 = vadd.f32 %v1413, %v2299
    %v2312 = vadd.f32 %v1414, %v2304
    %v2313 = vadd.f32 %v1415, %v2307
    %v2314 = vld [vmem:[%s13] sm:$0x1]
    %v2316 = vlaneseq
    %v2317 = vshrl.u32 %v2316, 7
    %v2318 = vsub.s32 0, %v2317
    %v2319 = vrot.slane %v2314, %v2318
    %v2321 = vadd.f32 %v2310, %v2319
    %v2322 = vadd.f32 %v2311, %v2319
    %v2323 = vadd.f32 %v2312, %v2319
    %v2324 = vadd.f32 %v2313, %v2319
    %s2325 = scalar_lea.vmem %s2, 1
    %v2326 = vld [vmem:[%s2325] sm:$0x1]
    %s2327 = scalar_lea.vmem %s3, 1
    %v2328 = vld [vmem:[%s2327] sm:$0x1]
    %2329 = vadd.xlane.f32.xlu0 %v2321
    %v2330 = vpop.xlane.xlu0 %2329
    %2331 = vadd.xlane.f32.xlu0 %v2322
    %v2332 = vpop.xlane.xlu0 %2331
    %2333 = vadd.xlane.f32.xlu0 %v2323
    %v2334 = vpop.xlane.xlu0 %2333
    %2335 = vadd.xlane.f32.xlu0 %v2324
    %v2336 = vpop.xlane.xlu0 %2335
    %v2337 = vmul.f32 %v2330, %v104
    %v2338 = vmul.f32 %v2332, %v104
    %v2339 = vmul.f32 %v2334, %v104
    %v2340 = vmul.f32 %v2336, %v104
    %v2341 = vsub.f32 %v2321, %v2337
    %v2342 = vsub.f32 %v2322, %v2338
    %v2343 = vsub.f32 %v2323, %v2339
    %v2344 = vsub.f32 %v2324, %v2340
    %v2345 = vmul.f32 %v2341, %v2341
    %v2346 = vmul.f32 %v2342, %v2342
    %v2347 = vmul.f32 %v2343, %v2343
    %v2348 = vmul.f32 %v2344, %v2344
    %2349 = vadd.xlane.f32.xlu0 %v2345
    %v2350 = vpop.xlane.xlu0 %2349
    %2351 = vadd.xlane.f32.xlu0 %v2346
    %v2352 = vpop.xlane.xlu0 %2351
    %2353 = vadd.xlane.f32.xlu0 %v2347
    %v2354 = vpop.xlane.xlu0 %2353
    %2355 = vadd.xlane.f32.xlu0 %v2348
    %v2356 = vpop.xlane.xlu0 %2355
    %v2357 = vmul.f32 %v2350, %v104
    %v2358 = vmul.f32 %v2352, %v104
    %v2359 = vmul.f32 %v2354, %v104
    %v2360 = vmul.f32 %v2356, %v104
    %v2361 = vadd.f32 %v2357, 1e-05
    %v2362 = vadd.f32 %v2358, 1e-05
    %v2363 = vadd.f32 %v2359, 1e-05
    %v2364 = vadd.f32 %v2360, 1e-05
    %v2365 = vrsqrt.pop %v2361
    %v2366 = vrsqrt.pop %v2362
    %v2367 = vrsqrt.pop %v2363
    %v2368 = vrsqrt.pop %v2364
    %v2369 = vmul.f32 %v2341, %v2365
    %v2370 = vmul.f32 %v2342, %v2366
    %v2371 = vmul.f32 %v2343, %v2367
    %v2372 = vmul.f32 %v2344, %v2368
    %v2374 = vlaneseq
    %v2375 = vshrl.u32 %v2374, 7
    %v2376 = vsub.s32 0, %v2375
    %v2377 = vrot.slane %v2326, %v2376
    %v2379 = vmul.f32 %v2369, %v2377
    %v2380 = vmul.f32 %v2370, %v2377
    %v2381 = vmul.f32 %v2371, %v2377
    %v2382 = vmul.f32 %v2372, %v2377
    %v2384 = vlaneseq
    %v2385 = vshrl.u32 %v2384, 7
    %v2386 = vsub.s32 0, %v2385
    %v2387 = vrot.slane %v2328, %v2386
    %v2389 = vadd.f32 %v2379, %v2387
    %v2390 = vadd.f32 %v2380, %v2387
    %v2391 = vadd.f32 %v2381, %v2387
    %v2392 = vadd.f32 %v2382, %v2387
    %v2393 = vpack.c.bf16 %v2390, %v2389
    %v2394 = vpack.c.bf16 %v2392, %v2391
    %s2395 = scalar_lea.vmem [#allocation2], 192
    %v2396 = vld [vmem:[%s2395] sm:$0xff]
    %v2397 = vld [vmem:[%s2395 + $0x8] sm:$0xf]
    %v2398 = vld [vmem:[%s2395 + $0xc] sm:$0xff]
    %v2399 = vld [vmem:[%s2395 + $0x14] sm:$0xf]
    %v2400 = vld [vmem:[%s2395 + $0x18] sm:$0xff]
    %v2401 = vld [vmem:[%s2395 + $0x20] sm:$0xf]
    %v2402 = vld [vmem:[%s2395 + $0x24] sm:$0xff]
    %v2403 = vld [vmem:[%s2395 + $0x2c] sm:$0xf]
    %v2404 = vld [vmem:[%s2395 + $0x30] sm:$0xff]
    %v2405 = vld [vmem:[%s2395 + $0x38] sm:$0xf]
    %v2406 = vld [vmem:[%s2395 + $0x3c] sm:$0xff]
    %v2407 = vld [vmem:[%s2395 + $0x44] sm:$0xf]
    %v2408 = vld [vmem:[%s2395 + $0x48] sm:$0xff]
    %v2409 = vld [vmem:[%s2395 + $0x50] sm:$0xf]
    %v2410 = vld [vmem:[%s2395 + $0x54] sm:$0xff]
    %v2411 = vld [vmem:[%s2395 + $0x5c] sm:$0xf]
    %v2412 = vld [vmem:[%s2395 + $0x60] sm:$0xff]
    %v2413 = vld [vmem:[%s2395 + $0x68] sm:$0xf]
    %v2414 = vld [vmem:[%s2395 + $0x6c] sm:$0xff]
    %v2415 = vld [vmem:[%s2395 + $0x74] sm:$0xf]
    %v2416 = vld [vmem:[%s2395 + $0x78] sm:$0xff]
    %v2417 = vld [vmem:[%s2395 + $0x80] sm:$0xf]
    %v2418 = vld [vmem:[%s2395 + $0x84] sm:$0xff]
    %v2419 = vld [vmem:[%s2395 + $0x8c] sm:$0xf]
    %v2420 = vld [vmem:[%s2395 + $0x90] sm:$0xff]
    %v2421 = vld [vmem:[%s2395 + $0x98] sm:$0xf]
    %v2422 = vld [vmem:[%s2395 + $0x9c] sm:$0xff]
    %v2423 = vld [vmem:[%s2395 + $0xa4] sm:$0xf]
    %v2424 = vld [vmem:[%s2395 + $0xa8] sm:$0xff]
    %v2425 = vld [vmem:[%s2395 + $0xb0] sm:$0xf]
    %v2426 = vld [vmem:[%s2395 + $0xb4] sm:$0xff]
    %v2427 = vld [vmem:[%s2395 + $0xbc] sm:$0xf]
    %s2428 = scalar_lea.vmem %s5, 3
    %v2429 = vld [vmem:[%s2428] sm:$0x7]
    %v2431 = vlaneseq
    %v2432 = vshrl.u32 %v2431, 7
    %v2433 = vsub.s32 0, %v2432
    %v2434 = vrot.slane %v2429, %v2433
    %v2435 = vlaneseq
    %v2436 = vshrl.u32 %v2435, 7
    %v2437 = vsub.s32 1, %v2436
    %v2438 = vrot.slane %v2429, %v2437
    %v2439 = vlaneseq
    %v2440 = vshrl.u32 %v2439, 7
    %v2441 = vsub.s32 2, %v2440
    %v2442 = vrot.slane %v2429, %v2441
    %v2478 = vunpack.c.l.b16 %v2396
    %v2479 = vunpack.c.h.b16 %v2396
    %v2480 = vunpack.c.l.b16 %v2397
    %v2481 = vunpack.c.l.b16 %v2398
    %v2482 = vunpack.c.h.b16 %v2398
    %v2483 = vunpack.c.l.b16 %v2399
    %v2484 = vunpack.c.l.b16 %v2400
    %v2485 = vunpack.c.h.b16 %v2400
    %v2486 = vunpack.c.l.b16 %v2401
    %v2487 = vunpack.c.l.b16 %v2402
    %v2488 = vunpack.c.h.b16 %v2402
    %v2489 = vunpack.c.l.b16 %v2403
    %v2490 = vunpack.c.l.b16 %v2404
    %v2491 = vunpack.c.h.b16 %v2404
    %v2492 = vunpack.c.l.b16 %v2405
    %v2493 = vunpack.c.l.b16 %v2406
    %v2494 = vunpack.c.h.b16 %v2406
    %v2495 = vunpack.c.l.b16 %v2407
    %v2496 = vunpack.c.l.b16 %v2408
    %v2497 = vunpack.c.h.b16 %v2408
    %v2498 = vunpack.c.l.b16 %v2409
    %v2499 = vunpack.c.l.b16 %v2410
    %v2500 = vunpack.c.h.b16 %v2410
    %v2501 = vunpack.c.l.b16 %v2411
    %v2502 = vunpack.c.l.b16 %v2412
    %v2503 = vunpack.c.h.b16 %v2412
    %v2504 = vunpack.c.l.b16 %v2413
    %v2505 = vunpack.c.l.b16 %v2414
    %v2506 = vunpack.c.h.b16 %v2414
    %v2507 = vunpack.c.l.b16 %v2415
    %v2508 = vunpack.c.l.b16 %v2416
    %v2509 = vunpack.c.h.b16 %v2416
    %v2510 = vunpack.c.l.b16 %v2417
    %v2511 = vunpack.c.l.b16 %v2418
    %v2512 = vunpack.c.h.b16 %v2418
    %v2513 = vunpack.c.l.b16 %v2419
    %v2514 = vunpack.c.l.b16 %v2420
    %v2515 = vunpack.c.h.b16 %v2420
    %v2516 = vunpack.c.l.b16 %v2421
    %v2517 = vunpack.c.l.b16 %v2422
    %v2518 = vunpack.c.h.b16 %v2422
    %v2519 = vunpack.c.l.b16 %v2423
    %v2520 = vunpack.c.l.b16 %v2424
    %v2521 = vunpack.c.h.b16 %v2424
    %v2522 = vunpack.c.l.b16 %v2425
    %v2523 = vunpack.c.l.b16 %v2426
    %v2524 = vunpack.c.h.b16 %v2426
    %v2525 = vunpack.c.l.b16 %v2427
    %v2526 = vpack.c.b16 %v2481, %v2478
    %v2527 = vpack.c.b16 %v2482, %v2479
    %v2528 = vpack.c.b16 %v2483, %v2480
    %v2529 = vpack.c.b16 %v2487, %v2484
    %v2530 = vpack.c.b16 %v2488, %v2485
    %v2531 = vpack.c.b16 %v2489, %v2486
    %v2532 = vpack.c.b16 %v2493, %v2490
    %v2533 = vpack.c.b16 %v2494, %v2491
    %v2534 = vpack.c.b16 %v2495, %v2492
    %v2535 = vpack.c.b16 %v2499, %v2496
    %v2536 = vpack.c.b16 %v2500, %v2497
    %v2537 = vpack.c.b16 %v2501, %v2498
    %v2538 = vpack.c.b16 %v2505, %v2502
    %v2539 = vpack.c.b16 %v2506, %v2503
    %v2540 = vpack.c.b16 %v2507, %v2504
    %v2541 = vpack.c.b16 %v2511, %v2508
    %v2542 = vpack.c.b16 %v2512, %v2509
    %v2543 = vpack.c.b16 %v2513, %v2510
    %v2544 = vpack.c.b16 %v2517, %v2514
    %v2545 = vpack.c.b16 %v2518, %v2515
    %v2546 = vpack.c.b16 %v2519, %v2516
    %v2547 = vpack.c.b16 %v2523, %v2520
    %v2548 = vpack.c.b16 %v2524, %v2521
    %v2549 = vpack.c.b16 %v2525, %v2522
    %2574 = vmatprep.subr.bf16.mxu0 %v2527
    %2575 = vmatpush1.bf16.msra.mxu0 %v2526
    %2576 = vmatprep.subr.bf16.mxu0 %v2530
    %2577 = vmatpush1.bf16.msra.mxu0 %v2529
    %2578 = vmatprep.subr.bf16.mxu0 %v2533
    %2579 = vmatpush1.bf16.msra.mxu0 %v2532
    %2580 = vmatprep.subr.bf16.mxu0 %v2536
    %2581 = vmatpush1.bf16.msra.mxu0 %v2535
    %2582 = vmatprep.subr.bf16.mxu0 %v2539
    %2583 = vmatpush1.bf16.msra.mxu0 %v2538
    %2584 = vmatprep.subr.bf16.mxu0 %v2542
    %2585 = vmatpush1.bf16.msra.mxu0 %v2541
    %2586 = vmatprep.subr.bf16.mxu0 %v2545
    %2587 = vmatpush1.bf16.msra.mxu0 %v2544
    %2588 = vmatprep.subr.bf16.mxu0 %v2548
    %2589 = vmatpush1.bf16.msra.mxu0 %v2547
    %2590 = vmatprep.subr.bf16.mxu0 0
    %2591 = vmatpush1.bf16.msra.mxu0 0
    %2592 = vmatprep.subr.bf16.mxu0 0
    %2593 = vmatpush1.bf16.msra.mxu0 0
    %2594 = vmatprep.subr.bf16.mxu0 0
    %2595 = vmatpush1.bf16.msra.mxu0 0
    %2596 = vmatprep.subr.bf16.mxu0 0
    %2597 = vmatpush1.bf16.msra.mxu0 0
    %2598 = vmatprep.subr.bf16.mxu0 0
    %2599 = vmatpush1.bf16.msra.mxu0 0
    %2600 = vmatprep.subr.bf16.mxu0 0
    %2601 = vmatpush1.bf16.msra.mxu0 0
    %2602 = vmatprep.subr.bf16.mxu0 0
    %2603 = vmatpush1.bf16.msra.mxu0 0
    %2604 = vmatprep.subr.bf16.mxu0 0
    %2605 = vmatpush1.bf16.msra.mxu0 0
    %2606 = vmatprep.mubr.bf16.mxu0 0
    %2607 = vmatmul.mubr.bf16.gmra.mrb[0].mxu0 %v2393
    %v2608 = vpop.f32.mrb[0].mxu0
    %v2609 = vadd.f32 %v2434, %v2608
    %v2610 = vpop.f32.mrb[0].mxu0
    %v2611 = vadd.f32 %v2438, %v2610
    %v2612 = vpop.f32.mrb[0].mxu0
    %v2613 = vadd.f32 %v2434, %v2612
    %v2614 = vpop.f32.mrb[0].mxu0
    %v2615 = vadd.f32 %v2438, %v2614
    %2616 = vmatprep.mubr.bf16.mxu0 0
    %2617 = vmatmul.mubr.bf16.gmra.mrb[0].mxu0 %v2394
    %v2618 = vpop.f32.mrb[0].mxu0
    %v2619 = vadd.f32 %v2434, %v2618
    %v2620 = vpop.f32.mrb[0].mxu0
    %v2621 = vadd.f32 %v2438, %v2620
    %v2622 = vpop.f32.mrb[0].mxu0
    %v2623 = vadd.f32 %v2434, %v2622
    %v2624 = vpop.f32.mrb[0].mxu0
    %v2625 = vadd.f32 %v2438, %v2624
    %2626 = vdwg.mxu0
    %2627 = vmatprep.subr.bf16.mxu0 0
    %2628 = vmatpush1.bf16.msra.mxu0 %v2528
    %2629 = vmatprep.subr.bf16.mxu0 0
    %2630 = vmatpush1.bf16.msra.mxu0 %v2531
    %2631 = vmatprep.subr.bf16.mxu0 0
    %2632 = vmatpush1.bf16.msra.mxu0 %v2534
    %2633 = vmatprep.subr.bf16.mxu0 0
    %2634 = vmatpush1.bf16.msra.mxu0 %v2537
    %2635 = vmatprep.subr.bf16.mxu0 0
    %2636 = vmatpush1.bf16.msra.mxu0 %v2540
    %2637 = vmatprep.subr.bf16.mxu0 0
    %2638 = vmatpush1.bf16.msra.mxu0 %v2543
    %2639 = vmatprep.subr.bf16.mxu0 0
    %2640 = vmatpush1.bf16.msra.mxu0 %v2546
    %2641 = vmatprep.subr.bf16.mxu0 0
    %2642 = vmatpush1.bf16.msra.mxu0 %v2549
    %2643 = vmatprep.subr.bf16.mxu0 0
    %2644 = vmatpush1.bf16.msra.mxu0 0
    %2645 = vmatprep.subr.bf16.mxu0 0
    %2646 = vmatpush1.bf16.msra.mxu0 0
    %2647 = vmatprep.subr.bf16.mxu0 0
    %2648 = vmatpush1.bf16.msra.mxu0 0
    %2649 = vmatprep.subr.bf16.mxu0 0
    %2650 = vmatpush1.bf16.msra.mxu0 0
    %2651 = vmatprep.subr.bf16.mxu0 0
    %2652 = vmatpush1.bf16.msra.mxu0 0
    %2653 = vmatprep.subr.bf16.mxu0 0
    %2654 = vmatpush1.bf16.msra.mxu0 0
    %2655 = vmatprep.subr.bf16.mxu0 0
    %2656 = vmatpush1.bf16.msra.mxu0 0
    %2657 = vmatprep.subr.bf16.mxu0 0
    %2658 = vmatpush1.bf16.msra.mxu0 0
    %2659 = vmatprep.mubr.bf16.mxu0 0
    %2660 = vmatmul.mubr.bf16.gmra.mrb[0].mxu0 %v2393
    %v2661 = vpop.f32.mrb[0].mxu0
    %v2662 = vadd.f32 %v2442, %v2661
    %v2663 = vpop.f32.mrb[0].mxu0
    %v2664 = vpop.f32.mrb[0].mxu0
    %v2665 = vadd.f32 %v2442, %v2664
    %v2666 = vpop.f32.mrb[0].mxu0
    %2667 = vmatprep.mubr.bf16.mxu0 0
    %2668 = vmatmul.mubr.bf16.gmra.mrb[0].mxu0 %v2394
    %v2669 = vpop.f32.mrb[0].mxu0
    %v2670 = vadd.f32 %v2442, %v2669
    %v2671 = vpop.f32.mrb[0].mxu0
    %v2672 = vpop.f32.mrb[0].mxu0
    %v2673 = vadd.f32 %v2442, %v2672
    %v2674 = vpop.f32.mrb[0].mxu0
    %2675 = vdwg.mxu0
    %v2676 = vpack.c.bf16 %v2613, %v2609
    %v2677 = vpack.c.bf16 %v2623, %v2619
    %v2678 = vpack.c.bf16 %v2615, %v2611
    %v2679 = vpack.c.bf16 %v2625, %v2621
    %v2681 = vsel %vm446, %v2676, 0
    %v2684 = vsel %vm446, %v2677, 0
    %v2687 = vsel %vm446, %v2678, 0
    %v2690 = vsel %vm446, %v2679, 0
    %2692 = vmatprep.subr.bf16.mxu0 0
    %2693 = vmatpush1.bf16.xpose.msra.mxu0 %v2687
    %2694 = vmatprep.subr.bf16.mxu0 0
    %2695 = vmatpush1.bf16.xpose.msra.mxu0 %v2690
    %2696 = vmatprep.subr.bf16.mxu0 0
    %2697 = vmatpush1.bf16.xpose.msra.mxu0 0
    %2698 = vmatprep.subr.bf16.mxu0 0
    %2699 = vmatpush1.bf16.xpose.msra.mxu0 0
    %2700 = vmatprep.subr.bf16.mxu0 0
    %2701 = vmatpush1.bf16.xpose.msra.mxu0 0
    %2702 = vmatprep.subr.bf16.mxu0 0
    %2703 = vmatpush1.bf16.xpose.msra.mxu0 0
    %2704 = vmatprep.subr.bf16.mxu0 0
    %2705 = vmatpush1.bf16.xpose.msra.mxu0 0
    %2706 = vmatprep.subr.bf16.mxu0 0
    %2707 = vmatpush1.bf16.xpose.msra.mxu0 0
    %2708 = vmatprep.subr.bf16.mxu0 0
    %2709 = vmatpush1.bf16.xpose.msra.mxu0 0
    %2710 = vmatprep.subr.bf16.mxu0 0
    %2711 = vmatpush1.bf16.xpose.msra.mxu0 0
    %2712 = vmatprep.subr.bf16.mxu0 0
    %2713 = vmatpush1.bf16.xpose.msra.mxu0 0
    %2714 = vmatprep.subr.bf16.mxu0 0
    %2715 = vmatpush1.bf16.xpose.msra.mxu0 0
    %2716 = vmatprep.subr.bf16.mxu0 0
    %2717 = vmatpush1.bf16.xpose.msra.mxu0 0
    %2718 = vmatprep.subr.bf16.mxu0 0
    %2719 = vmatpush1.bf16.xpose.msra.mxu0 0
    %2720 = vmatprep.subr.bf16.mxu0 0
    %2721 = vmatpush1.bf16.xpose.msra.mxu0 0
    %2722 = vmatprep.subr.bf16.mxu0 0
    %2723 = vmatpush1.bf16.xpose.msra.mxu0 0
    %2724 = vmatprep.mubr.bf16.mxu0 0
    %2725 = vmatmul.mubr.bf16.gmra.mrb[0].mxu0 %v2681
    %v2726 = vpop.f32.mrb[0].mxu0
    %v2727 = vadd.f32 0.0, %v2726
    %v2728 = vpop.f32.mrb[0].mxu0
    %v2729 = vpop.f32.mrb[0].mxu0
    %v2730 = vadd.f32 0.0, %v2729
    %v2731 = vpop.f32.mrb[0].mxu0
    %2732 = vmatprep.mubr.bf16.mxu0 0
    %2733 = vmatmul.mubr.bf16.gmra.mrb[0].mxu0 %v2684
    %v2734 = vpop.f32.mrb[0].mxu0
    %v2735 = vadd.f32 0.0, %v2734
    %v2736 = vpop.f32.mrb[0].mxu0
    %v2737 = vpop.f32.mrb[0].mxu0
    %v2738 = vadd.f32 0.0, %v2737
    %v2739 = vpop.f32.mrb[0].mxu0
    %2740 = vdwg.mxu0
    %2743 = vrot.lane.b32.xlu0 %v2676, 96
    %v2744 = vpop.permute.xlu0 %2743
    %2745 = vrot.lane.b32.xlu0 %v2677, 96
    %v2746 = vpop.permute.xlu0 %2745
    %2749 = vrot.lane.b32.xlu0 %v2678, 96
    %v2750 = vpop.permute.xlu0 %2749
    %2751 = vrot.lane.b32.xlu0 %v2679, 96
    %v2752 = vpop.permute.xlu0 %2751
    %v2754 = vsel %vm446, %v2744, 0
    %v2757 = vsel %vm446, %v2746, 0
    %v2760 = vsel %vm446, %v2750, 0
    %v2763 = vsel %vm446, %v2752, 0
    %2765 = vmatprep.subr.bf16.mxu0 0
    %2766 = vmatpush1.bf16.xpose.msra.mxu0 %v2760
    %2767 = vmatprep.subr.bf16.mxu0 0
    %2768 = vmatpush1.bf16.xpose.msra.mxu0 %v2763
    %2769 = vmatprep.subr.bf16.mxu0 0
    %2770 = vmatpush1.bf16.xpose.msra.mxu0 0
    %2771 = vmatprep.subr.bf16.mxu0 0
    %2772 = vmatpush1.bf16.xpose.msra.mxu0 0
    %2773 = vmatprep.subr.bf16.mxu0 0
    %2774 = vmatpush1.bf16.xpose.msra.mxu0 0
    %2775 = vmatprep.subr.bf16.mxu0 0
    %2776 = vmatpush1.bf16.xpose.msra.mxu0 0
    %2777 = vmatprep.subr.bf16.mxu0 0
    %2778 = vmatpush1.bf16.xpose.msra.mxu0 0
    %2779 = vmatprep.subr.bf16.mxu0 0
    %2780 = vmatpush1.bf16.xpose.msra.mxu0 0
    %2781 = vmatprep.subr.bf16.mxu0 0
    %2782 = vmatpush1.bf16.xpose.msra.mxu0 0
    %2783 = vmatprep.subr.bf16.mxu0 0
    %2784 = vmatpush1.bf16.xpose.msra.mxu0 0
    %2785 = vmatprep.subr.bf16.mxu0 0
    %2786 = vmatpush1.bf16.xpose.msra.mxu0 0
    %2787 = vmatprep.subr.bf16.mxu0 0
    %2788 = vmatpush1.bf16.xpose.msra.mxu0 0
    %2789 = vmatprep.subr.bf16.mxu0 0
    %2790 = vmatpush1.bf16.xpose.msra.mxu0 0
    %2791 = vmatprep.subr.bf16.mxu0 0
    %2792 = vmatpush1.bf16.xpose.msra.mxu0 0
    %2793 = vmatprep.subr.bf16.mxu0 0
    %2794 = vmatpush1.bf16.xpose.msra.mxu0 0
    %2795 = vmatprep.subr.bf16.mxu0 0
    %2796 = vmatpush1.bf16.xpose.msra.mxu0 0
    %2797 = vmatprep.mubr.bf16.mxu0 0
    %2798 = vmatmul.mubr.bf16.gmra.mrb[0].mxu0 %v2754
    %v2799 = vpop.f32.mrb[0].mxu0
    %v2800 = vadd.f32 0.0, %v2799
    %v2801 = vpop.f32.mrb[0].mxu0
    %v2802 = vpop.f32.mrb[0].mxu0
    %v2803 = vadd.f32 0.0, %v2802
    %v2804 = vpop.f32.mrb[0].mxu0
    %2805 = vmatprep.mubr.bf16.mxu0 0
    %2806 = vmatmul.mubr.bf16.gmra.mrb[0].mxu0 %v2757
    %v2807 = vpop.f32.mrb[0].mxu0
    %v2808 = vadd.f32 0.0, %v2807
    %v2809 = vpop.f32.mrb[0].mxu0
    %v2810 = vpop.f32.mrb[0].mxu0
    %v2811 = vadd.f32 0.0, %v2810
    %v2812 = vpop.f32.mrb[0].mxu0
    %2813 = vdwg.mxu0
    %2814 = vrot.lane.b32.xlu0 %v2676, 64
    %v2815 = vpop.permute.xlu0 %2814
    %2816 = vrot.lane.b32.xlu0 %v2677, 64
    %v2817 = vpop.permute.xlu0 %2816
    %2818 = vrot.lane.b32.xlu0 %v2678, 64
    %v2819 = vpop.permute.xlu0 %2818
    %2820 = vrot.lane.b32.xlu0 %v2679, 64
    %v2821 = vpop.permute.xlu0 %2820
    %v2823 = vsel %vm446, %v2815, 0
    %v2826 = vsel %vm446, %v2817, 0
    %v2829 = vsel %vm446, %v2819, 0
    %v2832 = vsel %vm446, %v2821, 0
    %2834 = vmatprep.subr.bf16.mxu0 0
    %2835 = vmatpush1.bf16.xpose.msra.mxu0 %v2829
    %2836 = vmatprep.subr.bf16.mxu0 0
    %2837 = vmatpush1.bf16.xpose.msra.mxu0 %v2832
    %2838 = vmatprep.subr.bf16.mxu0 0
    %2839 = vmatpush1.bf16.xpose.msra.mxu0 0
    %2840 = vmatprep.subr.bf16.mxu0 0
    %2841 = vmatpush1.bf16.xpose.msra.mxu0 0
    %2842 = vmatprep.subr.bf16.mxu0 0
    %2843 = vmatpush1.bf16.xpose.msra.mxu0 0
    %2844 = vmatprep.subr.bf16.mxu0 0
    %2845 = vmatpush1.bf16.xpose.msra.mxu0 0
    %2846 = vmatprep.subr.bf16.mxu0 0
    %2847 = vmatpush1.bf16.xpose.msra.mxu0 0
    %2848 = vmatprep.subr.bf16.mxu0 0
    %2849 = vmatpush1.bf16.xpose.msra.mxu0 0
    %2850 = vmatprep.subr.bf16.mxu0 0
    %2851 = vmatpush1.bf16.xpose.msra.mxu0 0
    %2852 = vmatprep.subr.bf16.mxu0 0
    %2853 = vmatpush1.bf16.xpose.msra.mxu0 0
    %2854 = vmatprep.subr.bf16.mxu0 0
    %2855 = vmatpush1.bf16.xpose.msra.mxu0 0
    %2856 = vmatprep.subr.bf16.mxu0 0
    %2857 = vmatpush1.bf16.xpose.msra.mxu0 0
    %2858 = vmatprep.subr.bf16.mxu0 0
    %2859 = vmatpush1.bf16.xpose.msra.mxu0 0
    %2860 = vmatprep.subr.bf16.mxu0 0
    %2861 = vmatpush1.bf16.xpose.msra.mxu0 0
    %2862 = vmatprep.subr.bf16.mxu0 0
    %2863 = vmatpush1.bf16.xpose.msra.mxu0 0
    %2864 = vmatprep.subr.bf16.mxu0 0
    %2865 = vmatpush1.bf16.xpose.msra.mxu0 0
    %2866 = vmatprep.mubr.bf16.mxu0 0
    %2867 = vmatmul.mubr.bf16.gmra.mrb[0].mxu0 %v2823
    %v2868 = vpop.f32.mrb[0].mxu0
    %v2869 = vadd.f32 0.0, %v2868
    %v2870 = vpop.f32.mrb[0].mxu0
    %v2871 = vpop.f32.mrb[0].mxu0
    %v2872 = vadd.f32 0.0, %v2871
    %v2873 = vpop.f32.mrb[0].mxu0
    %2874 = vmatprep.mubr.bf16.mxu0 0
    %2875 = vmatmul.mubr.bf16.gmra.mrb[0].mxu0 %v2826
    %v2876 = vpop.f32.mrb[0].mxu0
    %v2877 = vadd.f32 0.0, %v2876
    %v2878 = vpop.f32.mrb[0].mxu0
    %v2879 = vpop.f32.mrb[0].mxu0
    %v2880 = vadd.f32 0.0, %v2879
    %v2881 = vpop.f32.mrb[0].mxu0
    %2882 = vdwg.mxu0
    %2883 = vrot.lane.b32.xlu0 %v2676, 32
    %v2884 = vpop.permute.xlu0 %2883
    %2885 = vrot.lane.b32.xlu0 %v2677, 32
    %v2886 = vpop.permute.xlu0 %2885
    %2887 = vrot.lane.b32.xlu0 %v2678, 32
    %v2888 = vpop.permute.xlu0 %2887
    %2889 = vrot.lane.b32.xlu0 %v2679, 32
    %v2890 = vpop.permute.xlu0 %2889
    %v2892 = vsel %vm446, %v2884, 0
    %v2895 = vsel %vm446, %v2886, 0
    %v2898 = vsel %vm446, %v2888, 0
    %v2901 = vsel %vm446, %v2890, 0
    %2903 = vmatprep.subr.bf16.mxu0 0
    %2904 = vmatpush1.bf16.xpose.msra.mxu0 %v2898
    %2905 = vmatprep.subr.bf16.mxu0 0
    %2906 = vmatpush1.bf16.xpose.msra.mxu0 %v2901
    %2907 = vmatprep.subr.bf16.mxu0 0
    %2908 = vmatpush1.bf16.xpose.msra.mxu0 0
    %2909 = vmatprep.subr.bf16.mxu0 0
    %2910 = vmatpush1.bf16.xpose.msra.mxu0 0
    %2911 = vmatprep.subr.bf16.mxu0 0
    %2912 = vmatpush1.bf16.xpose.msra.mxu0 0
    %2913 = vmatprep.subr.bf16.mxu0 0
    %2914 = vmatpush1.bf16.xpose.msra.mxu0 0
    %2915 = vmatprep.subr.bf16.mxu0 0
    %2916 = vmatpush1.bf16.xpose.msra.mxu0 0
    %2917 = vmatprep.subr.bf16.mxu0 0
    %2918 = vmatpush1.bf16.xpose.msra.mxu0 0
    %2919 = vmatprep.subr.bf16.mxu0 0
    %2920 = vmatpush1.bf16.xpose.msra.mxu0 0
    %2921 = vmatprep.subr.bf16.mxu0 0
    %2922 = vmatpush1.bf16.xpose.msra.mxu0 0
    %2923 = vmatprep.subr.bf16.mxu0 0
    %2924 = vmatpush1.bf16.xpose.msra.mxu0 0
    %2925 = vmatprep.subr.bf16.mxu0 0
    %2926 = vmatpush1.bf16.xpose.msra.mxu0 0
    %2927 = vmatprep.subr.bf16.mxu0 0
    %2928 = vmatpush1.bf16.xpose.msra.mxu0 0
    %2929 = vmatprep.subr.bf16.mxu0 0
    %2930 = vmatpush1.bf16.xpose.msra.mxu0 0
    %2931 = vmatprep.subr.bf16.mxu0 0
    %2932 = vmatpush1.bf16.xpose.msra.mxu0 0
    %2933 = vmatprep.subr.bf16.mxu0 0
    %2934 = vmatpush1.bf16.xpose.msra.mxu0 0
    %2935 = vmatprep.mubr.bf16.mxu0 0
    %2936 = vmatmul.mubr.bf16.gmra.mrb[0].mxu0 %v2892
    %v2937 = vpop.f32.mrb[0].mxu0
    %v2938 = vadd.f32 0.0, %v2937
    %v2939 = vpop.f32.mrb[0].mxu0
    %v2940 = vpop.f32.mrb[0].mxu0
    %v2941 = vadd.f32 0.0, %v2940
    %v2942 = vpop.f32.mrb[0].mxu0
    %2943 = vmatprep.mubr.bf16.mxu0 0
    %2944 = vmatmul.mubr.bf16.gmra.mrb[0].mxu0 %v2895
    %v2945 = vpop.f32.mrb[0].mxu0
    %v2946 = vadd.f32 0.0, %v2945
    %v2947 = vpop.f32.mrb[0].mxu0
    %v2948 = vpop.f32.mrb[0].mxu0
    %v2949 = vadd.f32 0.0, %v2948
    %v2950 = vpop.f32.mrb[0].mxu0
    %2951 = vdwg.mxu0
    %2956 = vrot.lane.b32.xlu0 %v2800, 32
    %v2957 = vpop.permute.xlu0 %2956
    %2958 = vrot.lane.b32.xlu0 %v2803, 32
    %v2959 = vpop.permute.xlu0 %2958
    %2960 = vrot.lane.b32.xlu0 %v2808, 32
    %v2961 = vpop.permute.xlu0 %2960
    %2962 = vrot.lane.b32.xlu0 %v2811, 32
    %v2963 = vpop.permute.xlu0 %2962
    %2972 = vrot.lane.b32.xlu0 %v2869, 64
    %v2973 = vpop.permute.xlu0 %2972
    %2974 = vrot.lane.b32.xlu0 %v2872, 64
    %v2975 = vpop.permute.xlu0 %2974
    %2976 = vrot.lane.b32.xlu0 %v2877, 64
    %v2977 = vpop.permute.xlu0 %2976
    %2978 = vrot.lane.b32.xlu0 %v2880, 64
    %v2979 = vpop.permute.xlu0 %2978
    %2988 = vrot.lane.b32.xlu0 %v2938, 96
    %v2989 = vpop.permute.xlu0 %2988
    %2990 = vrot.lane.b32.xlu0 %v2941, 96
    %v2991 = vpop.permute.xlu0 %2990
    %2992 = vrot.lane.b32.xlu0 %v2946, 96
    %v2993 = vpop.permute.xlu0 %2992
    %2994 = vrot.lane.b32.xlu0 %v2949, 96
    %v2995 = vpop.permute.xlu0 %2994
    %v3000 = vsel %vm446, %v2727, %v2957
    %v3001 = vsel %vm446, %v2730, %v2959
    %v3002 = vsel %vm446, %v2735, %v2961
    %v3003 = vsel %vm446, %v2738, %v2963
    %v3004 = vsel %vm771, %v3000, %v2973
    %v3005 = vsel %vm771, %v3001, %v2975
    %v3006 = vsel %vm771, %v3002, %v2977
    %v3007 = vsel %vm771, %v3003, %v2979
    %v3008 = vsel %vm776, %v3004, %v2989
    %v3009 = vsel %vm776, %v3005, %v2991
    %v3010 = vsel %vm776, %v3006, %v2993
    %v3011 = vsel %vm776, %v3007, %v2995
    %v3012 = vmul.f32 %v3008, 0.17677669
    %v3013 = vmul.f32 %v3009, 0.17677669
    %v3014 = vmul.f32 %v3010, 0.17677669
    %v3015 = vmul.f32 %v3011, 0.17677669
    %v3016 = vadd.f32 %v3012, %v90
    %v3017 = vadd.f32 %v3013, %v91
    %v3018 = vadd.f32 %v3014, %v92
    %v3019 = vadd.f32 %v3015, %v93
    %v3020 = vsel %vm446, %v3016, -inf
    %3021 = vmax.xlane.f32.xlu0 %v3020
    %v3022 = vpop.xlane.xlu0 %3021
    %v3023 = vsel %vm446, %v3017, -inf
    %3024 = vmax.xlane.f32.xlu0 %v3023
    %v3025 = vpop.xlane.xlu0 %3024
    %v3026 = vsel %vm446, %v3018, -inf
    %3027 = vmax.xlane.f32.xlu0 %v3026
    %v3028 = vpop.xlane.xlu0 %3027
    %v3029 = vsel %vm446, %v3019, -inf
    %3030 = vmax.xlane.f32.xlu0 %v3029
    %v3031 = vpop.xlane.xlu0 %3030
    %v3032 = vsel %vm801, %v3016, -inf
    %3033 = vmax.xlane.f32.xlu0 %v3032
    %v3034 = vpop.xlane.xlu0 %3033
    %v3035 = vsel %vm801, %v3017, -inf
    %3036 = vmax.xlane.f32.xlu0 %v3035
    %v3037 = vpop.xlane.xlu0 %3036
    %v3038 = vsel %vm801, %v3018, -inf
    %3039 = vmax.xlane.f32.xlu0 %v3038
    %v3040 = vpop.xlane.xlu0 %3039
    %v3041 = vsel %vm801, %v3019, -inf
    %3042 = vmax.xlane.f32.xlu0 %v3041
    %v3043 = vpop.xlane.xlu0 %3042
    %v3044 = vsel %vm814, %v3016, -inf
    %3045 = vmax.xlane.f32.xlu0 %v3044
    %v3046 = vpop.xlane.xlu0 %3045
    %v3047 = vsel %vm814, %v3017, -inf
    %3048 = vmax.xlane.f32.xlu0 %v3047
    %v3049 = vpop.xlane.xlu0 %3048
    %v3050 = vsel %vm814, %v3018, -inf
    %3051 = vmax.xlane.f32.xlu0 %v3050
    %v3052 = vpop.xlane.xlu0 %3051
    %v3053 = vsel %vm814, %v3019, -inf
    %3054 = vmax.xlane.f32.xlu0 %v3053
    %v3055 = vpop.xlane.xlu0 %3054
    %v3056 = vsel %vm827, %v3016, -inf
    %3057 = vmax.xlane.f32.xlu0 %v3056
    %v3058 = vpop.xlane.xlu0 %3057
    %v3059 = vsel %vm827, %v3017, -inf
    %3060 = vmax.xlane.f32.xlu0 %v3059
    %v3061 = vpop.xlane.xlu0 %3060
    %v3062 = vsel %vm827, %v3018, -inf
    %3063 = vmax.xlane.f32.xlu0 %v3062
    %v3064 = vpop.xlane.xlu0 %3063
    %v3065 = vsel %vm827, %v3019, -inf
    %3066 = vmax.xlane.f32.xlu0 %v3065
    %v3067 = vpop.xlane.xlu0 %3066
    %v3068 = vsel %vm446, %v3022, %v3034
    %v3069 = vsel %vm446, %v3025, %v3037
    %v3070 = vsel %vm446, %v3028, %v3040
    %v3071 = vsel %vm446, %v3031, %v3043
    %v3072 = vsel %vm771, %v3068, %v3046
    %v3073 = vsel %vm771, %v3069, %v3049
    %v3074 = vsel %vm771, %v3070, %v3052
    %v3075 = vsel %vm771, %v3071, %v3055
    %v3076 = vsel %vm776, %v3072, %v3058
    %v3077 = vsel %vm776, %v3073, %v3061
    %v3078 = vsel %vm776, %v3074, %v3064
    %v3079 = vsel %vm776, %v3075, %v3067
    %v3080 = vsub.f32 %v3016, %v3076
    %v3081 = vsub.f32 %v3017, %v3077
    %v3082 = vsub.f32 %v3018, %v3078
    %v3083 = vsub.f32 %v3019, %v3079
    %v3084 = vmul.f32 %v3080, 1.442695
    %v3085 = vpow.pop %v3084
    %v3086 = vmul.f32 %v3081, 1.442695
    %v3087 = vpow.pop %v3086
    %v3088 = vmul.f32 %v3082, 1.442695
    %v3089 = vpow.pop %v3088
    %v3090 = vmul.f32 %v3083, 1.442695
    %v3091 = vpow.pop %v3090
    %v3092 = vsel %vm446, %v3085, 0.0
    %3093 = vadd.xlane.f32.xlu0 %v3092
    %v3094 = vpop.xlane.xlu0 %3093
    %v3095 = vsel %vm446, %v3087, 0.0
    %3096 = vadd.xlane.f32.xlu0 %v3095
    %v3097 = vpop.xlane.xlu0 %3096
    %v3098 = vsel %vm446, %v3089, 0.0
    %3099 = vadd.xlane.f32.xlu0 %v3098
    %v3100 = vpop.xlane.xlu0 %3099
    %v3101 = vsel %vm446, %v3091, 0.0
    %3102 = vadd.xlane.f32.xlu0 %v3101
    %v3103 = vpop.xlane.xlu0 %3102
    %3108 = vrot.lane.b32.xlu0 %v3085, 96
    %v3109 = vpop.permute.xlu0 %3108
    %3110 = vrot.lane.b32.xlu0 %v3087, 96
    %v3111 = vpop.permute.xlu0 %3110
    %3112 = vrot.lane.b32.xlu0 %v3089, 96
    %v3113 = vpop.permute.xlu0 %3112
    %3114 = vrot.lane.b32.xlu0 %v3091, 96
    %v3115 = vpop.permute.xlu0 %3114
    %v3120 = vsel %vm446, %v3109, 0.0
    %3121 = vadd.xlane.f32.xlu0 %v3120
    %v3122 = vpop.xlane.xlu0 %3121
    %v3123 = vsel %vm446, %v3111, 0.0
    %3124 = vadd.xlane.f32.xlu0 %v3123
    %v3125 = vpop.xlane.xlu0 %3124
    %v3126 = vsel %vm446, %v3113, 0.0
    %3127 = vadd.xlane.f32.xlu0 %v3126
    %v3128 = vpop.xlane.xlu0 %3127
    %v3129 = vsel %vm446, %v3115, 0.0
    %3130 = vadd.xlane.f32.xlu0 %v3129
    %v3131 = vpop.xlane.xlu0 %3130
    %3132 = vrot.lane.b32.xlu0 %v3085, 64
    %v3133 = vpop.permute.xlu0 %3132
    %3134 = vrot.lane.b32.xlu0 %v3087, 64
    %v3135 = vpop.permute.xlu0 %3134
    %3136 = vrot.lane.b32.xlu0 %v3089, 64
    %v3137 = vpop.permute.xlu0 %3136
    %3138 = vrot.lane.b32.xlu0 %v3091, 64
    %v3139 = vpop.permute.xlu0 %3138
    %v3144 = vsel %vm446, %v3133, 0.0
    %3145 = vadd.xlane.f32.xlu0 %v3144
    %v3146 = vpop.xlane.xlu0 %3145
    %v3147 = vsel %vm446, %v3135, 0.0
    %3148 = vadd.xlane.f32.xlu0 %v3147
    %v3149 = vpop.xlane.xlu0 %3148
    %v3150 = vsel %vm446, %v3137, 0.0
    %3151 = vadd.xlane.f32.xlu0 %v3150
    %v3152 = vpop.xlane.xlu0 %3151
    %v3153 = vsel %vm446, %v3139, 0.0
    %3154 = vadd.xlane.f32.xlu0 %v3153
    %v3155 = vpop.xlane.xlu0 %3154
    %3156 = vrot.lane.b32.xlu0 %v3085, 32
    %v3157 = vpop.permute.xlu0 %3156
    %3158 = vrot.lane.b32.xlu0 %v3087, 32
    %v3159 = vpop.permute.xlu0 %3158
    %3160 = vrot.lane.b32.xlu0 %v3089, 32
    %v3161 = vpop.permute.xlu0 %3160
    %3162 = vrot.lane.b32.xlu0 %v3091, 32
    %v3163 = vpop.permute.xlu0 %3162
    %v3168 = vsel %vm446, %v3157, 0.0
    %3169 = vadd.xlane.f32.xlu0 %v3168
    %v3170 = vpop.xlane.xlu0 %3169
    %v3171 = vsel %vm446, %v3159, 0.0
    %3172 = vadd.xlane.f32.xlu0 %v3171
    %v3173 = vpop.xlane.xlu0 %3172
    %v3174 = vsel %vm446, %v3161, 0.0
    %3175 = vadd.xlane.f32.xlu0 %v3174
    %v3176 = vpop.xlane.xlu0 %3175
    %v3177 = vsel %vm446, %v3163, 0.0
    %3178 = vadd.xlane.f32.xlu0 %v3177
    %v3179 = vpop.xlane.xlu0 %3178
    %v3180 = vsel %vm446, %v3094, %v3122
    %v3181 = vsel %vm446, %v3097, %v3125
    %v3182 = vsel %vm446, %v3100, %v3128
    %v3183 = vsel %vm446, %v3103, %v3131
    %v3184 = vsel %vm771, %v3180, %v3146
    %v3185 = vsel %vm771, %v3181, %v3149
    %v3186 = vsel %vm771, %v3182, %v3152
    %v3187 = vsel %vm771, %v3183, %v3155
    %v3188 = vsel %vm776, %v3184, %v3170
    %v3189 = vsel %vm776, %v3185, %v3173
    %v3190 = vsel %vm776, %v3186, %v3176
    %v3191 = vsel %vm776, %v3187, %v3179
    %v3192 = vrcp.pop %v3188
    %v3193 = vrcp.pop %v3189
    %v3194 = vrcp.pop %v3190
    %v3195 = vrcp.pop %v3191
    %v3196 = vmul.f32 %v3085, %v3192
    %v3197 = vmul.f32 %v3087, %v3193
    %v3198 = vmul.f32 %v3089, %v3194
    %v3199 = vmul.f32 %v3091, %v3195
    %v3200 = vpack.c.bf16 %v3197, %v3196
    %v3201 = vpack.c.bf16 %v3199, %v3198
    %v3202 = vpack.c.bf16 %v2665, %v2662
    %v3203 = vpack.c.bf16 %v2673, %v2670
    %v3205 = vsel %vm446, %v3200, 0
    %v3208 = vsel %vm446, %v3201, 0
    %3210 = vmatprep.subr.bf16.mxu0 0
    %3211 = vmatpush1.bf16.msra.mxu0 %v3202
    %3212 = vmatprep.subr.bf16.mxu0 0
    %3213 = vmatpush1.bf16.msra.mxu0 %v3203
    %3214 = vmatprep.subr.bf16.mxu0 0
    %3215 = vmatpush1.bf16.msra.mxu0 0
    %3216 = vmatprep.subr.bf16.mxu0 0
    %3217 = vmatpush1.bf16.msra.mxu0 0
    %3218 = vmatprep.subr.bf16.mxu0 0
    %3219 = vmatpush1.bf16.msra.mxu0 0
    %3220 = vmatprep.subr.bf16.mxu0 0
    %3221 = vmatpush1.bf16.msra.mxu0 0
    %3222 = vmatprep.subr.bf16.mxu0 0
    %3223 = vmatpush1.bf16.msra.mxu0 0
    %3224 = vmatprep.subr.bf16.mxu0 0
    %3225 = vmatpush1.bf16.msra.mxu0 0
    %3226 = vmatprep.subr.bf16.mxu0 0
    %3227 = vmatpush1.bf16.msra.mxu0 0
    %3228 = vmatprep.subr.bf16.mxu0 0
    %3229 = vmatpush1.bf16.msra.mxu0 0
    %3230 = vmatprep.subr.bf16.mxu0 0
    %3231 = vmatpush1.bf16.msra.mxu0 0
    %3232 = vmatprep.subr.bf16.mxu0 0
    %3233 = vmatpush1.bf16.msra.mxu0 0
    %3234 = vmatprep.subr.bf16.mxu0 0
    %3235 = vmatpush1.bf16.msra.mxu0 0
    %3236 = vmatprep.subr.bf16.mxu0 0
    %3237 = vmatpush1.bf16.msra.mxu0 0
    %3238 = vmatprep.subr.bf16.mxu0 0
    %3239 = vmatpush1.bf16.msra.mxu0 0
    %3240 = vmatprep.subr.bf16.mxu0 0
    %3241 = vmatpush1.bf16.msra.mxu0 0
    %3242 = vmatprep.mubr.bf16.mxu0 0
    %3243 = vmatmul.mubr.bf16.gmra.mrb[0].mxu0 %v3205
    %v3244 = vpop.f32.mrb[0].mxu0
    %v3245 = vadd.f32 0.0, %v3244
    %v3246 = vpop.f32.mrb[0].mxu0
    %v3247 = vpop.f32.mrb[0].mxu0
    %v3248 = vadd.f32 0.0, %v3247
    %v3249 = vpop.f32.mrb[0].mxu0
    %3250 = vmatprep.mubr.bf16.mxu0 0
    %3251 = vmatmul.mubr.bf16.gmra.mrb[0].mxu0 %v3208
    %v3252 = vpop.f32.mrb[0].mxu0
    %v3253 = vadd.f32 0.0, %v3252
    %v3254 = vpop.f32.mrb[0].mxu0
    %v3255 = vpop.f32.mrb[0].mxu0
    %v3256 = vadd.f32 0.0, %v3255
    %v3257 = vpop.f32.mrb[0].mxu0
    %3258 = vdwg.mxu0
    %3261 = vrot.lane.b32.xlu0 %v3200, 96
    %v3262 = vpop.permute.xlu0 %3261
    %3263 = vrot.lane.b32.xlu0 %v3201, 96
    %v3264 = vpop.permute.xlu0 %3263
    %3267 = vrot.lane.b32.xlu0 %v3202, 96
    %v3268 = vpop.permute.xlu0 %3267
    %3269 = vrot.lane.b32.xlu0 %v3203, 96
    %v3270 = vpop.permute.xlu0 %3269
    %v3274 = vsel %vm446, %v3262, 0
    %v3277 = vsel %vm446, %v3264, 0
    %3279 = vmatprep.subr.bf16.mxu0 0
    %3280 = vmatpush1.bf16.msra.mxu0 %v3268
    %3281 = vmatprep.subr.bf16.mxu0 0
    %3282 = vmatpush1.bf16.msra.mxu0 %v3270
    %3283 = vmatprep.subr.bf16.mxu0 0
    %3284 = vmatpush1.bf16.msra.mxu0 0
    %3285 = vmatprep.subr.bf16.mxu0 0
    %3286 = vmatpush1.bf16.msra.mxu0 0
    %3287 = vmatprep.subr.bf16.mxu0 0
    %3288 = vmatpush1.bf16.msra.mxu0 0
    %3289 = vmatprep.subr.bf16.mxu0 0
    %3290 = vmatpush1.bf16.msra.mxu0 0
    %3291 = vmatprep.subr.bf16.mxu0 0
    %3292 = vmatpush1.bf16.msra.mxu0 0
    %3293 = vmatprep.subr.bf16.mxu0 0
    %3294 = vmatpush1.bf16.msra.mxu0 0
    %3295 = vmatprep.subr.bf16.mxu0 0
    %3296 = vmatpush1.bf16.msra.mxu0 0
    %3297 = vmatprep.subr.bf16.mxu0 0
    %3298 = vmatpush1.bf16.msra.mxu0 0
    %3299 = vmatprep.subr.bf16.mxu0 0
    %3300 = vmatpush1.bf16.msra.mxu0 0
    %3301 = vmatprep.subr.bf16.mxu0 0
    %3302 = vmatpush1.bf16.msra.mxu0 0
    %3303 = vmatprep.subr.bf16.mxu0 0
    %3304 = vmatpush1.bf16.msra.mxu0 0
    %3305 = vmatprep.subr.bf16.mxu0 0
    %3306 = vmatpush1.bf16.msra.mxu0 0
    %3307 = vmatprep.subr.bf16.mxu0 0
    %3308 = vmatpush1.bf16.msra.mxu0 0
    %3309 = vmatprep.subr.bf16.mxu0 0
    %3310 = vmatpush1.bf16.msra.mxu0 0
    %3311 = vmatprep.mubr.bf16.mxu0 0
    %3312 = vmatmul.mubr.bf16.gmra.mrb[0].mxu0 %v3274
    %v3313 = vpop.f32.mrb[0].mxu0
    %v3314 = vadd.f32 0.0, %v3313
    %v3315 = vpop.f32.mrb[0].mxu0
    %v3316 = vpop.f32.mrb[0].mxu0
    %v3317 = vadd.f32 0.0, %v3316
    %v3318 = vpop.f32.mrb[0].mxu0
    %3319 = vmatprep.mubr.bf16.mxu0 0
    %3320 = vmatmul.mubr.bf16.gmra.mrb[0].mxu0 %v3277
    %v3321 = vpop.f32.mrb[0].mxu0
    %v3322 = vadd.f32 0.0, %v3321
    %v3323 = vpop.f32.mrb[0].mxu0
    %v3324 = vpop.f32.mrb[0].mxu0
    %v3325 = vadd.f32 0.0, %v3324
    %v3326 = vpop.f32.mrb[0].mxu0
    %3327 = vdwg.mxu0
    %3328 = vrot.lane.b32.xlu0 %v3200, 64
    %v3329 = vpop.permute.xlu0 %3328
    %3330 = vrot.lane.b32.xlu0 %v3201, 64
    %v3331 = vpop.permute.xlu0 %3330
    %3332 = vrot.lane.b32.xlu0 %v3202, 64
    %v3333 = vpop.permute.xlu0 %3332
    %3334 = vrot.lane.b32.xlu0 %v3203, 64
    %v3335 = vpop.permute.xlu0 %3334
    %v3339 = vsel %vm446, %v3329, 0
    %v3342 = vsel %vm446, %v3331, 0
    %3344 = vmatprep.subr.bf16.mxu0 0
    %3345 = vmatpush1.bf16.msra.mxu0 %v3333
    %3346 = vmatprep.subr.bf16.mxu0 0
    %3347 = vmatpush1.bf16.msra.mxu0 %v3335
    %3348 = vmatprep.subr.bf16.mxu0 0
    %3349 = vmatpush1.bf16.msra.mxu0 0
    %3350 = vmatprep.subr.bf16.mxu0 0
    %3351 = vmatpush1.bf16.msra.mxu0 0
    %3352 = vmatprep.subr.bf16.mxu0 0
    %3353 = vmatpush1.bf16.msra.mxu0 0
    %3354 = vmatprep.subr.bf16.mxu0 0
    %3355 = vmatpush1.bf16.msra.mxu0 0
    %3356 = vmatprep.subr.bf16.mxu0 0
    %3357 = vmatpush1.bf16.msra.mxu0 0
    %3358 = vmatprep.subr.bf16.mxu0 0
    %3359 = vmatpush1.bf16.msra.mxu0 0
    %3360 = vmatprep.subr.bf16.mxu0 0
    %3361 = vmatpush1.bf16.msra.mxu0 0
    %3362 = vmatprep.subr.bf16.mxu0 0
    %3363 = vmatpush1.bf16.msra.mxu0 0
    %3364 = vmatprep.subr.bf16.mxu0 0
    %3365 = vmatpush1.bf16.msra.mxu0 0
    %3366 = vmatprep.subr.bf16.mxu0 0
    %3367 = vmatpush1.bf16.msra.mxu0 0
    %3368 = vmatprep.subr.bf16.mxu0 0
    %3369 = vmatpush1.bf16.msra.mxu0 0
    %3370 = vmatprep.subr.bf16.mxu0 0
    %3371 = vmatpush1.bf16.msra.mxu0 0
    %3372 = vmatprep.subr.bf16.mxu0 0
    %3373 = vmatpush1.bf16.msra.mxu0 0
    %3374 = vmatprep.subr.bf16.mxu0 0
    %3375 = vmatpush1.bf16.msra.mxu0 0
    %3376 = vmatprep.mubr.bf16.mxu0 0
    %3377 = vmatmul.mubr.bf16.gmra.mrb[0].mxu0 %v3339
    %v3378 = vpop.f32.mrb[0].mxu0
    %v3379 = vadd.f32 0.0, %v3378
    %v3380 = vpop.f32.mrb[0].mxu0
    %v3381 = vpop.f32.mrb[0].mxu0
    %v3382 = vadd.f32 0.0, %v3381
    %v3383 = vpop.f32.mrb[0].mxu0
    %3384 = vmatprep.mubr.bf16.mxu0 0
    %3385 = vmatmul.mubr.bf16.gmra.mrb[0].mxu0 %v3342
    %v3386 = vpop.f32.mrb[0].mxu0
    %v3387 = vadd.f32 0.0, %v3386
    %v3388 = vpop.f32.mrb[0].mxu0
    %v3389 = vpop.f32.mrb[0].mxu0
    %v3390 = vadd.f32 0.0, %v3389
    %v3391 = vpop.f32.mrb[0].mxu0
    %3392 = vdwg.mxu0
    %3393 = vrot.lane.b32.xlu0 %v3200, 32
    %v3394 = vpop.permute.xlu0 %3393
    %3395 = vrot.lane.b32.xlu0 %v3201, 32
    %v3396 = vpop.permute.xlu0 %3395
    %3397 = vrot.lane.b32.xlu0 %v3202, 32
    %v3398 = vpop.permute.xlu0 %3397
    %3399 = vrot.lane.b32.xlu0 %v3203, 32
    %v3400 = vpop.permute.xlu0 %3399
    %v3404 = vsel %vm446, %v3394, 0
    %v3407 = vsel %vm446, %v3396, 0
    %3409 = vmatprep.subr.bf16.mxu0 0
    %3410 = vmatpush1.bf16.msra.mxu0 %v3398
    %3411 = vmatprep.subr.bf16.mxu0 0
    %3412 = vmatpush1.bf16.msra.mxu0 %v3400
    %3413 = vmatprep.subr.bf16.mxu0 0
    %3414 = vmatpush1.bf16.msra.mxu0 0
    %3415 = vmatprep.subr.bf16.mxu0 0
    %3416 = vmatpush1.bf16.msra.mxu0 0
    %3417 = vmatprep.subr.bf16.mxu0 0
    %3418 = vmatpush1.bf16.msra.mxu0 0
    %3419 = vmatprep.subr.bf16.mxu0 0
    %3420 = vmatpush1.bf16.msra.mxu0 0
    %3421 = vmatprep.subr.bf16.mxu0 0
    %3422 = vmatpush1.bf16.msra.mxu0 0
    %3423 = vmatprep.subr.bf16.mxu0 0
    %3424 = vmatpush1.bf16.msra.mxu0 0
    %3425 = vmatprep.subr.bf16.mxu0 0
    %3426 = vmatpush1.bf16.msra.mxu0 0
    %3427 = vmatprep.subr.bf16.mxu0 0
    %3428 = vmatpush1.bf16.msra.mxu0 0
    %3429 = vmatprep.subr.bf16.mxu0 0
    %3430 = vmatpush1.bf16.msra.mxu0 0
    %3431 = vmatprep.subr.bf16.mxu0 0
    %3432 = vmatpush1.bf16.msra.mxu0 0
    %3433 = vmatprep.subr.bf16.mxu0 0
    %3434 = vmatpush1.bf16.msra.mxu0 0
    %3435 = vmatprep.subr.bf16.mxu0 0
    %3436 = vmatpush1.bf16.msra.mxu0 0
    %3437 = vmatprep.subr.bf16.mxu0 0
    %3438 = vmatpush1.bf16.msra.mxu0 0
    %3439 = vmatprep.subr.bf16.mxu0 0
    %3440 = vmatpush1.bf16.msra.mxu0 0
    %3441 = vmatprep.mubr.bf16.mxu0 0
    %3442 = vmatmul.mubr.bf16.gmra.mrb[0].mxu0 %v3404
    %v3443 = vpop.f32.mrb[0].mxu0
    %v3444 = vadd.f32 0.0, %v3443
    %v3445 = vpop.f32.mrb[0].mxu0
    %v3446 = vpop.f32.mrb[0].mxu0
    %v3447 = vadd.f32 0.0, %v3446
    %v3448 = vpop.f32.mrb[0].mxu0
    %3449 = vmatprep.mubr.bf16.mxu0 0
    %3450 = vmatmul.mubr.bf16.gmra.mrb[0].mxu0 %v3407
    %v3451 = vpop.f32.mrb[0].mxu0
    %v3452 = vadd.f32 0.0, %v3451
    %v3453 = vpop.f32.mrb[0].mxu0
    %v3454 = vpop.f32.mrb[0].mxu0
    %v3455 = vadd.f32 0.0, %v3454
    %v3456 = vpop.f32.mrb[0].mxu0
    %3457 = vdwg.mxu0
    %3462 = vrot.lane.b32.xlu0 %v3314, 32
    %v3463 = vpop.permute.xlu0 %3462
    %3464 = vrot.lane.b32.xlu0 %v3317, 32
    %v3465 = vpop.permute.xlu0 %3464
    %3466 = vrot.lane.b32.xlu0 %v3322, 32
    %v3467 = vpop.permute.xlu0 %3466
    %3468 = vrot.lane.b32.xlu0 %v3325, 32
    %v3469 = vpop.permute.xlu0 %3468
    %3478 = vrot.lane.b32.xlu0 %v3379, 64
    %v3479 = vpop.permute.xlu0 %3478
    %3480 = vrot.lane.b32.xlu0 %v3382, 64
    %v3481 = vpop.permute.xlu0 %3480
    %3482 = vrot.lane.b32.xlu0 %v3387, 64
    %v3483 = vpop.permute.xlu0 %3482
    %3484 = vrot.lane.b32.xlu0 %v3390, 64
    %v3485 = vpop.permute.xlu0 %3484
    %3494 = vrot.lane.b32.xlu0 %v3444, 96
    %v3495 = vpop.permute.xlu0 %3494
    %3496 = vrot.lane.b32.xlu0 %v3447, 96
    %v3497 = vpop.permute.xlu0 %3496
    %3498 = vrot.lane.b32.xlu0 %v3452, 96
    %v3499 = vpop.permute.xlu0 %3498
    %3500 = vrot.lane.b32.xlu0 %v3455, 96
    %v3501 = vpop.permute.xlu0 %3500
    %v3506 = vsel %vm446, %v3245, %v3463
    %v3507 = vsel %vm446, %v3248, %v3465
    %v3508 = vsel %vm446, %v3253, %v3467
    %v3509 = vsel %vm446, %v3256, %v3469
    %v3510 = vsel %vm771, %v3506, %v3479
    %v3511 = vsel %vm771, %v3507, %v3481
    %v3512 = vsel %vm771, %v3508, %v3483
    %v3513 = vsel %vm771, %v3509, %v3485
    %v3514 = vsel %vm776, %v3510, %v3495
    %v3515 = vsel %vm776, %v3511, %v3497
    %v3516 = vsel %vm776, %v3512, %v3499
    %v3517 = vsel %vm776, %v3513, %v3501
    %v3518 = vpack.c.bf16 %v3515, %v3514
    %v3519 = vpack.c.bf16 %v3517, %v3516
    %s3520 = scalar_lea.vmem %s6, 64
    %v3521 = vld [vmem:[%s3520] sm:$0xf]
    %v3522 = vld [vmem:[%s3520 + $0x4] sm:$0xf]
    %v3523 = vld [vmem:[%s3520 + $0x8] sm:$0xf]
    %v3524 = vld [vmem:[%s3520 + $0xc] sm:$0xf]
    %v3525 = vld [vmem:[%s3520 + $0x10] sm:$0xf]
    %v3526 = vld [vmem:[%s3520 + $0x14] sm:$0xf]
    %v3527 = vld [vmem:[%s3520 + $0x18] sm:$0xf]
    %v3528 = vld [vmem:[%s3520 + $0x1c] sm:$0xf]
    %v3529 = vld [vmem:[%s3520 + $0x20] sm:$0xf]
    %v3530 = vld [vmem:[%s3520 + $0x24] sm:$0xf]
    %v3531 = vld [vmem:[%s3520 + $0x28] sm:$0xf]
    %v3532 = vld [vmem:[%s3520 + $0x2c] sm:$0xf]
    %v3533 = vld [vmem:[%s3520 + $0x30] sm:$0xf]
    %v3534 = vld [vmem:[%s3520 + $0x34] sm:$0xf]
    %v3535 = vld [vmem:[%s3520 + $0x38] sm:$0xf]
    %v3536 = vld [vmem:[%s3520 + $0x3c] sm:$0xf]
    %s3537 = scalar_lea.vmem %s7, 1
    %v3538 = vld [vmem:[%s3537] sm:$0x1]
    %v3540 = vlaneseq
    %v3541 = vshrl.u32 %v3540, 7
    %v3542 = vsub.s32 0, %v3541
    %v3543 = vrot.slane %v3538, %v3542
    %v3561 = vunpack.c.l.b16 %v3521
    %v3562 = vunpack.c.l.b16 %v3522
    %v3563 = vunpack.c.l.b16 %v3523
    %v3564 = vunpack.c.l.b16 %v3524
    %v3565 = vunpack.c.l.b16 %v3525
    %v3566 = vunpack.c.l.b16 %v3526
    %v3567 = vunpack.c.l.b16 %v3527
    %v3568 = vunpack.c.l.b16 %v3528
    %v3569 = vunpack.c.l.b16 %v3529
    %v3570 = vunpack.c.l.b16 %v3530
    %v3571 = vunpack.c.l.b16 %v3531
    %v3572 = vunpack.c.l.b16 %v3532
    %v3573 = vunpack.c.l.b16 %v3533
    %v3574 = vunpack.c.l.b16 %v3534
    %v3575 = vunpack.c.l.b16 %v3535
    %v3576 = vunpack.c.l.b16 %v3536
    %v3577 = vpack.c.b16 %v3562, %v3561
    %v3578 = vpack.c.b16 %v3564, %v3563
    %v3579 = vpack.c.b16 %v3566, %v3565
    %v3580 = vpack.c.b16 %v3568, %v3567
    %v3581 = vpack.c.b16 %v3570, %v3569
    %v3582 = vpack.c.b16 %v3572, %v3571
    %v3583 = vpack.c.b16 %v3574, %v3573
    %v3584 = vpack.c.b16 %v3576, %v3575
    %3593 = vmatprep.subr.bf16.mxu0 0
    %3594 = vmatpush1.bf16.msra.mxu0 %v3577
    %3595 = vmatprep.subr.bf16.mxu0 0
    %3596 = vmatpush1.bf16.msra.mxu0 %v3578
    %3597 = vmatprep.subr.bf16.mxu0 0
    %3598 = vmatpush1.bf16.msra.mxu0 %v3579
    %3599 = vmatprep.subr.bf16.mxu0 0
    %3600 = vmatpush1.bf16.msra.mxu0 %v3580
    %3601 = vmatprep.subr.bf16.mxu0 0
    %3602 = vmatpush1.bf16.msra.mxu0 %v3581
    %3603 = vmatprep.subr.bf16.mxu0 0
    %3604 = vmatpush1.bf16.msra.mxu0 %v3582
    %3605 = vmatprep.subr.bf16.mxu0 0
    %3606 = vmatpush1.bf16.msra.mxu0 %v3583
    %3607 = vmatprep.subr.bf16.mxu0 0
    %3608 = vmatpush1.bf16.msra.mxu0 %v3584
    %3609 = vmatprep.subr.bf16.mxu0 0
    %3610 = vmatpush1.bf16.msra.mxu0 0
    %3611 = vmatprep.subr.bf16.mxu0 0
    %3612 = vmatpush1.bf16.msra.mxu0 0
    %3613 = vmatprep.subr.bf16.mxu0 0
    %3614 = vmatpush1.bf16.msra.mxu0 0
    %3615 = vmatprep.subr.bf16.mxu0 0
    %3616 = vmatpush1.bf16.msra.mxu0 0
    %3617 = vmatprep.subr.bf16.mxu0 0
    %3618 = vmatpush1.bf16.msra.mxu0 0
    %3619 = vmatprep.subr.bf16.mxu0 0
    %3620 = vmatpush1.bf16.msra.mxu0 0
    %3621 = vmatprep.subr.bf16.mxu0 0
    %3622 = vmatpush1.bf16.msra.mxu0 0
    %3623 = vmatprep.subr.bf16.mxu0 0
    %3624 = vmatpush1.bf16.msra.mxu0 0
    %3625 = vmatprep.mubr.bf16.mxu0 0
    %3626 = vmatmul.mubr.bf16.gmra.mrb[0].mxu0 %v3518
    %v3627 = vpop.f32.mrb[0].mxu0
    %v3628 = vadd.f32 %v3543, %v3627
    %v3629 = vpop.f32.mrb[0].mxu0
    %v3630 = vpop.f32.mrb[0].mxu0
    %v3631 = vadd.f32 %v3543, %v3630
    %v3632 = vpop.f32.mrb[0].mxu0
    %3633 = vmatprep.mubr.bf16.mxu0 0
    %3634 = vmatmul.mubr.bf16.gmra.mrb[0].mxu0 %v3519
    %v3635 = vpop.f32.mrb[0].mxu0
    %v3636 = vadd.f32 %v3543, %v3635
    %v3637 = vpop.f32.mrb[0].mxu0
    %v3638 = vpop.f32.mrb[0].mxu0
    %v3639 = vadd.f32 %v3543, %v3638
    %v3640 = vpop.f32.mrb[0].mxu0
    %3641 = vdwg.mxu0
    %v3642 = vadd.f32 %v2321, %v3628
    %v3643 = vadd.f32 %v2322, %v3631
    %v3644 = vadd.f32 %v2323, %v3636
    %v3645 = vadd.f32 %v2324, %v3639
    %s3646 = scalar_lea.vmem %s8, 1
    %v3647 = vld [vmem:[%s3646] sm:$0x1]
    %s3648 = scalar_lea.vmem %s9, 1
    %v3649 = vld [vmem:[%s3648] sm:$0x1]
    %3650 = vadd.xlane.f32.xlu0 %v3642
    %v3651 = vpop.xlane.xlu0 %3650
    %3652 = vadd.xlane.f32.xlu0 %v3643
    %v3653 = vpop.xlane.xlu0 %3652
    %3654 = vadd.xlane.f32.xlu0 %v3644
    %v3655 = vpop.xlane.xlu0 %3654
    %3656 = vadd.xlane.f32.xlu0 %v3645
    %v3657 = vpop.xlane.xlu0 %3656
    %v3658 = vmul.f32 %v3651, %v104
    %v3659 = vmul.f32 %v3653, %v104
    %v3660 = vmul.f32 %v3655, %v104
    %v3661 = vmul.f32 %v3657, %v104
    %v3662 = vsub.f32 %v3642, %v3658
    %v3663 = vsub.f32 %v3643, %v3659
    %v3664 = vsub.f32 %v3644, %v3660
    %v3665 = vsub.f32 %v3645, %v3661
    %v3666 = vmul.f32 %v3662, %v3662
    %v3667 = vmul.f32 %v3663, %v3663
    %v3668 = vmul.f32 %v3664, %v3664
    %v3669 = vmul.f32 %v3665, %v3665
    %3670 = vadd.xlane.f32.xlu0 %v3666
    %v3671 = vpop.xlane.xlu0 %3670
    %3672 = vadd.xlane.f32.xlu0 %v3667
    %v3673 = vpop.xlane.xlu0 %3672
    %3674 = vadd.xlane.f32.xlu0 %v3668
    %v3675 = vpop.xlane.xlu0 %3674
    %3676 = vadd.xlane.f32.xlu0 %v3669
    %v3677 = vpop.xlane.xlu0 %3676
    %v3678 = vmul.f32 %v3671, %v104
    %v3679 = vmul.f32 %v3673, %v104
    %v3680 = vmul.f32 %v3675, %v104
    %v3681 = vmul.f32 %v3677, %v104
    %v3682 = vadd.f32 %v3678, 1e-05
    %v3683 = vadd.f32 %v3679, 1e-05
    %v3684 = vadd.f32 %v3680, 1e-05
    %v3685 = vadd.f32 %v3681, 1e-05
    %v3686 = vrsqrt.pop %v3682
    %v3687 = vrsqrt.pop %v3683
    %v3688 = vrsqrt.pop %v3684
    %v3689 = vrsqrt.pop %v3685
    %v3690 = vmul.f32 %v3662, %v3686
    %v3691 = vmul.f32 %v3663, %v3687
    %v3692 = vmul.f32 %v3664, %v3688
    %v3693 = vmul.f32 %v3665, %v3689
    %v3695 = vlaneseq
    %v3696 = vshrl.u32 %v3695, 7
    %v3697 = vsub.s32 0, %v3696
    %v3698 = vrot.slane %v3647, %v3697
    %v3700 = vmul.f32 %v3690, %v3698
    %v3701 = vmul.f32 %v3691, %v3698
    %v3702 = vmul.f32 %v3692, %v3698
    %v3703 = vmul.f32 %v3693, %v3698
    %v3705 = vlaneseq
    %v3706 = vshrl.u32 %v3705, 7
    %v3707 = vsub.s32 0, %v3706
    %v3708 = vrot.slane %v3649, %v3707
    %v3710 = vadd.f32 %v3700, %v3708
    %v3711 = vadd.f32 %v3701, %v3708
    %v3712 = vadd.f32 %v3702, %v3708
    %v3713 = vadd.f32 %v3703, %v3708
    %v3714 = vpack.c.bf16 %v3711, %v3710
    %v3715 = vpack.c.bf16 %v3713, %v3712
    %s3716 = scalar_lea.vmem %s10, 256
    %v3717 = vld [vmem:[%s3716] sm:$0xff]
    %v3718 = vld [vmem:[%s3716 + $0x8] sm:$0xff]
    %v3719 = vld [vmem:[%s3716 + $0x10] sm:$0xff]
    %v3720 = vld [vmem:[%s3716 + $0x18] sm:$0xff]
    %v3721 = vld [vmem:[%s3716 + $0x20] sm:$0xff]
    %v3722 = vld [vmem:[%s3716 + $0x28] sm:$0xff]
    %v3723 = vld [vmem:[%s3716 + $0x30] sm:$0xff]
    %v3724 = vld [vmem:[%s3716 + $0x38] sm:$0xff]
    %v3725 = vld [vmem:[%s3716 + $0x40] sm:$0xff]
    %v3726 = vld [vmem:[%s3716 + $0x48] sm:$0xff]
    %v3727 = vld [vmem:[%s3716 + $0x50] sm:$0xff]
    %v3728 = vld [vmem:[%s3716 + $0x58] sm:$0xff]
    %v3729 = vld [vmem:[%s3716 + $0x60] sm:$0xff]
    %v3730 = vld [vmem:[%s3716 + $0x68] sm:$0xff]
    %v3731 = vld [vmem:[%s3716 + $0x70] sm:$0xff]
    %v3732 = vld [vmem:[%s3716 + $0x78] sm:$0xff]
    %v3733 = vld [vmem:[%s3716 + $0x80] sm:$0xff]
    %v3734 = vld [vmem:[%s3716 + $0x88] sm:$0xff]
    %v3735 = vld [vmem:[%s3716 + $0x90] sm:$0xff]
    %v3736 = vld [vmem:[%s3716 + $0x98] sm:$0xff]
    %v3737 = vld [vmem:[%s3716 + $0xa0] sm:$0xff]
    %v3738 = vld [vmem:[%s3716 + $0xa8] sm:$0xff]
    %v3739 = vld [vmem:[%s3716 + $0xb0] sm:$0xff]
    %v3740 = vld [vmem:[%s3716 + $0xb8] sm:$0xff]
    %v3741 = vld [vmem:[%s3716 + $0xc0] sm:$0xff]
    %v3742 = vld [vmem:[%s3716 + $0xc8] sm:$0xff]
    %v3743 = vld [vmem:[%s3716 + $0xd0] sm:$0xff]
    %v3744 = vld [vmem:[%s3716 + $0xd8] sm:$0xff]
    %v3745 = vld [vmem:[%s3716 + $0xe0] sm:$0xff]
    %v3746 = vld [vmem:[%s3716 + $0xe8] sm:$0xff]
    %v3747 = vld [vmem:[%s3716 + $0xf0] sm:$0xff]
    %v3748 = vld [vmem:[%s3716 + $0xf8] sm:$0xff]
    %s3749 = scalar_lea.vmem %s11, 4
    %v3750 = vld [vmem:[%s3749] sm:$0xf]
    %v3752 = vlaneseq
    %v3753 = vshrl.u32 %v3752, 7
    %v3754 = vsub.s32 0, %v3753
    %v3755 = vrot.slane %v3750, %v3754
    %v3756 = vlaneseq
    %v3757 = vshrl.u32 %v3756, 7
    %v3758 = vsub.s32 1, %v3757
    %v3759 = vrot.slane %v3750, %v3758
    %v3760 = vlaneseq
    %v3761 = vshrl.u32 %v3760, 7
    %v3762 = vsub.s32 2, %v3761
    %v3763 = vrot.slane %v3750, %v3762
    %v3764 = vlaneseq
    %v3765 = vshrl.u32 %v3764, 7
    %v3766 = vsub.s32 3, %v3765
    %v3767 = vrot.slane %v3750, %v3766
    %v3804 = vunpack.c.l.b16 %v3717
    %v3805 = vunpack.c.h.b16 %v3717
    %v3806 = vunpack.c.l.b16 %v3718
    %v3807 = vunpack.c.h.b16 %v3718
    %v3808 = vunpack.c.l.b16 %v3719
    %v3809 = vunpack.c.h.b16 %v3719
    %v3810 = vunpack.c.l.b16 %v3720
    %v3811 = vunpack.c.h.b16 %v3720
    %v3812 = vunpack.c.l.b16 %v3721
    %v3813 = vunpack.c.h.b16 %v3721
    %v3814 = vunpack.c.l.b16 %v3722
    %v3815 = vunpack.c.h.b16 %v3722
    %v3816 = vunpack.c.l.b16 %v3723
    %v3817 = vunpack.c.h.b16 %v3723
    %v3818 = vunpack.c.l.b16 %v3724
    %v3819 = vunpack.c.h.b16 %v3724
    %v3820 = vunpack.c.l.b16 %v3725
    %v3821 = vunpack.c.h.b16 %v3725
    %v3822 = vunpack.c.l.b16 %v3726
    %v3823 = vunpack.c.h.b16 %v3726
    %v3824 = vunpack.c.l.b16 %v3727
    %v3825 = vunpack.c.h.b16 %v3727
    %v3826 = vunpack.c.l.b16 %v3728
    %v3827 = vunpack.c.h.b16 %v3728
    %v3828 = vunpack.c.l.b16 %v3729
    %v3829 = vunpack.c.h.b16 %v3729
    %v3830 = vunpack.c.l.b16 %v3730
    %v3831 = vunpack.c.h.b16 %v3730
    %v3832 = vunpack.c.l.b16 %v3731
    %v3833 = vunpack.c.h.b16 %v3731
    %v3834 = vunpack.c.l.b16 %v3732
    %v3835 = vunpack.c.h.b16 %v3732
    %v3836 = vunpack.c.l.b16 %v3733
    %v3837 = vunpack.c.h.b16 %v3733
    %v3838 = vunpack.c.l.b16 %v3734
    %v3839 = vunpack.c.h.b16 %v3734
    %v3840 = vunpack.c.l.b16 %v3735
    %v3841 = vunpack.c.h.b16 %v3735
    %v3842 = vunpack.c.l.b16 %v3736
    %v3843 = vunpack.c.h.b16 %v3736
    %v3844 = vunpack.c.l.b16 %v3737
    %v3845 = vunpack.c.h.b16 %v3737
    %v3846 = vunpack.c.l.b16 %v3738
    %v3847 = vunpack.c.h.b16 %v3738
    %v3848 = vunpack.c.l.b16 %v3739
    %v3849 = vunpack.c.h.b16 %v3739
    %v3850 = vunpack.c.l.b16 %v3740
    %v3851 = vunpack.c.h.b16 %v3740
    %v3852 = vunpack.c.l.b16 %v3741
    %v3853 = vunpack.c.h.b16 %v3741
    %v3854 = vunpack.c.l.b16 %v3742
    %v3855 = vunpack.c.h.b16 %v3742
    %v3856 = vunpack.c.l.b16 %v3743
    %v3857 = vunpack.c.h.b16 %v3743
    %v3858 = vunpack.c.l.b16 %v3744
    %v3859 = vunpack.c.h.b16 %v3744
    %v3860 = vunpack.c.l.b16 %v3745
    %v3861 = vunpack.c.h.b16 %v3745
    %v3862 = vunpack.c.l.b16 %v3746
    %v3863 = vunpack.c.h.b16 %v3746
    %v3864 = vunpack.c.l.b16 %v3747
    %v3865 = vunpack.c.h.b16 %v3747
    %v3866 = vunpack.c.l.b16 %v3748
    %v3867 = vunpack.c.h.b16 %v3748
    %v3868 = vpack.c.b16 %v3808, %v3804
    %v3869 = vpack.c.b16 %v3809, %v3805
    %v3870 = vpack.c.b16 %v3810, %v3806
    %v3871 = vpack.c.b16 %v3811, %v3807
    %v3872 = vpack.c.b16 %v3816, %v3812
    %v3873 = vpack.c.b16 %v3817, %v3813
    %v3874 = vpack.c.b16 %v3818, %v3814
    %v3875 = vpack.c.b16 %v3819, %v3815
    %v3876 = vpack.c.b16 %v3824, %v3820
    %v3877 = vpack.c.b16 %v3825, %v3821
    %v3878 = vpack.c.b16 %v3826, %v3822
    %v3879 = vpack.c.b16 %v3827, %v3823
    %v3880 = vpack.c.b16 %v3832, %v3828
    %v3881 = vpack.c.b16 %v3833, %v3829
    %v3882 = vpack.c.b16 %v3834, %v3830
    %v3883 = vpack.c.b16 %v3835, %v3831
    %v3884 = vpack.c.b16 %v3840, %v3836
    %v3885 = vpack.c.b16 %v3841, %v3837
    %v3886 = vpack.c.b16 %v3842, %v3838
    %v3887 = vpack.c.b16 %v3843, %v3839
    %v3888 = vpack.c.b16 %v3848, %v3844
    %v3889 = vpack.c.b16 %v3849, %v3845
    %v3890 = vpack.c.b16 %v3850, %v3846
    %v3891 = vpack.c.b16 %v3851, %v3847
    %v3892 = vpack.c.b16 %v3856, %v3852
    %v3893 = vpack.c.b16 %v3857, %v3853
    %v3894 = vpack.c.b16 %v3858, %v3854
    %v3895 = vpack.c.b16 %v3859, %v3855
    %v3896 = vpack.c.b16 %v3864, %v3860
    %v3897 = vpack.c.b16 %v3865, %v3861
    %v3898 = vpack.c.b16 %v3866, %v3862
    %v3899 = vpack.c.b16 %v3867, %v3863
    %3932 = vmatprep.subr.bf16.mxu0 %v3869
    %3933 = vmatpush1.bf16.msra.mxu0 %v3868
    %3934 = vmatprep.subr.bf16.mxu0 %v3873
    %3935 = vmatpush1.bf16.msra.mxu0 %v3872
    %3936 = vmatprep.subr.bf16.mxu0 %v3877
    %3937 = vmatpush1.bf16.msra.mxu0 %v3876
    %3938 = vmatprep.subr.bf16.mxu0 %v3881
    %3939 = vmatpush1.bf16.msra.mxu0 %v3880
    %3940 = vmatprep.subr.bf16.mxu0 %v3885
    %3941 = vmatpush1.bf16.msra.mxu0 %v3884
    %3942 = vmatprep.subr.bf16.mxu0 %v3889
    %3943 = vmatpush1.bf16.msra.mxu0 %v3888
    %3944 = vmatprep.subr.bf16.mxu0 %v3893
    %3945 = vmatpush1.bf16.msra.mxu0 %v3892
    %3946 = vmatprep.subr.bf16.mxu0 %v3897
    %3947 = vmatpush1.bf16.msra.mxu0 %v3896
    %3948 = vmatprep.subr.bf16.mxu0 0
    %3949 = vmatpush1.bf16.msra.mxu0 0
    %3950 = vmatprep.subr.bf16.mxu0 0
    %3951 = vmatpush1.bf16.msra.mxu0 0
    %3952 = vmatprep.subr.bf16.mxu0 0
    %3953 = vmatpush1.bf16.msra.mxu0 0
    %3954 = vmatprep.subr.bf16.mxu0 0
    %3955 = vmatpush1.bf16.msra.mxu0 0
    %3956 = vmatprep.subr.bf16.mxu0 0
    %3957 = vmatpush1.bf16.msra.mxu0 0
    %3958 = vmatprep.subr.bf16.mxu0 0
    %3959 = vmatpush1.bf16.msra.mxu0 0
    %3960 = vmatprep.subr.bf16.mxu0 0
    %3961 = vmatpush1.bf16.msra.mxu0 0
    %3962 = vmatprep.subr.bf16.mxu0 0
    %3963 = vmatpush1.bf16.msra.mxu0 0
    %3964 = vmatprep.mubr.bf16.mxu0 0
    %3965 = vmatmul.mubr.bf16.gmra.mrb[0].mxu0 %v3714
    %v3966 = vpop.f32.mrb[0].mxu0
    %v3967 = vadd.f32 %v3755, %v3966
    %v3968 = vpop.f32.mrb[0].mxu0
    %v3969 = vadd.f32 %v3759, %v3968
    %v3970 = vpop.f32.mrb[0].mxu0
    %v3971 = vadd.f32 %v3755, %v3970
    %v3972 = vpop.f32.mrb[0].mxu0
    %v3973 = vadd.f32 %v3759, %v3972
    %3974 = vmatprep.mubr.bf16.mxu0 0
    %3975 = vmatmul.mubr.bf16.gmra.mrb[0].mxu0 %v3715
    %v3976 = vpop.f32.mrb[0].mxu0
    %v3977 = vadd.f32 %v3755, %v3976
    %v3978 = vpop.f32.mrb[0].mxu0
    %v3979 = vadd.f32 %v3759, %v3978
    %v3980 = vpop.f32.mrb[0].mxu0
    %v3981 = vadd.f32 %v3755, %v3980
    %v3982 = vpop.f32.mrb[0].mxu0
    %v3983 = vadd.f32 %v3759, %v3982
    %3984 = vdwg.mxu0
    %3985 = vmatprep.subr.bf16.mxu0 %v3871
    %3986 = vmatpush1.bf16.msra.mxu0 %v3870
    %3987 = vmatprep.subr.bf16.mxu0 %v3875
    %3988 = vmatpush1.bf16.msra.mxu0 %v3874
    %3989 = vmatprep.subr.bf16.mxu0 %v3879
    %3990 = vmatpush1.bf16.msra.mxu0 %v3878
    %3991 = vmatprep.subr.bf16.mxu0 %v3883
    %3992 = vmatpush1.bf16.msra.mxu0 %v3882
    %3993 = vmatprep.subr.bf16.mxu0 %v3887
    %3994 = vmatpush1.bf16.msra.mxu0 %v3886
    %3995 = vmatprep.subr.bf16.mxu0 %v3891
    %3996 = vmatpush1.bf16.msra.mxu0 %v3890
    %3997 = vmatprep.subr.bf16.mxu0 %v3895
    %3998 = vmatpush1.bf16.msra.mxu0 %v3894
    %3999 = vmatprep.subr.bf16.mxu0 %v3899
    %4000 = vmatpush1.bf16.msra.mxu0 %v3898
    %4001 = vmatprep.subr.bf16.mxu0 0
    %4002 = vmatpush1.bf16.msra.mxu0 0
    %4003 = vmatprep.subr.bf16.mxu0 0
    %4004 = vmatpush1.bf16.msra.mxu0 0
    %4005 = vmatprep.subr.bf16.mxu0 0
    %4006 = vmatpush1.bf16.msra.mxu0 0
    %4007 = vmatprep.subr.bf16.mxu0 0
    %4008 = vmatpush1.bf16.msra.mxu0 0
    %4009 = vmatprep.subr.bf16.mxu0 0
    %4010 = vmatpush1.bf16.msra.mxu0 0
    %4011 = vmatprep.subr.bf16.mxu0 0
    %4012 = vmatpush1.bf16.msra.mxu0 0
    %4013 = vmatprep.subr.bf16.mxu0 0
    %4014 = vmatpush1.bf16.msra.mxu0 0
    %4015 = vmatprep.subr.bf16.mxu0 0
    %4016 = vmatpush1.bf16.msra.mxu0 0
    %4017 = vmatprep.mubr.bf16.mxu0 0
    %4018 = vmatmul.mubr.bf16.gmra.mrb[0].mxu0 %v3714
    %v4019 = vpop.f32.mrb[0].mxu0
    %v4020 = vadd.f32 %v3763, %v4019
    %v4021 = vpop.f32.mrb[0].mxu0
    %v4022 = vadd.f32 %v3767, %v4021
    %v4023 = vpop.f32.mrb[0].mxu0
    %v4024 = vadd.f32 %v3763, %v4023
    %v4025 = vpop.f32.mrb[0].mxu0
    %v4026 = vadd.f32 %v3767, %v4025
    %4027 = vmatprep.mubr.bf16.mxu0 0
    %4028 = vmatmul.mubr.bf16.gmra.mrb[0].mxu0 %v3715
    %v4029 = vpop.f32.mrb[0].mxu0
    %v4030 = vadd.f32 %v3763, %v4029
    %v4031 = vpop.f32.mrb[0].mxu0
    %v4032 = vadd.f32 %v3767, %v4031
    %v4033 = vpop.f32.mrb[0].mxu0
    %v4034 = vadd.f32 %v3763, %v4033
    %v4035 = vpop.f32.mrb[0].mxu0
    %v4036 = vadd.f32 %v3767, %v4035
    %4037 = vdwg.mxu0
    %v4038 = vmul.f32 %v3967, 0.5
    %v4039 = vmul.f32 %v3969, 0.5
    %v4040 = vmul.f32 %v4020, 0.5
    %v4041 = vmul.f32 %v4022, 0.5
    %v4042 = vmul.f32 %v3971, 0.5
    %v4043 = vmul.f32 %v3973, 0.5
    %v4044 = vmul.f32 %v4024, 0.5
    %v4045 = vmul.f32 %v4026, 0.5
    %v4046 = vmul.f32 %v3977, 0.5
    %v4047 = vmul.f32 %v3979, 0.5
    %v4048 = vmul.f32 %v4030, 0.5
    %v4049 = vmul.f32 %v4032, 0.5
    %v4050 = vmul.f32 %v3981, 0.5
    %v4051 = vmul.f32 %v3983, 0.5
    %v4052 = vmul.f32 %v4034, 0.5
    %v4053 = vmul.f32 %v4036, 0.5
    %v4054 = vmul.f32 %v3967, 0.044715
    %v4055 = vmul.f32 %v3969, 0.044715
    %v4056 = vmul.f32 %v4020, 0.044715
    %v4057 = vmul.f32 %v4022, 0.044715
    %v4058 = vmul.f32 %v3971, 0.044715
    %v4059 = vmul.f32 %v3973, 0.044715
    %v4060 = vmul.f32 %v4024, 0.044715
    %v4061 = vmul.f32 %v4026, 0.044715
    %v4062 = vmul.f32 %v3977, 0.044715
    %v4063 = vmul.f32 %v3979, 0.044715
    %v4064 = vmul.f32 %v4030, 0.044715
    %v4065 = vmul.f32 %v4032, 0.044715
    %v4066 = vmul.f32 %v3981, 0.044715
    %v4067 = vmul.f32 %v3983, 0.044715
    %v4068 = vmul.f32 %v4034, 0.044715
    %v4069 = vmul.f32 %v4036, 0.044715
    %v4070 = vmul.f32 %v4054, %v3967
    %v4071 = vmul.f32 %v4055, %v3969
    %v4072 = vmul.f32 %v4056, %v4020
    %v4073 = vmul.f32 %v4057, %v4022
    %v4074 = vmul.f32 %v4058, %v3971
    %v4075 = vmul.f32 %v4059, %v3973
    %v4076 = vmul.f32 %v4060, %v4024
    %v4077 = vmul.f32 %v4061, %v4026
    %v4078 = vmul.f32 %v4062, %v3977
    %v4079 = vmul.f32 %v4063, %v3979
    %v4080 = vmul.f32 %v4064, %v4030
    %v4081 = vmul.f32 %v4065, %v4032
    %v4082 = vmul.f32 %v4066, %v3981
    %v4083 = vmul.f32 %v4067, %v3983
    %v4084 = vmul.f32 %v4068, %v4034
    %v4085 = vmul.f32 %v4069, %v4036
    %v4086 = vmul.f32 %v4070, %v3967
    %v4087 = vmul.f32 %v4071, %v3969
    %v4088 = vmul.f32 %v4072, %v4020
    %v4089 = vmul.f32 %v4073, %v4022
    %v4090 = vmul.f32 %v4074, %v3971
    %v4091 = vmul.f32 %v4075, %v3973
    %v4092 = vmul.f32 %v4076, %v4024
    %v4093 = vmul.f32 %v4077, %v4026
    %v4094 = vmul.f32 %v4078, %v3977
    %v4095 = vmul.f32 %v4079, %v3979
    %v4096 = vmul.f32 %v4080, %v4030
    %v4097 = vmul.f32 %v4081, %v4032
    %v4098 = vmul.f32 %v4082, %v3981
    %v4099 = vmul.f32 %v4083, %v3983
    %v4100 = vmul.f32 %v4084, %v4034
    %v4101 = vmul.f32 %v4085, %v4036
    %v4102 = vadd.f32 %v3967, %v4086
    %v4103 = vadd.f32 %v3969, %v4087
    %v4104 = vadd.f32 %v4020, %v4088
    %v4105 = vadd.f32 %v4022, %v4089
    %v4106 = vadd.f32 %v3971, %v4090
    %v4107 = vadd.f32 %v3973, %v4091
    %v4108 = vadd.f32 %v4024, %v4092
    %v4109 = vadd.f32 %v4026, %v4093
    %v4110 = vadd.f32 %v3977, %v4094
    %v4111 = vadd.f32 %v3979, %v4095
    %v4112 = vadd.f32 %v4030, %v4096
    %v4113 = vadd.f32 %v4032, %v4097
    %v4114 = vadd.f32 %v3981, %v4098
    %v4115 = vadd.f32 %v3983, %v4099
    %v4116 = vadd.f32 %v4034, %v4100
    %v4117 = vadd.f32 %v4036, %v4101
    %v4118 = vmul.f32 %v4102, 0.7978846
    %v4119 = vmul.f32 %v4103, 0.7978846
    %v4120 = vmul.f32 %v4104, 0.7978846
    %v4121 = vmul.f32 %v4105, 0.7978846
    %v4122 = vmul.f32 %v4106, 0.7978846
    %v4123 = vmul.f32 %v4107, 0.7978846
    %v4124 = vmul.f32 %v4108, 0.7978846
    %v4125 = vmul.f32 %v4109, 0.7978846
    %v4126 = vmul.f32 %v4110, 0.7978846
    %v4127 = vmul.f32 %v4111, 0.7978846
    %v4128 = vmul.f32 %v4112, 0.7978846
    %v4129 = vmul.f32 %v4113, 0.7978846
    %v4130 = vmul.f32 %v4114, 0.7978846
    %v4131 = vmul.f32 %v4115, 0.7978846
    %v4132 = vmul.f32 %v4116, 0.7978846
    %v4133 = vmul.f32 %v4117, 0.7978846
    %v4134 = vtanh.pop %v4118
    %v4135 = vtanh.pop %v4119
    %v4136 = vtanh.pop %v4120
    %v4137 = vtanh.pop %v4121
    %v4138 = vtanh.pop %v4122
    %v4139 = vtanh.pop %v4123
    %v4140 = vtanh.pop %v4124
    %v4141 = vtanh.pop %v4125
    %v4142 = vtanh.pop %v4126
    %v4143 = vtanh.pop %v4127
    %v4144 = vtanh.pop %v4128
    %v4145 = vtanh.pop %v4129
    %v4146 = vtanh.pop %v4130
    %v4147 = vtanh.pop %v4131
    %v4148 = vtanh.pop %v4132
    %v4149 = vtanh.pop %v4133
    %v4150 = vadd.f32 %v4134, 1.0
    %v4151 = vadd.f32 %v4135, 1.0
    %v4152 = vadd.f32 %v4136, 1.0
    %v4153 = vadd.f32 %v4137, 1.0
    %v4154 = vadd.f32 %v4138, 1.0
    %v4155 = vadd.f32 %v4139, 1.0
    %v4156 = vadd.f32 %v4140, 1.0
    %v4157 = vadd.f32 %v4141, 1.0
    %v4158 = vadd.f32 %v4142, 1.0
    %v4159 = vadd.f32 %v4143, 1.0
    %v4160 = vadd.f32 %v4144, 1.0
    %v4161 = vadd.f32 %v4145, 1.0
    %v4162 = vadd.f32 %v4146, 1.0
    %v4163 = vadd.f32 %v4147, 1.0
    %v4164 = vadd.f32 %v4148, 1.0
    %v4165 = vadd.f32 %v4149, 1.0
    %v4166 = vmul.f32 %v4038, %v4150
    %v4167 = vmul.f32 %v4039, %v4151
    %v4168 = vmul.f32 %v4040, %v4152
    %v4169 = vmul.f32 %v4041, %v4153
    %v4170 = vmul.f32 %v4042, %v4154
    %v4171 = vmul.f32 %v4043, %v4155
    %v4172 = vmul.f32 %v4044, %v4156
    %v4173 = vmul.f32 %v4045, %v4157
    %v4174 = vmul.f32 %v4046, %v4158
    %v4175 = vmul.f32 %v4047, %v4159
    %v4176 = vmul.f32 %v4048, %v4160
    %v4177 = vmul.f32 %v4049, %v4161
    %v4178 = vmul.f32 %v4050, %v4162
    %v4179 = vmul.f32 %v4051, %v4163
    %v4180 = vmul.f32 %v4052, %v4164
    %v4181 = vmul.f32 %v4053, %v4165
    %v4182 = vpack.c.bf16 %v4170, %v4166
    %v4183 = vpack.c.bf16 %v4171, %v4167
    %v4184 = vpack.c.bf16 %v4172, %v4168
    %v4185 = vpack.c.bf16 %v4173, %v4169
    %v4186 = vpack.c.bf16 %v4178, %v4174
    %v4187 = vpack.c.bf16 %v4179, %v4175
    %v4188 = vpack.c.bf16 %v4180, %v4176
    %v4189 = vpack.c.bf16 %v4181, %v4177
    %s4190 = scalar_lea.vmem [#allocation5], 256
    %v4191 = vld [vmem:[%s4190] sm:$0xf]
    %v4192 = vld [vmem:[%s4190 + $0x4] sm:$0xf]
    %v4193 = vld [vmem:[%s4190 + $0x8] sm:$0xf]
    %v4194 = vld [vmem:[%s4190 + $0xc] sm:$0xf]
    %v4195 = vld [vmem:[%s4190 + $0x10] sm:$0xf]
    %v4196 = vld [vmem:[%s4190 + $0x14] sm:$0xf]
    %v4197 = vld [vmem:[%s4190 + $0x18] sm:$0xf]
    %v4198 = vld [vmem:[%s4190 + $0x1c] sm:$0xf]
    %v4199 = vld [vmem:[%s4190 + $0x20] sm:$0xf]
    %v4200 = vld [vmem:[%s4190 + $0x24] sm:$0xf]
    %v4201 = vld [vmem:[%s4190 + $0x28] sm:$0xf]
    %v4202 = vld [vmem:[%s4190 + $0x2c] sm:$0xf]
    %v4203 = vld [vmem:[%s4190 + $0x30] sm:$0xf]
    %v4204 = vld [vmem:[%s4190 + $0x34] sm:$0xf]
    %v4205 = vld [vmem:[%s4190 + $0x38] sm:$0xf]
    %v4206 = vld [vmem:[%s4190 + $0x3c] sm:$0xf]
    %v4207 = vld [vmem:[%s4190 + $0x40] sm:$0xf]
    %v4208 = vld [vmem:[%s4190 + $0x44] sm:$0xf]
    %v4209 = vld [vmem:[%s4190 + $0x48] sm:$0xf]
    %v4210 = vld [vmem:[%s4190 + $0x4c] sm:$0xf]
    %v4211 = vld [vmem:[%s4190 + $0x50] sm:$0xf]
    %v4212 = vld [vmem:[%s4190 + $0x54] sm:$0xf]
    %v4213 = vld [vmem:[%s4190 + $0x58] sm:$0xf]
    %v4214 = vld [vmem:[%s4190 + $0x5c] sm:$0xf]
    %v4215 = vld [vmem:[%s4190 + $0x60] sm:$0xf]
    %v4216 = vld [vmem:[%s4190 + $0x64] sm:$0xf]
    %v4217 = vld [vmem:[%s4190 + $0x68] sm:$0xf]
    %v4218 = vld [vmem:[%s4190 + $0x6c] sm:$0xf]
    %v4219 = vld [vmem:[%s4190 + $0x70] sm:$0xf]
    %v4220 = vld [vmem:[%s4190 + $0x74] sm:$0xf]
    %v4221 = vld [vmem:[%s4190 + $0x78] sm:$0xf]
    %v4222 = vld [vmem:[%s4190 + $0x7c] sm:$0xf]
    %v4223 = vld [vmem:[%s4190 + $0x80] sm:$0xf]
    %v4224 = vld [vmem:[%s4190 + $0x84] sm:$0xf]
    %v4225 = vld [vmem:[%s4190 + $0x88] sm:$0xf]
    %v4226 = vld [vmem:[%s4190 + $0x8c] sm:$0xf]
    %v4227 = vld [vmem:[%s4190 + $0x90] sm:$0xf]
    %v4228 = vld [vmem:[%s4190 + $0x94] sm:$0xf]
    %v4229 = vld [vmem:[%s4190 + $0x98] sm:$0xf]
    %v4230 = vld [vmem:[%s4190 + $0x9c] sm:$0xf]
    %v4231 = vld [vmem:[%s4190 + $0xa0] sm:$0xf]
    %v4232 = vld [vmem:[%s4190 + $0xa4] sm:$0xf]
    %v4233 = vld [vmem:[%s4190 + $0xa8] sm:$0xf]
    %v4234 = vld [vmem:[%s4190 + $0xac] sm:$0xf]
    %v4235 = vld [vmem:[%s4190 + $0xb0] sm:$0xf]
    %v4236 = vld [vmem:[%s4190 + $0xb4] sm:$0xf]
    %v4237 = vld [vmem:[%s4190 + $0xb8] sm:$0xf]
    %v4238 = vld [vmem:[%s4190 + $0xbc] sm:$0xf]
    %v4239 = vld [vmem:[%s4190 + $0xc0] sm:$0xf]
    %v4240 = vld [vmem:[%s4190 + $0xc4] sm:$0xf]
    %v4241 = vld [vmem:[%s4190 + $0xc8] sm:$0xf]
    %v4242 = vld [vmem:[%s4190 + $0xcc] sm:$0xf]
    %v4243 = vld [vmem:[%s4190 + $0xd0] sm:$0xf]
    %v4244 = vld [vmem:[%s4190 + $0xd4] sm:$0xf]
    %v4245 = vld [vmem:[%s4190 + $0xd8] sm:$0xf]
    %v4246 = vld [vmem:[%s4190 + $0xdc] sm:$0xf]
    %v4247 = vld [vmem:[%s4190 + $0xe0] sm:$0xf]
    %v4248 = vld [vmem:[%s4190 + $0xe4] sm:$0xf]
    %v4249 = vld [vmem:[%s4190 + $0xe8] sm:$0xf]
    %v4250 = vld [vmem:[%s4190 + $0xec] sm:$0xf]
    %v4251 = vld [vmem:[%s4190 + $0xf0] sm:$0xf]
    %v4252 = vld [vmem:[%s4190 + $0xf4] sm:$0xf]
    %v4253 = vld [vmem:[%s4190 + $0xf8] sm:$0xf]
    %v4254 = vld [vmem:[%s4190 + $0xfc] sm:$0xf]
    %v4319 = vunpack.c.l.b16 %v4191
    %v4320 = vunpack.c.l.b16 %v4192
    %v4321 = vunpack.c.l.b16 %v4193
    %v4322 = vunpack.c.l.b16 %v4194
    %v4323 = vunpack.c.l.b16 %v4195
    %v4324 = vunpack.c.l.b16 %v4196
    %v4325 = vunpack.c.l.b16 %v4197
    %v4326 = vunpack.c.l.b16 %v4198
    %v4327 = vunpack.c.l.b16 %v4199
    %v4328 = vunpack.c.l.b16 %v4200
    %v4329 = vunpack.c.l.b16 %v4201
    %v4330 = vunpack.c.l.b16 %v4202
    %v4331 = vunpack.c.l.b16 %v4203
    %v4332 = vunpack.c.l.b16 %v4204
    %v4333 = vunpack.c.l.b16 %v4205
    %v4334 = vunpack.c.l.b16 %v4206
    %v4335 = vunpack.c.l.b16 %v4207
    %v4336 = vunpack.c.l.b16 %v4208
    %v4337 = vunpack.c.l.b16 %v4209
    %v4338 = vunpack.c.l.b16 %v4210
    %v4339 = vunpack.c.l.b16 %v4211
    %v4340 = vunpack.c.l.b16 %v4212
    %v4341 = vunpack.c.l.b16 %v4213
    %v4342 = vunpack.c.l.b16 %v4214
    %v4343 = vunpack.c.l.b16 %v4215
    %v4344 = vunpack.c.l.b16 %v4216
    %v4345 = vunpack.c.l.b16 %v4217
    %v4346 = vunpack.c.l.b16 %v4218
    %v4347 = vunpack.c.l.b16 %v4219
    %v4348 = vunpack.c.l.b16 %v4220
    %v4349 = vunpack.c.l.b16 %v4221
    %v4350 = vunpack.c.l.b16 %v4222
    %v4351 = vunpack.c.l.b16 %v4223
    %v4352 = vunpack.c.l.b16 %v4224
    %v4353 = vunpack.c.l.b16 %v4225
    %v4354 = vunpack.c.l.b16 %v4226
    %v4355 = vunpack.c.l.b16 %v4227
    %v4356 = vunpack.c.l.b16 %v4228
    %v4357 = vunpack.c.l.b16 %v4229
    %v4358 = vunpack.c.l.b16 %v4230
    %v4359 = vunpack.c.l.b16 %v4231
    %v4360 = vunpack.c.l.b16 %v4232
    %v4361 = vunpack.c.l.b16 %v4233
    %v4362 = vunpack.c.l.b16 %v4234
    %v4363 = vunpack.c.l.b16 %v4235
    %v4364 = vunpack.c.l.b16 %v4236
    %v4365 = vunpack.c.l.b16 %v4237
    %v4366 = vunpack.c.l.b16 %v4238
    %v4367 = vunpack.c.l.b16 %v4239
    %v4368 = vunpack.c.l.b16 %v4240
    %v4369 = vunpack.c.l.b16 %v4241
    %v4370 = vunpack.c.l.b16 %v4242
    %v4371 = vunpack.c.l.b16 %v4243
    %v4372 = vunpack.c.l.b16 %v4244
    %v4373 = vunpack.c.l.b16 %v4245
    %v4374 = vunpack.c.l.b16 %v4246
    %v4375 = vunpack.c.l.b16 %v4247
    %v4376 = vunpack.c.l.b16 %v4248
    %v4377 = vunpack.c.l.b16 %v4249
    %v4378 = vunpack.c.l.b16 %v4250
    %v4379 = vunpack.c.l.b16 %v4251
    %v4380 = vunpack.c.l.b16 %v4252
    %v4381 = vunpack.c.l.b16 %v4253
    %v4382 = vunpack.c.l.b16 %v4254
    %v4383 = vpack.c.b16 %v4320, %v4319
    %v4384 = vpack.c.b16 %v4322, %v4321
    %v4385 = vpack.c.b16 %v4324, %v4323
    %v4386 = vpack.c.b16 %v4326, %v4325
    %v4387 = vpack.c.b16 %v4328, %v4327
    %v4388 = vpack.c.b16 %v4330, %v4329
    %v4389 = vpack.c.b16 %v4332, %v4331
    %v4390 = vpack.c.b16 %v4334, %v4333
    %v4391 = vpack.c.b16 %v4336, %v4335
    %v4392 = vpack.c.b16 %v4338, %v4337
    %v4393 = vpack.c.b16 %v4340, %v4339
    %v4394 = vpack.c.b16 %v4342, %v4341
    %v4395 = vpack.c.b16 %v4344, %v4343
    %v4396 = vpack.c.b16 %v4346, %v4345
    %v4397 = vpack.c.b16 %v4348, %v4347
    %v4398 = vpack.c.b16 %v4350, %v4349
    %v4399 = vpack.c.b16 %v4352, %v4351
    %v4400 = vpack.c.b16 %v4354, %v4353
    %v4401 = vpack.c.b16 %v4356, %v4355
    %v4402 = vpack.c.b16 %v4358, %v4357
    %v4403 = vpack.c.b16 %v4360, %v4359
    %v4404 = vpack.c.b16 %v4362, %v4361
    %v4405 = vpack.c.b16 %v4364, %v4363
    %v4406 = vpack.c.b16 %v4366, %v4365
    %v4407 = vpack.c.b16 %v4368, %v4367
    %v4408 = vpack.c.b16 %v4370, %v4369
    %v4409 = vpack.c.b16 %v4372, %v4371
    %v4410 = vpack.c.b16 %v4374, %v4373
    %v4411 = vpack.c.b16 %v4376, %v4375
    %v4412 = vpack.c.b16 %v4378, %v4377
    %v4413 = vpack.c.b16 %v4380, %v4379
    %v4414 = vpack.c.b16 %v4382, %v4381
    %4447 = vmatprep.subr.bf16.mxu0 0
    %4448 = vmatpush1.bf16.msra.mxu0 %v4383
    %4449 = vmatprep.subr.bf16.mxu0 0
    %4450 = vmatpush1.bf16.msra.mxu0 %v4384
    %4451 = vmatprep.subr.bf16.mxu0 0
    %4452 = vmatpush1.bf16.msra.mxu0 %v4385
    %4453 = vmatprep.subr.bf16.mxu0 0
    %4454 = vmatpush1.bf16.msra.mxu0 %v4386
    %4455 = vmatprep.subr.bf16.mxu0 0
    %4456 = vmatpush1.bf16.msra.mxu0 %v4387
    %4457 = vmatprep.subr.bf16.mxu0 0
    %4458 = vmatpush1.bf16.msra.mxu0 %v4388
    %4459 = vmatprep.subr.bf16.mxu0 0
    %4460 = vmatpush1.bf16.msra.mxu0 %v4389
    %4461 = vmatprep.subr.bf16.mxu0 0
    %4462 = vmatpush1.bf16.msra.mxu0 %v4390
    %4463 = vmatprep.subr.bf16.mxu0 0
    %4464 = vmatpush1.bf16.msra.mxu0 %v4391
    %4465 = vmatprep.subr.bf16.mxu0 0
    %4466 = vmatpush1.bf16.msra.mxu0 %v4392
    %4467 = vmatprep.subr.bf16.mxu0 0
    %4468 = vmatpush1.bf16.msra.mxu0 %v4393
    %4469 = vmatprep.subr.bf16.mxu0 0
    %4470 = vmatpush1.bf16.msra.mxu0 %v4394
    %4471 = vmatprep.subr.bf16.mxu0 0
    %4472 = vmatpush1.bf16.msra.mxu0 %v4395
    %4473 = vmatprep.subr.bf16.mxu0 0
    %4474 = vmatpush1.bf16.msra.mxu0 %v4396
    %4475 = vmatprep.subr.bf16.mxu0 0
    %4476 = vmatpush1.bf16.msra.mxu0 %v4397
    %4477 = vmatprep.subr.bf16.mxu0 0
    %4478 = vmatpush1.bf16.msra.mxu0 %v4398
    %4479 = vmatprep.mubr.bf16.mxu0 %v4183
    %4480 = vmatmul.mubr.bf16.gmra.mrb[0].mxu0 %v4182
    %v4481 = vpop.f32.mrb[0].mxu0
    %v4482 = vadd.f32 0.0, %v4481
    %v4483 = vpop.f32.mrb[0].mxu0
    %v4484 = vpop.f32.mrb[0].mxu0
    %v4485 = vadd.f32 0.0, %v4484
    %v4486 = vpop.f32.mrb[0].mxu0
    %4487 = vmatprep.mubr.bf16.mxu0 %v4187
    %4488 = vmatmul.mubr.bf16.gmra.mrb[0].mxu0 %v4186
    %v4489 = vpop.f32.mrb[0].mxu0
    %v4490 = vadd.f32 0.0, %v4489
    %v4491 = vpop.f32.mrb[0].mxu0
    %v4492 = vpop.f32.mrb[0].mxu0
    %v4493 = vadd.f32 0.0, %v4492
    %v4494 = vpop.f32.mrb[0].mxu0
    %4495 = vdwg.mxu0
    %4496 = vmatprep.subr.bf16.mxu0 0
    %4497 = vmatpush1.bf16.msra.mxu0 %v4399
    %4498 = vmatprep.subr.bf16.mxu0 0
    %4499 = vmatpush1.bf16.msra.mxu0 %v4400
    %4500 = vmatprep.subr.bf16.mxu0 0
    %4501 = vmatpush1.bf16.msra.mxu0 %v4401
    %4502 = vmatprep.subr.bf16.mxu0 0
    %4503 = vmatpush1.bf16.msra.mxu0 %v4402
    %4504 = vmatprep.subr.bf16.mxu0 0
    %4505 = vmatpush1.bf16.msra.mxu0 %v4403
    %4506 = vmatprep.subr.bf16.mxu0 0
    %4507 = vmatpush1.bf16.msra.mxu0 %v4404
    %4508 = vmatprep.subr.bf16.mxu0 0
    %4509 = vmatpush1.bf16.msra.mxu0 %v4405
    %4510 = vmatprep.subr.bf16.mxu0 0
    %4511 = vmatpush1.bf16.msra.mxu0 %v4406
    %4512 = vmatprep.subr.bf16.mxu0 0
    %4513 = vmatpush1.bf16.msra.mxu0 %v4407
    %4514 = vmatprep.subr.bf16.mxu0 0
    %4515 = vmatpush1.bf16.msra.mxu0 %v4408
    %4516 = vmatprep.subr.bf16.mxu0 0
    %4517 = vmatpush1.bf16.msra.mxu0 %v4409
    %4518 = vmatprep.subr.bf16.mxu0 0
    %4519 = vmatpush1.bf16.msra.mxu0 %v4410
    %4520 = vmatprep.subr.bf16.mxu0 0
    %4521 = vmatpush1.bf16.msra.mxu0 %v4411
    %4522 = vmatprep.subr.bf16.mxu0 0
    %4523 = vmatpush1.bf16.msra.mxu0 %v4412
    %4524 = vmatprep.subr.bf16.mxu0 0
    %4525 = vmatpush1.bf16.msra.mxu0 %v4413
    %4526 = vmatprep.subr.bf16.mxu0 0
    %4527 = vmatpush1.bf16.msra.mxu0 %v4414
    %4528 = vmatprep.mubr.bf16.mxu0 %v4185
    %4529 = vmatmul.mubr.bf16.gmra.mrb[0].mxu0 %v4184
    %v4530 = vpop.f32.mrb[0].mxu0
    %v4531 = vadd.f32 %v4482, %v4530
    %v4532 = vpop.f32.mrb[0].mxu0
    %v4533 = vpop.f32.mrb[0].mxu0
    %v4534 = vadd.f32 %v4485, %v4533
    %v4535 = vpop.f32.mrb[0].mxu0
    %4536 = vmatprep.mubr.bf16.mxu0 %v4189
    %4537 = vmatmul.mubr.bf16.gmra.mrb[0].mxu0 %v4188
    %v4538 = vpop.f32.mrb[0].mxu0
    %v4539 = vadd.f32 %v4490, %v4538
    %v4540 = vpop.f32.mrb[0].mxu0
    %v4541 = vpop.f32.mrb[0].mxu0
    %v4542 = vadd.f32 %v4493, %v4541
    %v4543 = vpop.f32.mrb[0].mxu0
    %4544 = vdwg.mxu0
    %v4545 = vadd.f32 %v3642, %v4531
    %v4546 = vadd.f32 %v3643, %v4534
    %v4547 = vadd.f32 %v3644, %v4539
    %v4548 = vadd.f32 %v3645, %v4542
    %s4549 = scalar_lea.vmem %s13, 1
    %v4550 = vld [vmem:[%s4549] sm:$0x1]
    %v4552 = vlaneseq
    %v4553 = vshrl.u32 %v4552, 7
    %v4554 = vsub.s32 0, %v4553
    %v4555 = vrot.slane %v4550, %v4554
    %v4557 = vadd.f32 %v4545, %v4555
    %v4558 = vadd.f32 %v4546, %v4555
    %v4559 = vadd.f32 %v4547, %v4555
    %v4560 = vadd.f32 %v4548, %v4555
    %v4561 = vld [vmem:[%s14] sm:$0x1]
    %v4562 = vld [vmem:[%s15] sm:$0x1]
    %4563 = vadd.xlane.f32.xlu0 %v4557
    %v4564 = vpop.xlane.xlu0 %4563
    %4565 = vadd.xlane.f32.xlu0 %v4558
    %v4566 = vpop.xlane.xlu0 %4565
    %4567 = vadd.xlane.f32.xlu0 %v4559
    %v4568 = vpop.xlane.xlu0 %4567
    %4569 = vadd.xlane.f32.xlu0 %v4560
    %v4570 = vpop.xlane.xlu0 %4569
    %v4571 = vmul.f32 %v4564, %v104
    %v4572 = vmul.f32 %v4566, %v104
    %v4573 = vmul.f32 %v4568, %v104
    %v4574 = vmul.f32 %v4570, %v104
    %v4575 = vsub.f32 %v4557, %v4571
    %v4576 = vsub.f32 %v4558, %v4572
    %v4577 = vsub.f32 %v4559, %v4573
    %v4578 = vsub.f32 %v4560, %v4574
    %v4579 = vmul.f32 %v4575, %v4575
    %v4580 = vmul.f32 %v4576, %v4576
    %v4581 = vmul.f32 %v4577, %v4577
    %v4582 = vmul.f32 %v4578, %v4578
    %4583 = vadd.xlane.f32.xlu0 %v4579
    %v4584 = vpop.xlane.xlu0 %4583
    %4585 = vadd.xlane.f32.xlu0 %v4580
    %v4586 = vpop.xlane.xlu0 %4585
    %4587 = vadd.xlane.f32.xlu0 %v4581
    %v4588 = vpop.xlane.xlu0 %4587
    %4589 = vadd.xlane.f32.xlu0 %v4582
    %v4590 = vpop.xlane.xlu0 %4589
    %v4591 = vmul.f32 %v4584, %v104
    %v4592 = vmul.f32 %v4586, %v104
    %v4593 = vmul.f32 %v4588, %v104
    %v4594 = vmul.f32 %v4590, %v104
    %v4595 = vadd.f32 %v4591, 1e-05
    %v4596 = vadd.f32 %v4592, 1e-05
    %v4597 = vadd.f32 %v4593, 1e-05
    %v4598 = vadd.f32 %v4594, 1e-05
    %v4599 = vrsqrt.pop %v4595
    %v4600 = vrsqrt.pop %v4596
    %v4601 = vrsqrt.pop %v4597
    %v4602 = vrsqrt.pop %v4598
    %v4603 = vmul.f32 %v4575, %v4599
    %v4604 = vmul.f32 %v4576, %v4600
    %v4605 = vmul.f32 %v4577, %v4601
    %v4606 = vmul.f32 %v4578, %v4602
    %v4608 = vlaneseq
    %v4609 = vshrl.u32 %v4608, 7
    %v4610 = vsub.s32 0, %v4609
    %v4611 = vrot.slane %v4561, %v4610
    %v4613 = vmul.f32 %v4603, %v4611
    %v4614 = vmul.f32 %v4604, %v4611
    %v4615 = vmul.f32 %v4605, %v4611
    %v4616 = vmul.f32 %v4606, %v4611
    %v4618 = vlaneseq
    %v4619 = vshrl.u32 %v4618, 7
    %v4620 = vsub.s32 0, %v4619
    %v4621 = vrot.slane %v4562, %v4620
    %v4623 = vadd.f32 %v4613, %v4621
    %v4624 = vadd.f32 %v4614, %v4621
    %v4625 = vadd.f32 %v4615, %v4621
    %v4626 = vadd.f32 %v4616, %v4621
    %v4627 = vpack.c.bf16 %v4624, %v4623
    %v4628 = vpack.c.bf16 %v4626, %v4625
    %v4629 = vld [vmem:[%s16] sm:$0xff]
    %v4630 = vld [vmem:[%s16 + $0x8] sm:$0xff]
    %v4631 = vld [vmem:[%s16 + $0x10] sm:$0xff]
    %v4632 = vld [vmem:[%s16 + $0x18] sm:$0xff]
    %v4633 = vld [vmem:[%s16 + $0x20] sm:$0xff]
    %v4634 = vld [vmem:[%s16 + $0x28] sm:$0xff]
    %v4635 = vld [vmem:[%s16 + $0x30] sm:$0xff]
    %v4636 = vld [vmem:[%s16 + $0x38] sm:$0xff]
    %v4637 = vld [vmem:[%s16 + $0x40] sm:$0xff]
    %v4638 = vld [vmem:[%s16 + $0x48] sm:$0xff]
    %v4639 = vld [vmem:[%s16 + $0x50] sm:$0xff]
    %v4640 = vld [vmem:[%s16 + $0x58] sm:$0xff]
    %v4641 = vld [vmem:[%s16 + $0x60] sm:$0xff]
    %v4642 = vld [vmem:[%s16 + $0x68] sm:$0xff]
    %v4643 = vld [vmem:[%s16 + $0x70] sm:$0xff]
    %v4644 = vld [vmem:[%s16 + $0x78] sm:$0xff]
    %v4661 = vunpack.c.l.b16 %v4629
    %v4662 = vunpack.c.h.b16 %v4629
    %v4663 = vunpack.c.l.b16 %v4630
    %v4664 = vunpack.c.h.b16 %v4630
    %v4665 = vunpack.c.l.b16 %v4631
    %v4666 = vunpack.c.h.b16 %v4631
    %v4667 = vunpack.c.l.b16 %v4632
    %v4668 = vunpack.c.h.b16 %v4632
    %v4669 = vunpack.c.l.b16 %v4633
    %v4670 = vunpack.c.h.b16 %v4633
    %v4671 = vunpack.c.l.b16 %v4634
    %v4672 = vunpack.c.h.b16 %v4634
    %v4673 = vunpack.c.l.b16 %v4635
    %v4674 = vunpack.c.h.b16 %v4635
    %v4675 = vunpack.c.l.b16 %v4636
    %v4676 = vunpack.c.h.b16 %v4636
    %v4677 = vunpack.c.l.b16 %v4637
    %v4678 = vunpack.c.h.b16 %v4637
    %v4679 = vunpack.c.l.b16 %v4638
    %v4680 = vunpack.c.h.b16 %v4638
    %v4681 = vunpack.c.l.b16 %v4639
    %v4682 = vunpack.c.h.b16 %v4639
    %v4683 = vunpack.c.l.b16 %v4640
    %v4684 = vunpack.c.h.b16 %v4640
    %v4685 = vunpack.c.l.b16 %v4641
    %v4686 = vunpack.c.h.b16 %v4641
    %v4687 = vunpack.c.l.b16 %v4642
    %v4688 = vunpack.c.h.b16 %v4642
    %v4689 = vunpack.c.l.b16 %v4643
    %v4690 = vunpack.c.h.b16 %v4643
    %v4691 = vunpack.c.l.b16 %v4644
    %v4692 = vunpack.c.h.b16 %v4644
    %v4693 = vpack.c.b16 %v4663, %v4661
    %v4694 = vpack.c.b16 %v4664, %v4662
    %v4695 = vpack.c.b16 %v4667, %v4665
    %v4696 = vpack.c.b16 %v4668, %v4666
    %v4697 = vpack.c.b16 %v4671, %v4669
    %v4698 = vpack.c.b16 %v4672, %v4670
    %v4699 = vpack.c.b16 %v4675, %v4673
    %v4700 = vpack.c.b16 %v4676, %v4674
    %v4701 = vpack.c.b16 %v4679, %v4677
    %v4702 = vpack.c.b16 %v4680, %v4678
    %v4703 = vpack.c.b16 %v4683, %v4681
    %v4704 = vpack.c.b16 %v4684, %v4682
    %v4705 = vpack.c.b16 %v4687, %v4685
    %v4706 = vpack.c.b16 %v4688, %v4686
    %v4707 = vpack.c.b16 %v4691, %v4689
    %v4708 = vpack.c.b16 %v4692, %v4690
    %4725 = vmatprep.subr.bf16.mxu0 %v4694
    %4726 = vmatpush1.bf16.msra.mxu0 %v4693
    %4727 = vmatprep.subr.bf16.mxu0 %v4696
    %4728 = vmatpush1.bf16.msra.mxu0 %v4695
    %4729 = vmatprep.subr.bf16.mxu0 %v4698
    %4730 = vmatpush1.bf16.msra.mxu0 %v4697
    %4731 = vmatprep.subr.bf16.mxu0 %v4700
    %4732 = vmatpush1.bf16.msra.mxu0 %v4699
    %4733 = vmatprep.subr.bf16.mxu0 %v4702
    %4734 = vmatpush1.bf16.msra.mxu0 %v4701
    %4735 = vmatprep.subr.bf16.mxu0 %v4704
    %4736 = vmatpush1.bf16.msra.mxu0 %v4703
    %4737 = vmatprep.subr.bf16.mxu0 %v4706
    %4738 = vmatpush1.bf16.msra.mxu0 %v4705
    %4739 = vmatprep.subr.bf16.mxu0 %v4708
    %4740 = vmatpush1.bf16.msra.mxu0 %v4707
    %4741 = vmatprep.subr.bf16.mxu0 0
    %4742 = vmatpush1.bf16.msra.mxu0 0
    %4743 = vmatprep.subr.bf16.mxu0 0
    %4744 = vmatpush1.bf16.msra.mxu0 0
    %4745 = vmatprep.subr.bf16.mxu0 0
    %4746 = vmatpush1.bf16.msra.mxu0 0
    %4747 = vmatprep.subr.bf16.mxu0 0
    %4748 = vmatpush1.bf16.msra.mxu0 0
    %4749 = vmatprep.subr.bf16.mxu0 0
    %4750 = vmatpush1.bf16.msra.mxu0 0
    %4751 = vmatprep.subr.bf16.mxu0 0
    %4752 = vmatpush1.bf16.msra.mxu0 0
    %4753 = vmatprep.subr.bf16.mxu0 0
    %4754 = vmatpush1.bf16.msra.mxu0 0
    %4755 = vmatprep.subr.bf16.mxu0 0
    %4756 = vmatpush1.bf16.msra.mxu0 0
    %4757 = vmatprep.mubr.bf16.mxu0 0
    %4758 = vmatmul.mubr.bf16.gmra.mrb[0].mxu0 %v4627
    %v4759 = vpop.f32.mrb[0].mxu0
    %v4760 = vadd.f32 0.0, %v4759
    %v4761 = vpop.f32.mrb[0].mxu0
    %v4762 = vadd.f32 0.0, %v4761
    %v4763 = vpop.f32.mrb[0].mxu0
    %v4764 = vadd.f32 0.0, %v4763
    %v4765 = vpop.f32.mrb[0].mxu0
    %v4766 = vadd.f32 0.0, %v4765
    %4767 = vmatprep.mubr.bf16.mxu0 0
    %4768 = vmatmul.mubr.bf16.gmra.mrb[0].mxu0 %v4628
    %v4769 = vpop.f32.mrb[0].mxu0
    %v4770 = vadd.f32 0.0, %v4769
    %v4771 = vpop.f32.mrb[0].mxu0
    %v4772 = vadd.f32 0.0, %v4771
    %v4773 = vpop.f32.mrb[0].mxu0
    %v4774 = vadd.f32 0.0, %v4773
    %v4775 = vpop.f32.mrb[0].mxu0
    %v4776 = vadd.f32 0.0, %v4775
    %4777 = vdwg.mxu0
    %4778 = vst [vmem:[#allocation7] sm:$0xff] %v4760
    %4779 = vst [vmem:[#allocation7 + $0x8] sm:$0xff] %v4762
    %4780 = vst [vmem:[#allocation7 + $0x10] sm:$0xff] %v4764
    %4781 = vst [vmem:[#allocation7 + $0x18] sm:$0xff] %v4766
    %4782 = vst [vmem:[#allocation7 + $0x20] sm:$0xff] %v4770
    %4783 = vst [vmem:[#allocation7 + $0x28] sm:$0xff] %v4772
    %4784 = vst [vmem:[#allocation7 + $0x30] sm:$0xff] %v4774
    %4785 = vst [vmem:[#allocation7 + $0x38] sm:$0xff] %v4776
    // Predicated region
    $region78: #{gpt_lm_forward.1} parent=1 // pred_check
      _
    $region79: #{gpt_lm_forward.1} parent=1 // pred_check_branch
      %4787 = sbr.rel (0) target = $region81
    $region80: #{gpt_lm_forward.1} parent=1 // pred_region
      %s4789 = ssub.s32 1024, 1024
      %4790 = vsyncadd [#allocation4], %s4789
      %s4791 = sshll.u32 [#allocation7], 4
      %s4792 = int_to_ptr.vmem [resolvable:$true] %s4791
      %4797 = dma.vmem_to_hbm [thread:$0]  %s4792, 1024, %s17, [#allocation4], 256, 256, 16
    $region81: #{gpt_lm_forward.1} parent=1 // pred_fallthru
      _
    // Predicated region
    $region82: #{gpt_lm_forward.1} parent=1 // pred_check
      _
    $region83: #{gpt_lm_forward.1} parent=1 // pred_check_branch
      %4799 = sbr.rel (0) target = $region85
    $region84: #{gpt_lm_forward.1} parent=1 // pred_region
      %4800 = dma.done [#allocation4], 1024
    $region85: #{gpt_lm_forward.1} parent=1 // pred_fallthru
      _
    %4801 = vsyncpa [#allocation3], 1
    %4802 = vsyncpa [#allocation6], 1
    %4803 = vsyncpa [#allocation4], 1

</llo_original>
